<compile_context>
chip_gen: v7x
topology: tpu7x:2x2x1
jax: 0.10.0
libtpu: 0.0.40
codegen_flags: <defaults>
</compile_context>

<pallas_src>
import functools

import jax
import jax.numpy as jnp
from jax.experimental import pallas as pl
from jax.experimental.pallas import tpu as pltpu

INPUT_SIZE = 512
HIDDEN = 64
NUM_LAYERS = 2
NUM_DIRECTIONS = 2
NUM_CLASSES = 2

HP = NUM_DIRECTIONS * HIDDEN    # 128: packed hidden lanes [fwd 64 | rev 64]
GATES = 4 * HP                  # 512: i,f,g,o gate blocks, each [fwd | rev]


# ---------------------------------------------------------------------------
# Fused kernel: layer0 (fwd+rev) -> layer1 (fwd+rev) -> mean -> fc1 -> fc2 ->
# softmax.  Everything stays resident in VMEM; layer-1 weights are DMA'd in the
# background while layer-0 runs.
# ---------------------------------------------------------------------------
def _fused_lstm_head_kernel(x_ref, wih0_ref, b0_ref, whh0_ref,
                            wih1_hbm, b1_ref, whh1_hbm,
                            whead_ref, bhead_ref, out_ref,
                            xw0_scr, xw1_scr, wih1_vmem, whh1_vmem, dma_sem,
                            *, BP, T):
    # Kick off layer-1 weight HBM->VMEM DMAs immediately so they overlap with
    # the layer-0 projection + recurrence; wait only right before first use.
    cp_wih1 = pltpu.make_async_copy(wih1_hbm, wih1_vmem, dma_sem.at[0])
    cp_whh1 = pltpu.make_async_copy(whh1_hbm, whh1_vmem, dma_sem.at[1])
    cp_wih1.start()
    cp_whh1.start()

    # Lane masks (hoisted, built at full operand shape so no per-step
    # broadcast_in_dim).  Lanes [0:64) of every 128-wide block = forward dir.
    mask_g = (jax.lax.broadcasted_iota(jnp.int32, (BP, GATES), 1)
              & (HP - 1)) < HIDDEN
    mask_h = jax.lax.broadcasted_iota(jnp.int32, (BP, HP), 1) < HIDDEN

    def lstm_cell(gates, c):
        # Each 128-lane gate block is [fwd(64) | rev(64)] -> one vreg-wide op
        # covers both directions; all slices are 128-lane aligned.
        i = jax.nn.sigmoid(gates[:, 0 * HP:1 * HP])
        f = jax.nn.sigmoid(gates[:, 1 * HP:2 * HP])
        g = jnp.tanh(gates[:, 2 * HP:3 * HP])
        o = jax.nn.sigmoid(gates[:, 3 * HP:4 * HP])
        c_new = f * c + i * g
        return o * jnp.tanh(c_new), c_new

    def run_layer(xw_scr, whh, collect):
        h = jnp.zeros((BP, HP), jnp.float32)   # [h_fwd | h_rev]
        c = jnp.zeros((BP, HP), jnp.float32)   # [c_fwd | c_rev]
        hs = []
        for t in range(T):                     # static -> fully unrolled
            # Hoisted input projections: fwd consumes x[t], rev consumes
            # x[T-1-t]; the lane select is off the recurrent dependence chain.
            gx = jnp.where(mask_g,
                           xw_scr[t * BP:(t + 1) * BP, :],
                           xw_scr[(T - 1 - t) * BP:(T - t) * BP, :])
            rec = jnp.dot(h.astype(jnp.bfloat16), whh,
                          preferred_element_type=jnp.float32)
            h, c = lstm_cell(gx + rec, c)
            if collect:
                hs.append(h)
        return h, hs

    # ---- layer 0: batched bf16 input projection (bias folded), recurrence.
    xw0_scr[...] = (jnp.dot(x_ref[...], wih0_ref[...],
                            preferred_element_type=jnp.float32) + b0_ref[...])
    h0, hs0 = run_layer(xw0_scr, whh0_ref[...], collect=True)

    # Layer-0 output at time t is [h_fwd(t) | h_rev(t)]; the reverse hidden for
    # output time t was produced at loop step T-1-t.  Merge with lane selects
    # (values stay in vregs; no VMEM round trip).
    seq = jnp.concatenate(
        [jnp.where(mask_h, hs0[t], hs0[T - 1 - t]) for t in range(T)], axis=0)

    # ---- layer 1.
    # TODO(synk): nn.LSTM inter-layer dropout (p=0.3) is train-only; identity here.
    cp_wih1.wait()
    cp_whh1.wait()
    xw1_scr[...] = (jnp.dot(seq.astype(jnp.bfloat16), wih1_vmem[...],
                            preferred_element_type=jnp.float32) + b1_ref[...])
    h1, _ = run_layer(xw1_scr, whh1_vmem[...], collect=False)

    # ---- head: h_n.mean(0) -> fc1 -> fc2 -> softmax.  The mean over the 4
    # (layer, direction) states and the fc1@fc2 composition are folded into a
    # single (128, 2) affine (exact: no nonlinearity between fc1 and fc2).
    # TODO(synk): F.dropout(p=0.2) is a train-time op; identity at inference.
    z = jnp.dot(h0 + h1, whead_ref[...],
                preferred_element_type=jnp.float32) + bhead_ref[...]
    z = z - jnp.max(z, axis=1, keepdims=True)
    e = jnp.exp(z)
    out_ref[...] = e / jnp.sum(e, axis=1, keepdims=True)


# ---------------------------------------------------------------------------
# Parameter packing into the compact direction-packed kernel layout
# (wrapper-side, constant-folded under jit).
# ---------------------------------------------------------------------------
def _pack_gate_cols(w_f, w_r):
    """(..., 4*HIDDEN) x2 -> (..., 8*HIDDEN): gate block k (128 wide) becomes
    [fwd gate k (64) | rev gate k (64)]."""
    blocks = []
    for k in range(4):
        blocks.append(w_f[..., k * HIDDEN:(k + 1) * HIDDEN])
        blocks.append(w_r[..., k * HIDDEN:(k + 1) * HIDDEN])
    return jnp.concatenate(blocks, axis=-1)


def _pack_whh(w_f, w_r):
    """(HIDDEN, 4*HIDDEN) x2 -> (2*HIDDEN, 8*HIDDEN): rows 0:64 = h_fwd feed
    only the fwd half of each gate block; rows 64:128 = h_rev feed only the rev
    half (block-diagonal inside every 128-wide gate block)."""
    z = jnp.zeros((HIDDEN, HIDDEN), w_f.dtype)
    blocks = []
    for k in range(4):
        fwd_cols = w_f[:, k * HIDDEN:(k + 1) * HIDDEN]
        rev_cols = w_r[:, k * HIDDEN:(k + 1) * HIDDEN]
        top = jnp.concatenate([fwd_cols, z], axis=-1)
        bot = jnp.concatenate([z, rev_cols], axis=-1)
        blocks.append(jnp.concatenate([top, bot], axis=0))
    return jnp.concatenate(blocks, axis=-1)        # (128, 512)


def _pack_layer(params, layer):
    wih_f, whh_f, b_f = params[("lstm", layer, 0)]
    wih_r, whh_r, b_r = params[("lstm", layer, 1)]
    wih = _pack_gate_cols(wih_f, wih_r).astype(jnp.bfloat16)   # (in_dim, 512)
    whh = _pack_whh(whh_f, whh_r).astype(jnp.bfloat16)         # (128, 512)
    b = _pack_gate_cols(b_f, b_r)[None, :].astype(jnp.float32)  # (1, 512)
    return wih, b, whh


# ---------------------------------------------------------------------------
# Deterministic parameter init (mirrors the PyTorch module's shapes; weights
# stored pre-transposed as (in_dim, out_dim)).
# ---------------------------------------------------------------------------
def init_params(key):
    params = {}
    keys = jax.random.split(key, NUM_LAYERS * NUM_DIRECTIONS + 2)
    k_lstm = 1.0 / jnp.sqrt(jnp.float32(HIDDEN))
    idx = 0
    for layer in range(NUM_LAYERS):
        in_dim = INPUT_SIZE if layer == 0 else NUM_DIRECTIONS * HIDDEN
        for direction in range(NUM_DIRECTIONS):
            kw1, kw2, kb1, kb2 = jax.random.split(keys[idx], 4)
            idx += 1
            w_ih = jax.random.uniform(kw1, (in_dim, 4 * HIDDEN),
                                      jnp.float32, -k_lstm, k_lstm)
            w_hh = jax.random.uniform(kw2, (HIDDEN, 4 * HIDDEN),
                                      jnp.float32, -k_lstm, k_lstm)
            b_ih = jax.random.uniform(kb1, (4 * HIDDEN,),
                                      jnp.float32, -k_lstm, k_lstm)
            b_hh = jax.random.uniform(kb2, (4 * HIDDEN,),
                                      jnp.float32, -k_lstm, k_lstm)
            params[("lstm", layer, direction)] = (w_ih, w_hh, b_ih + b_hh)
    k1 = 1.0 / jnp.sqrt(jnp.float32(HIDDEN))
    kfa, kfb = jax.random.split(keys[idx], 2)
    params["fc1_w"] = jax.random.uniform(kfa, (HIDDEN, 32), jnp.float32, -k1, k1)
    params["fc1_b"] = jax.random.uniform(kfb, (1, 32), jnp.float32, -k1, k1)
    k2 = 1.0 / jnp.sqrt(jnp.float32(32))
    kfc, kfd = jax.random.split(keys[idx + 1], 2)
    params["fc2_w"] = jax.random.uniform(kfc, (32, NUM_CLASSES), jnp.float32, -k2, k2)
    params["fc2_b"] = jax.random.uniform(kfd, (1, NUM_CLASSES), jnp.float32, -k2, k2)
    return params


# ---------------------------------------------------------------------------
# Forward pass wrapper: one pallas_call, everything else is parameter packing.
# ---------------------------------------------------------------------------
def anomaly_clip_lstm_forward(feat, params):
    """feat: (B, T, 512), batch_first like the PyTorch module. Returns (B, 2)."""
    B, T, D = feat.shape
    BP = ((B + 7) // 8) * 8        # pad batch to a full 8-sublane tile

    wih0, b0, whh0 = _pack_layer(params, 0)
    wih1, b1, whh1 = _pack_layer(params, 1)

    # Head fold: softmax(fc2(fc1(h_n.mean(0)))) with dropout=identity is exactly
    # softmax((h0_final + h1_final) @ w_head + b_head) in the packed layout.
    w12 = params["fc1_w"] @ params["fc2_w"]                          # (64, 2)
    w_head = 0.25 * jnp.concatenate([w12, w12], axis=0)              # (128, 2)
    b_head = params["fc1_b"] @ params["fc2_w"] + params["fc2_b"]     # (1, 2)

    # Wrapper-side data prep: time-major rows (row = t*BP + b), batch padded to
    # a full sublane tile, bf16 for the MXU input projection.
    x_t = jnp.transpose(feat.astype(jnp.float32), (1, 0, 2))         # (T, B, D)
    x_t = jnp.pad(x_t, ((0, 0), (0, BP - B), (0, 0)))                # (T, BP, D)
    x2d = x_t.reshape(T * BP, D).astype(jnp.bfloat16)

    vmem = pl.BlockSpec(memory_space=pltpu.MemorySpace.VMEM)
    hbm = pl.BlockSpec(memory_space=pl.ANY)   # layer-1 weights: manual async DMA

    kernel = functools.partial(_fused_lstm_head_kernel, BP=BP, T=T)
    out = pl.pallas_call(
        kernel,
        out_shape=jax.ShapeDtypeStruct((BP, NUM_CLASSES), jnp.float32),
        in_specs=[vmem, vmem, vmem, vmem, hbm, vmem, hbm, vmem, vmem],
        out_specs=vmem,
        scratch_shapes=[
            pltpu.VMEM((T * BP, GATES), jnp.float32),    # layer-0 x @ W_ih + b
            pltpu.VMEM((T * BP, GATES), jnp.float32),    # layer-1 seq @ W_ih + b
            pltpu.VMEM((HP, GATES), jnp.bfloat16),       # W_ih1 landing buffer
            pltpu.VMEM((HP, GATES), jnp.bfloat16),       # W_hh1 landing buffer
            pltpu.SemaphoreType.DMA((2,)),
        ],
        compiler_params=pltpu.CompilerParams(vmem_limit_bytes=32 * 1024 * 1024),
    )(x2d, wih0, b0, whh0, wih1, b1, whh1, w_head, b_head)
    return out[:B]


if __name__ == "__main__":
    key = jax.random.PRNGKey(0)
    k_param, k_feat = jax.random.split(key)
    params = init_params(k_param)

    B, T = 2, 8
    feat = jax.random.normal(k_feat, (B, T, INPUT_SIZE), dtype=jnp.float32)

    fwd = jax.jit(lambda f: anomaly_clip_lstm_forward(f, params))
    out = jax.block_until_ready(fwd(feat))

    assert out.shape == (B, NUM_CLASSES), out.shape
    assert bool(jnp.all(jnp.isfinite(out)))
    # softmax rows must sum to 1
    assert bool(jnp.allclose(jnp.sum(out, axis=1), 1.0, atol=1e-5))
    print("KERNEL_OK")
</pallas_src>

<mosaic_0001>
module attributes {stable_mosaic.version = 11 : i64} {
  func.func @_fused_lstm_head_kernel(%arg0: memref<64x512xbf16, #tpu.memory_space<vmem>>, %arg1: memref<512x512xbf16, #tpu.memory_space<vmem>>, %arg2: memref<1x512xf32, #tpu.memory_space<vmem>>, %arg3: memref<128x512xbf16, #tpu.memory_space<vmem>>, %arg4: memref<128x512xbf16, #tpu.memory_space<any>>, %arg5: memref<1x512xf32, #tpu.memory_space<vmem>>, %arg6: memref<128x512xbf16, #tpu.memory_space<any>>, %arg7: memref<128x2xf32, #tpu.memory_space<vmem>>, %arg8: memref<1x2xf32, #tpu.memory_space<vmem>>, %arg9: memref<8x2xf32, #tpu.memory_space<vmem>>, %arg10: memref<64x512xf32, #tpu.memory_space<vmem>>, %arg11: memref<64x512xf32, #tpu.memory_space<vmem>>, %arg12: memref<128x512xbf16, #tpu.memory_space<vmem>>, %arg13: memref<128x512xbf16, #tpu.memory_space<vmem>>, %arg14: memref<2x!tpu.dma_semaphore, #tpu.memory_space<semaphore_mem>>) attributes {dimension_semantics = [], scalar_prefetch = 0 : i64, scratch_operands = 5 : i64, tpu.core_type = #tpu.core_type<tc>} {
    %c0_i32 = arith.constant 0 : i32
    %0 = tpu.memref_slice %arg14[%c0_i32] : memref<2x!tpu.dma_semaphore, #tpu.memory_space<semaphore_mem>> -> memref<1x!tpu.dma_semaphore, #tpu.memory_space<semaphore_mem>>
    %1 = tpu.memref_squeeze %0 : memref<1x!tpu.dma_semaphore, #tpu.memory_space<semaphore_mem>> -> memref<!tpu.dma_semaphore, #tpu.memory_space<semaphore_mem>>
    tpu.enqueue_dma source(%arg4 : memref<128x512xbf16, #tpu.memory_space<any>>) target(%arg12 : memref<128x512xbf16, #tpu.memory_space<vmem>>) target_semaphore(%1 : memref<!tpu.dma_semaphore, #tpu.memory_space<semaphore_mem>>)
    %c1_i32 = arith.constant 1 : i32
    %2 = tpu.memref_slice %arg14[%c1_i32] : memref<2x!tpu.dma_semaphore, #tpu.memory_space<semaphore_mem>> -> memref<1x!tpu.dma_semaphore, #tpu.memory_space<semaphore_mem>>
    %3 = tpu.memref_squeeze %2 : memref<1x!tpu.dma_semaphore, #tpu.memory_space<semaphore_mem>> -> memref<!tpu.dma_semaphore, #tpu.memory_space<semaphore_mem>>
    tpu.enqueue_dma source(%arg6 : memref<128x512xbf16, #tpu.memory_space<any>>) target(%arg13 : memref<128x512xbf16, #tpu.memory_space<vmem>>) target_semaphore(%3 : memref<!tpu.dma_semaphore, #tpu.memory_space<semaphore_mem>>)
    %4 = tpu.iota {dimensions = array<i32: 1>} : vector<8x512xi32>
    %c127_i32 = arith.constant 127 : i32
    %5 = vector.broadcast %c127_i32 : i32 to vector<8x512xi32>
    %6 = arith.andi %4, %5 : vector<8x512xi32>
    %c64_i32 = arith.constant 64 : i32
    %7 = vector.broadcast %c64_i32 : i32 to vector<8x512xi32>
    %8 = arith.cmpi slt, %6, %7 : vector<8x512xi32>
    %9 = tpu.iota {dimensions = array<i32: 1>} : vector<8x128xi32>
    %c64_i32_0 = arith.constant 64 : i32
    %10 = vector.broadcast %c64_i32_0 : i32 to vector<8x128xi32>
    %11 = arith.cmpi slt, %9, %10 : vector<8x128xi32>
    %c0 = arith.constant 0 : index
    %c0_1 = arith.constant 0 : index
    %12 = vector.load %arg0[%c0, %c0_1] : memref<64x512xbf16, #tpu.memory_space<vmem>>, vector<64x512xbf16>
    %c0_2 = arith.constant 0 : index
    %c0_3 = arith.constant 0 : index
    %13 = vector.load %arg1[%c0_2, %c0_3] : memref<512x512xbf16, #tpu.memory_space<vmem>>, vector<512x512xbf16>
    %cst = arith.constant dense<0.000000e+00> : vector<64x512xf32>
    %14 = tpu.matmul %12, %13, %cst {dimension_numbers = #tpu.dot_dimension_numbers<[1], [0], [0], [1], [0, 0, 1, 1], [], []>} : vector<64x512xbf16>, vector<512x512xbf16>, vector<64x512xf32> -> vector<64x512xf32>
    %c0_4 = arith.constant 0 : index
    %c0_5 = arith.constant 0 : index
    %15 = vector.load %arg2[%c0_4, %c0_5] : memref<1x512xf32, #tpu.memory_space<vmem>>, vector<1x512xf32>
    %16 = vector.broadcast %15 : vector<1x512xf32> to vector<64x512xf32>
    %17 = arith.addf %14, %16 : vector<64x512xf32>
    %c0_6 = arith.constant 0 : index
    %c0_7 = arith.constant 0 : index
    %18 = vector.load %arg10[%c0_6, %c0_7] : memref<64x512xf32, #tpu.memory_space<vmem>>, vector<64x512xf32>
    tpu.vector_store %arg10[%c0_6, %c0_7], %17 {strides = array<i32>} : memref<64x512xf32, #tpu.memory_space<vmem>>, vector<64x512xf32>,
    %c0_8 = arith.constant 0 : index
    %c0_9 = arith.constant 0 : index
    %19 = vector.load %arg3[%c0_8, %c0_9] : memref<128x512xbf16, #tpu.memory_space<vmem>>, vector<128x512xbf16>
    %cst_10 = arith.constant 0.000000e+00 : f32
    %20 = vector.broadcast %cst_10 : f32 to vector<8x128xf32>
    %cst_11 = arith.constant 0.000000e+00 : f32
    %21 = vector.broadcast %cst_11 : f32 to vector<8x128xf32>
    %c0_12 = arith.constant 0 : index
    %c0_13 = arith.constant 0 : index
    %22 = vector.load %arg10[%c0_12, %c0_13] : memref<64x512xf32, #tpu.memory_space<vmem>>, vector<8x512xf32>
    %c56 = arith.constant 56 : index
    %c0_14 = arith.constant 0 : index
    %23 = vector.load %arg10[%c56, %c0_14] : memref<64x512xf32, #tpu.memory_space<vmem>>, vector<8x512xf32>
    %24 = arith.select %8, %22, %23 : vector<8x512xi1>, vector<8x512xf32>
    %25 = arith.truncf %20 : vector<8x128xf32> to vector<8x128xbf16>
    %cst_15 = arith.constant dense<0.000000e+00> : vector<8x512xf32>
    %26 = tpu.matmul %25, %19, %cst_15 {dimension_numbers = #tpu.dot_dimension_numbers<[1], [0], [0], [1], [0, 0, 1, 1], [], []>} : vector<8x128xbf16>, vector<128x512xbf16>, vector<8x512xf32> -> vector<8x512xf32>
    %27 = arith.addf %24, %26 : vector<8x512xf32>
    %28 = vector.extract_strided_slice %27 {offsets = [0, 0], sizes = [8, 128], strides = [1, 1]} : vector<8x512xf32> to vector<8x128xf32>
    %29 = arith.negf %28 : vector<8x128xf32>
    %30 = math.exp %29 : vector<8x128xf32>
    %cst_16 = arith.constant 1.000000e+00 : f32
    %31 = vector.broadcast %cst_16 : f32 to vector<8x128xf32>
    %32 = arith.addf %31, %30 : vector<8x128xf32>
    %33 = arith.divf %31, %32 : vector<8x128xf32>
    %34 = vector.extract_strided_slice %27 {offsets = [0, 128], sizes = [8, 128], strides = [1, 1]} : vector<8x512xf32> to vector<8x128xf32>
    %35 = arith.negf %34 : vector<8x128xf32>
    %36 = math.exp %35 : vector<8x128xf32>
    %cst_17 = arith.constant 1.000000e+00 : f32
    %37 = vector.broadcast %cst_17 : f32 to vector<8x128xf32>
    %38 = arith.addf %37, %36 : vector<8x128xf32>
    %39 = arith.divf %37, %38 : vector<8x128xf32>
    %40 = vector.extract_strided_slice %27 {offsets = [0, 256], sizes = [8, 128], strides = [1, 1]} : vector<8x512xf32> to vector<8x128xf32>
    %41 = math.tanh %40 : vector<8x128xf32>
    %42 = vector.extract_strided_slice %27 {offsets = [0, 384], sizes = [8, 128], strides = [1, 1]} : vector<8x512xf32> to vector<8x128xf32>
    %43 = arith.negf %42 : vector<8x128xf32>
    %44 = math.exp %43 : vector<8x128xf32>
    %cst_18 = arith.constant 1.000000e+00 : f32
    %45 = vector.broadcast %cst_18 : f32 to vector<8x128xf32>
    %46 = arith.addf %45, %44 : vector<8x128xf32>
    %47 = arith.divf %45, %46 : vector<8x128xf32>
    %48 = arith.mulf %39, %21 : vector<8x128xf32>
    %49 = arith.mulf %33, %41 : vector<8x128xf32>
    %50 = arith.addf %48, %49 : vector<8x128xf32>
    %51 = math.tanh %50 : vector<8x128xf32>
    %52 = arith.mulf %47, %51 : vector<8x128xf32>
    %c8 = arith.constant 8 : index
    %c0_19 = arith.constant 0 : index
    %53 = vector.load %arg10[%c8, %c0_19] : memref<64x512xf32, #tpu.memory_space<vmem>>, vector<8x512xf32>
    %c48 = arith.constant 48 : index
    %c0_20 = arith.constant 0 : index
    %54 = vector.load %arg10[%c48, %c0_20] : memref<64x512xf32, #tpu.memory_space<vmem>>, vector<8x512xf32>
    %55 = arith.select %8, %53, %54 : vector<8x512xi1>, vector<8x512xf32>
    %56 = arith.truncf %52 : vector<8x128xf32> to vector<8x128xbf16>
    %cst_21 = arith.constant dense<0.000000e+00> : vector<8x512xf32>
    %57 = tpu.matmul %56, %19, %cst_21 {dimension_numbers = #tpu.dot_dimension_numbers<[1], [0], [0], [1], [0, 0, 1, 1], [], []>} : vector<8x128xbf16>, vector<128x512xbf16>, vector<8x512xf32> -> vector<8x512xf32>
    %58 = arith.addf %55, %57 : vector<8x512xf32>
    %59 = vector.extract_strided_slice %58 {offsets = [0, 0], sizes = [8, 128], strides = [1, 1]} : vector<8x512xf32> to vector<8x128xf32>
    %60 = arith.negf %59 : vector<8x128xf32>
    %61 = math.exp %60 : vector<8x128xf32>
    %cst_22 = arith.constant 1.000000e+00 : f32
    %62 = vector.broadcast %cst_22 : f32 to vector<8x128xf32>
    %63 = arith.addf %62, %61 : vector<8x128xf32>
    %64 = arith.divf %62, %63 : vector<8x128xf32>
    %65 = vector.extract_strided_slice %58 {offsets = [0, 128], sizes = [8, 128], strides = [1, 1]} : vector<8x512xf32> to vector<8x128xf32>
    %66 = arith.negf %65 : vector<8x128xf32>
    %67 = math.exp %66 : vector<8x128xf32>
    %cst_23 = arith.constant 1.000000e+00 : f32
    %68 = vector.broadcast %cst_23 : f32 to vector<8x128xf32>
    %69 = arith.addf %68, %67 : vector<8x128xf32>
    %70 = arith.divf %68, %69 : vector<8x128xf32>
    %71 = vector.extract_strided_slice %58 {offsets = [0, 256], sizes = [8, 128], strides = [1, 1]} : vector<8x512xf32> to vector<8x128xf32>
    %72 = math.tanh %71 : vector<8x128xf32>
    %73 = vector.extract_strided_slice %58 {offsets = [0, 384], sizes = [8, 128], strides = [1, 1]} : vector<8x512xf32> to vector<8x128xf32>
    %74 = arith.negf %73 : vector<8x128xf32>
    %75 = math.exp %74 : vector<8x128xf32>
    %cst_24 = arith.constant 1.000000e+00 : f32
    %76 = vector.broadcast %cst_24 : f32 to vector<8x128xf32>
    %77 = arith.addf %76, %75 : vector<8x128xf32>
    %78 = arith.divf %76, %77 : vector<8x128xf32>
    %79 = arith.mulf %70, %50 : vector<8x128xf32>
    %80 = arith.mulf %64, %72 : vector<8x128xf32>
    %81 = arith.addf %79, %80 : vector<8x128xf32>
    %82 = math.tanh %81 : vector<8x128xf32>
    %83 = arith.mulf %78, %82 : vector<8x128xf32>
    %c16 = arith.constant 16 : index
    %c0_25 = arith.constant 0 : index
    %84 = vector.load %arg10[%c16, %c0_25] : memref<64x512xf32, #tpu.memory_space<vmem>>, vector<8x512xf32>
    %c40 = arith.constant 40 : index
    %c0_26 = arith.constant 0 : index
    %85 = vector.load %arg10[%c40, %c0_26] : memref<64x512xf32, #tpu.memory_space<vmem>>, vector<8x512xf32>
    %86 = arith.select %8, %84, %85 : vector<8x512xi1>, vector<8x512xf32>
    %87 = arith.truncf %83 : vector<8x128xf32> to vector<8x128xbf16>
    %cst_27 = arith.constant dense<0.000000e+00> : vector<8x512xf32>
    %88 = tpu.matmul %87, %19, %cst_27 {dimension_numbers = #tpu.dot_dimension_numbers<[1], [0], [0], [1], [0, 0, 1, 1], [], []>} : vector<8x128xbf16>, vector<128x512xbf16>, vector<8x512xf32> -> vector<8x512xf32>
    %89 = arith.addf %86, %88 : vector<8x512xf32>
    %90 = vector.extract_strided_slice %89 {offsets = [0, 0], sizes = [8, 128], strides = [1, 1]} : vector<8x512xf32> to vector<8x128xf32>
    %91 = arith.negf %90 : vector<8x128xf32>
    %92 = math.exp %91 : vector<8x128xf32>
    %cst_28 = arith.constant 1.000000e+00 : f32
    %93 = vector.broadcast %cst_28 : f32 to vector<8x128xf32>
    %94 = arith.addf %93, %92 : vector<8x128xf32>
    %95 = arith.divf %93, %94 : vector<8x128xf32>
    %96 = vector.extract_strided_slice %89 {offsets = [0, 128], sizes = [8, 128], strides = [1, 1]} : vector<8x512xf32> to vector<8x128xf32>
    %97 = arith.negf %96 : vector<8x128xf32>
    %98 = math.exp %97 : vector<8x128xf32>
    %cst_29 = arith.constant 1.000000e+00 : f32
    %99 = vector.broadcast %cst_29 : f32 to vector<8x128xf32>
    %100 = arith.addf %99, %98 : vector<8x128xf32>
    %101 = arith.divf %99, %100 : vector<8x128xf32>
    %102 = vector.extract_strided_slice %89 {offsets = [0, 256], sizes = [8, 128], strides = [1, 1]} : vector<8x512xf32> to vector<8x128xf32>
    %103 = math.tanh %102 : vector<8x128xf32>
    %104 = vector.extract_strided_slice %89 {offsets = [0, 384], sizes = [8, 128], strides = [1, 1]} : vector<8x512xf32> to vector<8x128xf32>
    %105 = arith.negf %104 : vector<8x128xf32>
    %106 = math.exp %105 : vector<8x128xf32>
    %cst_30 = arith.constant 1.000000e+00 : f32
    %107 = vector.broadcast %cst_30 : f32 to vector<8x128xf32>
    %108 = arith.addf %107, %106 : vector<8x128xf32>
    %109 = arith.divf %107, %108 : vector<8x128xf32>
    %110 = arith.mulf %101, %81 : vector<8x128xf32>
    %111 = arith.mulf %95, %103 : vector<8x128xf32>
    %112 = arith.addf %110, %111 : vector<8x128xf32>
    %113 = math.tanh %112 : vector<8x128xf32>
    %114 = arith.mulf %109, %113 : vector<8x128xf32>
    %c24 = arith.constant 24 : index
    %c0_31 = arith.constant 0 : index
    %115 = vector.load %arg10[%c24, %c0_31] : memref<64x512xf32, #tpu.memory_space<vmem>>, vector<8x512xf32>
    %c32 = arith.constant 32 : index
    %c0_32 = arith.constant 0 : index
    %116 = vector.load %arg10[%c32, %c0_32] : memref<64x512xf32, #tpu.memory_space<vmem>>, vector<8x512xf32>
    %117 = arith.select %8, %115, %116 : vector<8x512xi1>, vector<8x512xf32>
    %118 = arith.truncf %114 : vector<8x128xf32> to vector<8x128xbf16>
    %cst_33 = arith.constant dense<0.000000e+00> : vector<8x512xf32>
    %119 = tpu.matmul %118, %19, %cst_33 {dimension_numbers = #tpu.dot_dimension_numbers<[1], [0], [0], [1], [0, 0, 1, 1], [], []>} : vector<8x128xbf16>, vector<128x512xbf16>, vector<8x512xf32> -> vector<8x512xf32>
    %120 = arith.addf %117, %119 : vector<8x512xf32>
    %121 = vector.extract_strided_slice %120 {offsets = [0, 0], sizes = [8, 128], strides = [1, 1]} : vector<8x512xf32> to vector<8x128xf32>
    %122 = arith.negf %121 : vector<8x128xf32>
    %123 = math.exp %122 : vector<8x128xf32>
    %cst_34 = arith.constant 1.000000e+00 : f32
    %124 = vector.broadcast %cst_34 : f32 to vector<8x128xf32>
    %125 = arith.addf %124, %123 : vector<8x128xf32>
    %126 = arith.divf %124, %125 : vector<8x128xf32>
    %127 = vector.extract_strided_slice %120 {offsets = [0, 128], sizes = [8, 128], strides = [1, 1]} : vector<8x512xf32> to vector<8x128xf32>
    %128 = arith.negf %127 : vector<8x128xf32>
    %129 = math.exp %128 : vector<8x128xf32>
    %cst_35 = arith.constant 1.000000e+00 : f32
    %130 = vector.broadcast %cst_35 : f32 to vector<8x128xf32>
    %131 = arith.addf %130, %129 : vector<8x128xf32>
    %132 = arith.divf %130, %131 : vector<8x128xf32>
    %133 = vector.extract_strided_slice %120 {offsets = [0, 256], sizes = [8, 128], strides = [1, 1]} : vector<8x512xf32> to vector<8x128xf32>
    %134 = math.tanh %133 : vector<8x128xf32>
    %135 = vector.extract_strided_slice %120 {offsets = [0, 384], sizes = [8, 128], strides = [1, 1]} : vector<8x512xf32> to vector<8x128xf32>
    %136 = arith.negf %135 : vector<8x128xf32>
    %137 = math.exp %136 : vector<8x128xf32>
    %cst_36 = arith.constant 1.000000e+00 : f32
    %138 = vector.broadcast %cst_36 : f32 to vector<8x128xf32>
    %139 = arith.addf %138, %137 : vector<8x128xf32>
    %140 = arith.divf %138, %139 : vector<8x128xf32>
    %141 = arith.mulf %132, %112 : vector<8x128xf32>
    %142 = arith.mulf %126, %134 : vector<8x128xf32>
    %143 = arith.addf %141, %142 : vector<8x128xf32>
    %144 = math.tanh %143 : vector<8x128xf32>
    %145 = arith.mulf %140, %144 : vector<8x128xf32>
    %c32_37 = arith.constant 32 : index
    %c0_38 = arith.constant 0 : index
    %146 = vector.load %arg10[%c32_37, %c0_38] : memref<64x512xf32, #tpu.memory_space<vmem>>, vector<8x512xf32>
    %c24_39 = arith.constant 24 : index
    %c0_40 = arith.constant 0 : index
    %147 = vector.load %arg10[%c24_39, %c0_40] : memref<64x512xf32, #tpu.memory_space<vmem>>, vector<8x512xf32>
    %148 = arith.select %8, %146, %147 : vector<8x512xi1>, vector<8x512xf32>
    %149 = arith.truncf %145 : vector<8x128xf32> to vector<8x128xbf16>
    %cst_41 = arith.constant dense<0.000000e+00> : vector<8x512xf32>
    %150 = tpu.matmul %149, %19, %cst_41 {dimension_numbers = #tpu.dot_dimension_numbers<[1], [0], [0], [1], [0, 0, 1, 1], [], []>} : vector<8x128xbf16>, vector<128x512xbf16>, vector<8x512xf32> -> vector<8x512xf32>
    %151 = arith.addf %148, %150 : vector<8x512xf32>
    %152 = vector.extract_strided_slice %151 {offsets = [0, 0], sizes = [8, 128], strides = [1, 1]} : vector<8x512xf32> to vector<8x128xf32>
    %153 = arith.negf %152 : vector<8x128xf32>
    %154 = math.exp %153 : vector<8x128xf32>
    %cst_42 = arith.constant 1.000000e+00 : f32
    %155 = vector.broadcast %cst_42 : f32 to vector<8x128xf32>
    %156 = arith.addf %155, %154 : vector<8x128xf32>
    %157 = arith.divf %155, %156 : vector<8x128xf32>
    %158 = vector.extract_strided_slice %151 {offsets = [0, 128], sizes = [8, 128], strides = [1, 1]} : vector<8x512xf32> to vector<8x128xf32>
    %159 = arith.negf %158 : vector<8x128xf32>
    %160 = math.exp %159 : vector<8x128xf32>
    %cst_43 = arith.constant 1.000000e+00 : f32
    %161 = vector.broadcast %cst_43 : f32 to vector<8x128xf32>
    %162 = arith.addf %161, %160 : vector<8x128xf32>
    %163 = arith.divf %161, %162 : vector<8x128xf32>
    %164 = vector.extract_strided_slice %151 {offsets = [0, 256], sizes = [8, 128], strides = [1, 1]} : vector<8x512xf32> to vector<8x128xf32>
    %165 = math.tanh %164 : vector<8x128xf32>
    %166 = vector.extract_strided_slice %151 {offsets = [0, 384], sizes = [8, 128], strides = [1, 1]} : vector<8x512xf32> to vector<8x128xf32>
    %167 = arith.negf %166 : vector<8x128xf32>
    %168 = math.exp %167 : vector<8x128xf32>
    %cst_44 = arith.constant 1.000000e+00 : f32
    %169 = vector.broadcast %cst_44 : f32 to vector<8x128xf32>
    %170 = arith.addf %169, %168 : vector<8x128xf32>
    %171 = arith.divf %169, %170 : vector<8x128xf32>
    %172 = arith.mulf %163, %143 : vector<8x128xf32>
    %173 = arith.mulf %157, %165 : vector<8x128xf32>
    %174 = arith.addf %172, %173 : vector<8x128xf32>
    %175 = math.tanh %174 : vector<8x128xf32>
    %176 = arith.mulf %171, %175 : vector<8x128xf32>
    %c40_45 = arith.constant 40 : index
    %c0_46 = arith.constant 0 : index
    %177 = vector.load %arg10[%c40_45, %c0_46] : memref<64x512xf32, #tpu.memory_space<vmem>>, vector<8x512xf32>
    %c16_47 = arith.constant 16 : index
    %c0_48 = arith.constant 0 : index
    %178 = vector.load %arg10[%c16_47, %c0_48] : memref<64x512xf32, #tpu.memory_space<vmem>>, vector<8x512xf32>
    %179 = arith.select %8, %177, %178 : vector<8x512xi1>, vector<8x512xf32>
    %180 = arith.truncf %176 : vector<8x128xf32> to vector<8x128xbf16>
    %cst_49 = arith.constant dense<0.000000e+00> : vector<8x512xf32>
    %181 = tpu.matmul %180, %19, %cst_49 {dimension_numbers = #tpu.dot_dimension_numbers<[1], [0], [0], [1], [0, 0, 1, 1], [], []>} : vector<8x128xbf16>, vector<128x512xbf16>, vector<8x512xf32> -> vector<8x512xf32>
    %182 = arith.addf %179, %181 : vector<8x512xf32>
    %183 = vector.extract_strided_slice %182 {offsets = [0, 0], sizes = [8, 128], strides = [1, 1]} : vector<8x512xf32> to vector<8x128xf32>
    %184 = arith.negf %183 : vector<8x128xf32>
    %185 = math.exp %184 : vector<8x128xf32>
    %cst_50 = arith.constant 1.000000e+00 : f32
    %186 = vector.broadcast %cst_50 : f32 to vector<8x128xf32>
    %187 = arith.addf %186, %185 : vector<8x128xf32>
    %188 = arith.divf %186, %187 : vector<8x128xf32>
    %189 = vector.extract_strided_slice %182 {offsets = [0, 128], sizes = [8, 128], strides = [1, 1]} : vector<8x512xf32> to vector<8x128xf32>
    %190 = arith.negf %189 : vector<8x128xf32>
    %191 = math.exp %190 : vector<8x128xf32>
    %cst_51 = arith.constant 1.000000e+00 : f32
    %192 = vector.broadcast %cst_51 : f32 to vector<8x128xf32>
    %193 = arith.addf %192, %191 : vector<8x128xf32>
    %194 = arith.divf %192, %193 : vector<8x128xf32>
    %195 = vector.extract_strided_slice %182 {offsets = [0, 256], sizes = [8, 128], strides = [1, 1]} : vector<8x512xf32> to vector<8x128xf32>
    %196 = math.tanh %195 : vector<8x128xf32>
    %197 = vector.extract_strided_slice %182 {offsets = [0, 384], sizes = [8, 128], strides = [1, 1]} : vector<8x512xf32> to vector<8x128xf32>
    %198 = arith.negf %197 : vector<8x128xf32>
    %199 = math.exp %198 : vector<8x128xf32>
    %cst_52 = arith.constant 1.000000e+00 : f32
    %200 = vector.broadcast %cst_52 : f32 to vector<8x128xf32>
    %201 = arith.addf %200, %199 : vector<8x128xf32>
    %202 = arith.divf %200, %201 : vector<8x128xf32>
    %203 = arith.mulf %194, %174 : vector<8x128xf32>
    %204 = arith.mulf %188, %196 : vector<8x128xf32>
    %205 = arith.addf %203, %204 : vector<8x128xf32>
    %206 = math.tanh %205 : vector<8x128xf32>
    %207 = arith.mulf %202, %206 : vector<8x128xf32>
    %c48_53 = arith.constant 48 : index
    %c0_54 = arith.constant 0 : index
    %208 = vector.load %arg10[%c48_53, %c0_54] : memref<64x512xf32, #tpu.memory_space<vmem>>, vector<8x512xf32>
    %c8_55 = arith.constant 8 : index
    %c0_56 = arith.constant 0 : index
    %209 = vector.load %arg10[%c8_55, %c0_56] : memref<64x512xf32, #tpu.memory_space<vmem>>, vector<8x512xf32>
    %210 = arith.select %8, %208, %209 : vector<8x512xi1>, vector<8x512xf32>
    %211 = arith.truncf %207 : vector<8x128xf32> to vector<8x128xbf16>
    %cst_57 = arith.constant dense<0.000000e+00> : vector<8x512xf32>
    %212 = tpu.matmul %211, %19, %cst_57 {dimension_numbers = #tpu.dot_dimension_numbers<[1], [0], [0], [1], [0, 0, 1, 1], [], []>} : vector<8x128xbf16>, vector<128x512xbf16>, vector<8x512xf32> -> vector<8x512xf32>
    %213 = arith.addf %210, %212 : vector<8x512xf32>
    %214 = vector.extract_strided_slice %213 {offsets = [0, 0], sizes = [8, 128], strides = [1, 1]} : vector<8x512xf32> to vector<8x128xf32>
    %215 = arith.negf %214 : vector<8x128xf32>
    %216 = math.exp %215 : vector<8x128xf32>
    %cst_58 = arith.constant 1.000000e+00 : f32
    %217 = vector.broadcast %cst_58 : f32 to vector<8x128xf32>
    %218 = arith.addf %217, %216 : vector<8x128xf32>
    %219 = arith.divf %217, %218 : vector<8x128xf32>
    %220 = vector.extract_strided_slice %213 {offsets = [0, 128], sizes = [8, 128], strides = [1, 1]} : vector<8x512xf32> to vector<8x128xf32>
    %221 = arith.negf %220 : vector<8x128xf32>
    %222 = math.exp %221 : vector<8x128xf32>
    %cst_59 = arith.constant 1.000000e+00 : f32
    %223 = vector.broadcast %cst_59 : f32 to vector<8x128xf32>
    %224 = arith.addf %223, %222 : vector<8x128xf32>
    %225 = arith.divf %223, %224 : vector<8x128xf32>
    %226 = vector.extract_strided_slice %213 {offsets = [0, 256], sizes = [8, 128], strides = [1, 1]} : vector<8x512xf32> to vector<8x128xf32>
    %227 = math.tanh %226 : vector<8x128xf32>
    %228 = vector.extract_strided_slice %213 {offsets = [0, 384], sizes = [8, 128], strides = [1, 1]} : vector<8x512xf32> to vector<8x128xf32>
    %229 = arith.negf %228 : vector<8x128xf32>
    %230 = math.exp %229 : vector<8x128xf32>
    %cst_60 = arith.constant 1.000000e+00 : f32
    %231 = vector.broadcast %cst_60 : f32 to vector<8x128xf32>
    %232 = arith.addf %231, %230 : vector<8x128xf32>
    %233 = arith.divf %231, %232 : vector<8x128xf32>
    %234 = arith.mulf %225, %205 : vector<8x128xf32>
    %235 = arith.mulf %219, %227 : vector<8x128xf32>
    %236 = arith.addf %234, %235 : vector<8x128xf32>
    %237 = math.tanh %236 : vector<8x128xf32>
    %238 = arith.mulf %233, %237 : vector<8x128xf32>
    %c56_61 = arith.constant 56 : index
    %c0_62 = arith.constant 0 : index
    %239 = vector.load %arg10[%c56_61, %c0_62] : memref<64x512xf32, #tpu.memory_space<vmem>>, vector<8x512xf32>
    %c0_63 = arith.constant 0 : index
    %c0_64 = arith.constant 0 : index
    %240 = vector.load %arg10[%c0_63, %c0_64] : memref<64x512xf32, #tpu.memory_space<vmem>>, vector<8x512xf32>
    %241 = arith.select %8, %239, %240 : vector<8x512xi1>, vector<8x512xf32>
    %242 = arith.truncf %238 : vector<8x128xf32> to vector<8x128xbf16>
    %cst_65 = arith.constant dense<0.000000e+00> : vector<8x512xf32>
    %243 = tpu.matmul %242, %19, %cst_65 {dimension_numbers = #tpu.dot_dimension_numbers<[1], [0], [0], [1], [0, 0, 1, 1], [], []>} : vector<8x128xbf16>, vector<128x512xbf16>, vector<8x512xf32> -> vector<8x512xf32>
    %244 = arith.addf %241, %243 : vector<8x512xf32>
    %245 = vector.extract_strided_slice %244 {offsets = [0, 0], sizes = [8, 128], strides = [1, 1]} : vector<8x512xf32> to vector<8x128xf32>
    %246 = arith.negf %245 : vector<8x128xf32>
    %247 = math.exp %246 : vector<8x128xf32>
    %cst_66 = arith.constant 1.000000e+00 : f32
    %248 = vector.broadcast %cst_66 : f32 to vector<8x128xf32>
    %249 = arith.addf %248, %247 : vector<8x128xf32>
    %250 = arith.divf %248, %249 : vector<8x128xf32>
    %251 = vector.extract_strided_slice %244 {offsets = [0, 128], sizes = [8, 128], strides = [1, 1]} : vector<8x512xf32> to vector<8x128xf32>
    %252 = arith.negf %251 : vector<8x128xf32>
    %253 = math.exp %252 : vector<8x128xf32>
    %cst_67 = arith.constant 1.000000e+00 : f32
    %254 = vector.broadcast %cst_67 : f32 to vector<8x128xf32>
    %255 = arith.addf %254, %253 : vector<8x128xf32>
    %256 = arith.divf %254, %255 : vector<8x128xf32>
    %257 = vector.extract_strided_slice %244 {offsets = [0, 256], sizes = [8, 128], strides = [1, 1]} : vector<8x512xf32> to vector<8x128xf32>
    %258 = math.tanh %257 : vector<8x128xf32>
    %259 = vector.extract_strided_slice %244 {offsets = [0, 384], sizes = [8, 128], strides = [1, 1]} : vector<8x512xf32> to vector<8x128xf32>
    %260 = arith.negf %259 : vector<8x128xf32>
    %261 = math.exp %260 : vector<8x128xf32>
    %cst_68 = arith.constant 1.000000e+00 : f32
    %262 = vector.broadcast %cst_68 : f32 to vector<8x128xf32>
    %263 = arith.addf %262, %261 : vector<8x128xf32>
    %264 = arith.divf %262, %263 : vector<8x128xf32>
    %265 = arith.mulf %256, %236 : vector<8x128xf32>
    %266 = arith.mulf %250, %258 : vector<8x128xf32>
    %267 = arith.addf %265, %266 : vector<8x128xf32>
    %268 = math.tanh %267 : vector<8x128xf32>
    %269 = arith.mulf %264, %268 : vector<8x128xf32>
    %270 = arith.select %11, %52, %269 : vector<8x128xi1>, vector<8x128xf32>
    %271 = arith.select %11, %83, %238 : vector<8x128xi1>, vector<8x128xf32>
    %272 = arith.select %11, %114, %207 : vector<8x128xi1>, vector<8x128xf32>
    %273 = arith.select %11, %145, %176 : vector<8x128xi1>, vector<8x128xf32>
    %274 = arith.select %11, %176, %145 : vector<8x128xi1>, vector<8x128xf32>
    %275 = arith.select %11, %207, %114 : vector<8x128xi1>, vector<8x128xf32>
    %276 = arith.select %11, %238, %83 : vector<8x128xi1>, vector<8x128xf32>
    %277 = arith.select %11, %269, %52 : vector<8x128xi1>, vector<8x128xf32>
    %278 = tpu.concatenate %270, %271, %272, %273, %274, %275, %276, %277 in 0 : vector<8x128xf32>, vector<8x128xf32>, vector<8x128xf32>, vector<8x128xf32>, vector<8x128xf32>, vector<8x128xf32>, vector<8x128xf32>, vector<8x128xf32> -> vector<64x128xf32>
    %c0_i32_69 = arith.constant 0 : i32
    %279 = tpu.memref_slice %arg14[%c0_i32_69] : memref<2x!tpu.dma_semaphore, #tpu.memory_space<semaphore_mem>> -> memref<1x!tpu.dma_semaphore, #tpu.memory_space<semaphore_mem>>
    %280 = tpu.memref_squeeze %279 : memref<1x!tpu.dma_semaphore, #tpu.memory_space<semaphore_mem>> -> memref<!tpu.dma_semaphore, #tpu.memory_space<semaphore_mem>>
    tpu.wait_dma2 semaphore(%280 : memref<!tpu.dma_semaphore, #tpu.memory_space<semaphore_mem>>) src(%arg4 : memref<128x512xbf16, #tpu.memory_space<any>>) dst(%arg12 : memref<128x512xbf16, #tpu.memory_space<vmem>>)
    %c1_i32_70 = arith.constant 1 : i32
    %281 = tpu.memref_slice %arg14[%c1_i32_70] : memref<2x!tpu.dma_semaphore, #tpu.memory_space<semaphore_mem>> -> memref<1x!tpu.dma_semaphore, #tpu.memory_space<semaphore_mem>>
    %282 = tpu.memref_squeeze %281 : memref<1x!tpu.dma_semaphore, #tpu.memory_space<semaphore_mem>> -> memref<!tpu.dma_semaphore, #tpu.memory_space<semaphore_mem>>
    tpu.wait_dma2 semaphore(%282 : memref<!tpu.dma_semaphore, #tpu.memory_space<semaphore_mem>>) src(%arg6 : memref<128x512xbf16, #tpu.memory_space<any>>) dst(%arg13 : memref<128x512xbf16, #tpu.memory_space<vmem>>)
    %283 = arith.truncf %278 : vector<64x128xf32> to vector<64x128xbf16>
    %c0_71 = arith.constant 0 : index
    %c0_72 = arith.constant 0 : index
    %284 = vector.load %arg12[%c0_71, %c0_72] : memref<128x512xbf16, #tpu.memory_space<vmem>>, vector<128x512xbf16>
    %cst_73 = arith.constant dense<0.000000e+00> : vector<64x512xf32>
    %285 = tpu.matmul %283, %284, %cst_73 {dimension_numbers = #tpu.dot_dimension_numbers<[1], [0], [0], [1], [0, 0, 1, 1], [], []>} : vector<64x128xbf16>, vector<128x512xbf16>, vector<64x512xf32> -> vector<64x512xf32>
    %c0_74 = arith.constant 0 : index
    %c0_75 = arith.constant 0 : index
    %286 = vector.load %arg5[%c0_74, %c0_75] : memref<1x512xf32, #tpu.memory_space<vmem>>, vector<1x512xf32>
    %287 = vector.broadcast %286 : vector<1x512xf32> to vector<64x512xf32>
    %288 = arith.addf %285, %287 : vector<64x512xf32>
    %c0_76 = arith.constant 0 : index
    %c0_77 = arith.constant 0 : index
    %289 = vector.load %arg11[%c0_76, %c0_77] : memref<64x512xf32, #tpu.memory_space<vmem>>, vector<64x512xf32>
    tpu.vector_store %arg11[%c0_76, %c0_77], %288 {strides = array<i32>} : memref<64x512xf32, #tpu.memory_space<vmem>>, vector<64x512xf32>,
    %c0_78 = arith.constant 0 : index
    %c0_79 = arith.constant 0 : index
    %290 = vector.load %arg13[%c0_78, %c0_79] : memref<128x512xbf16, #tpu.memory_space<vmem>>, vector<128x512xbf16>
    %cst_80 = arith.constant 0.000000e+00 : f32
    %291 = vector.broadcast %cst_80 : f32 to vector<8x128xf32>
    %cst_81 = arith.constant 0.000000e+00 : f32
    %292 = vector.broadcast %cst_81 : f32 to vector<8x128xf32>
    %c0_82 = arith.constant 0 : index
    %c0_83 = arith.constant 0 : index
    %293 = vector.load %arg11[%c0_82, %c0_83] : memref<64x512xf32, #tpu.memory_space<vmem>>, vector<8x512xf32>
    %c56_84 = arith.constant 56 : index
    %c0_85 = arith.constant 0 : index
    %294 = vector.load %arg11[%c56_84, %c0_85] : memref<64x512xf32, #tpu.memory_space<vmem>>, vector<8x512xf32>
    %295 = arith.select %8, %293, %294 : vector<8x512xi1>, vector<8x512xf32>
    %296 = arith.truncf %291 : vector<8x128xf32> to vector<8x128xbf16>
    %cst_86 = arith.constant dense<0.000000e+00> : vector<8x512xf32>
    %297 = tpu.matmul %296, %290, %cst_86 {dimension_numbers = #tpu.dot_dimension_numbers<[1], [0], [0], [1], [0, 0, 1, 1], [], []>} : vector<8x128xbf16>, vector<128x512xbf16>, vector<8x512xf32> -> vector<8x512xf32>
    %298 = arith.addf %295, %297 : vector<8x512xf32>
    %299 = vector.extract_strided_slice %298 {offsets = [0, 0], sizes = [8, 128], strides = [1, 1]} : vector<8x512xf32> to vector<8x128xf32>
    %300 = arith.negf %299 : vector<8x128xf32>
    %301 = math.exp %300 : vector<8x128xf32>
    %cst_87 = arith.constant 1.000000e+00 : f32
    %302 = vector.broadcast %cst_87 : f32 to vector<8x128xf32>
    %303 = arith.addf %302, %301 : vector<8x128xf32>
    %304 = arith.divf %302, %303 : vector<8x128xf32>
    %305 = vector.extract_strided_slice %298 {offsets = [0, 128], sizes = [8, 128], strides = [1, 1]} : vector<8x512xf32> to vector<8x128xf32>
    %306 = arith.negf %305 : vector<8x128xf32>
    %307 = math.exp %306 : vector<8x128xf32>
    %cst_88 = arith.constant 1.000000e+00 : f32
    %308 = vector.broadcast %cst_88 : f32 to vector<8x128xf32>
    %309 = arith.addf %308, %307 : vector<8x128xf32>
    %310 = arith.divf %308, %309 : vector<8x128xf32>
    %311 = vector.extract_strided_slice %298 {offsets = [0, 256], sizes = [8, 128], strides = [1, 1]} : vector<8x512xf32> to vector<8x128xf32>
    %312 = math.tanh %311 : vector<8x128xf32>
    %313 = vector.extract_strided_slice %298 {offsets = [0, 384], sizes = [8, 128], strides = [1, 1]} : vector<8x512xf32> to vector<8x128xf32>
    %314 = arith.negf %313 : vector<8x128xf32>
    %315 = math.exp %314 : vector<8x128xf32>
    %cst_89 = arith.constant 1.000000e+00 : f32
    %316 = vector.broadcast %cst_89 : f32 to vector<8x128xf32>
    %317 = arith.addf %316, %315 : vector<8x128xf32>
    %318 = arith.divf %316, %317 : vector<8x128xf32>
    %319 = arith.mulf %310, %292 : vector<8x128xf32>
    %320 = arith.mulf %304, %312 : vector<8x128xf32>
    %321 = arith.addf %319, %320 : vector<8x128xf32>
    %322 = math.tanh %321 : vector<8x128xf32>
    %323 = arith.mulf %318, %322 : vector<8x128xf32>
    %c8_90 = arith.constant 8 : index
    %c0_91 = arith.constant 0 : index
    %324 = vector.load %arg11[%c8_90, %c0_91] : memref<64x512xf32, #tpu.memory_space<vmem>>, vector<8x512xf32>
    %c48_92 = arith.constant 48 : index
    %c0_93 = arith.constant 0 : index
    %325 = vector.load %arg11[%c48_92, %c0_93] : memref<64x512xf32, #tpu.memory_space<vmem>>, vector<8x512xf32>
    %326 = arith.select %8, %324, %325 : vector<8x512xi1>, vector<8x512xf32>
    %327 = arith.truncf %323 : vector<8x128xf32> to vector<8x128xbf16>
    %cst_94 = arith.constant dense<0.000000e+00> : vector<8x512xf32>
    %328 = tpu.matmul %327, %290, %cst_94 {dimension_numbers = #tpu.dot_dimension_numbers<[1], [0], [0], [1], [0, 0, 1, 1], [], []>} : vector<8x128xbf16>, vector<128x512xbf16>, vector<8x512xf32> -> vector<8x512xf32>
    %329 = arith.addf %326, %328 : vector<8x512xf32>
    %330 = vector.extract_strided_slice %329 {offsets = [0, 0], sizes = [8, 128], strides = [1, 1]} : vector<8x512xf32> to vector<8x128xf32>
    %331 = arith.negf %330 : vector<8x128xf32>
    %332 = math.exp %331 : vector<8x128xf32>
    %cst_95 = arith.constant 1.000000e+00 : f32
    %333 = vector.broadcast %cst_95 : f32 to vector<8x128xf32>
    %334 = arith.addf %333, %332 : vector<8x128xf32>
    %335 = arith.divf %333, %334 : vector<8x128xf32>
    %336 = vector.extract_strided_slice %329 {offsets = [0, 128], sizes = [8, 128], strides = [1, 1]} : vector<8x512xf32> to vector<8x128xf32>
    %337 = arith.negf %336 : vector<8x128xf32>
    %338 = math.exp %337 : vector<8x128xf32>
    %cst_96 = arith.constant 1.000000e+00 : f32
    %339 = vector.broadcast %cst_96 : f32 to vector<8x128xf32>
    %340 = arith.addf %339, %338 : vector<8x128xf32>
    %341 = arith.divf %339, %340 : vector<8x128xf32>
    %342 = vector.extract_strided_slice %329 {offsets = [0, 256], sizes = [8, 128], strides = [1, 1]} : vector<8x512xf32> to vector<8x128xf32>
    %343 = math.tanh %342 : vector<8x128xf32>
    %344 = vector.extract_strided_slice %329 {offsets = [0, 384], sizes = [8, 128], strides = [1, 1]} : vector<8x512xf32> to vector<8x128xf32>
    %345 = arith.negf %344 : vector<8x128xf32>
    %346 = math.exp %345 : vector<8x128xf32>
    %cst_97 = arith.constant 1.000000e+00 : f32
    %347 = vector.broadcast %cst_97 : f32 to vector<8x128xf32>
    %348 = arith.addf %347, %346 : vector<8x128xf32>
    %349 = arith.divf %347, %348 : vector<8x128xf32>
    %350 = arith.mulf %341, %321 : vector<8x128xf32>
    %351 = arith.mulf %335, %343 : vector<8x128xf32>
    %352 = arith.addf %350, %351 : vector<8x128xf32>
    %353 = math.tanh %352 : vector<8x128xf32>
    %354 = arith.mulf %349, %353 : vector<8x128xf32>
    %c16_98 = arith.constant 16 : index
    %c0_99 = arith.constant 0 : index
    %355 = vector.load %arg11[%c16_98, %c0_99] : memref<64x512xf32, #tpu.memory_space<vmem>>, vector<8x512xf32>
    %c40_100 = arith.constant 40 : index
    %c0_101 = arith.constant 0 : index
    %356 = vector.load %arg11[%c40_100, %c0_101] : memref<64x512xf32, #tpu.memory_space<vmem>>, vector<8x512xf32>
    %357 = arith.select %8, %355, %356 : vector<8x512xi1>, vector<8x512xf32>
    %358 = arith.truncf %354 : vector<8x128xf32> to vector<8x128xbf16>
    %cst_102 = arith.constant dense<0.000000e+00> : vector<8x512xf32>
    %359 = tpu.matmul %358, %290, %cst_102 {dimension_numbers = #tpu.dot_dimension_numbers<[1], [0], [0], [1], [0, 0, 1, 1], [], []>} : vector<8x128xbf16>, vector<128x512xbf16>, vector<8x512xf32> -> vector<8x512xf32>
    %360 = arith.addf %357, %359 : vector<8x512xf32>
    %361 = vector.extract_strided_slice %360 {offsets = [0, 0], sizes = [8, 128], strides = [1, 1]} : vector<8x512xf32> to vector<8x128xf32>
    %362 = arith.negf %361 : vector<8x128xf32>
    %363 = math.exp %362 : vector<8x128xf32>
    %cst_103 = arith.constant 1.000000e+00 : f32
    %364 = vector.broadcast %cst_103 : f32 to vector<8x128xf32>
    %365 = arith.addf %364, %363 : vector<8x128xf32>
    %366 = arith.divf %364, %365 : vector<8x128xf32>
    %367 = vector.extract_strided_slice %360 {offsets = [0, 128], sizes = [8, 128], strides = [1, 1]} : vector<8x512xf32> to vector<8x128xf32>
    %368 = arith.negf %367 : vector<8x128xf32>
    %369 = math.exp %368 : vector<8x128xf32>
    %cst_104 = arith.constant 1.000000e+00 : f32
    %370 = vector.broadcast %cst_104 : f32 to vector<8x128xf32>
    %371 = arith.addf %370, %369 : vector<8x128xf32>
    %372 = arith.divf %370, %371 : vector<8x128xf32>
    %373 = vector.extract_strided_slice %360 {offsets = [0, 256], sizes = [8, 128], strides = [1, 1]} : vector<8x512xf32> to vector<8x128xf32>
    %374 = math.tanh %373 : vector<8x128xf32>
    %375 = vector.extract_strided_slice %360 {offsets = [0, 384], sizes = [8, 128], strides = [1, 1]} : vector<8x512xf32> to vector<8x128xf32>
    %376 = arith.negf %375 : vector<8x128xf32>
    %377 = math.exp %376 : vector<8x128xf32>
    %cst_105 = arith.constant 1.000000e+00 : f32
    %378 = vector.broadcast %cst_105 : f32 to vector<8x128xf32>
    %379 = arith.addf %378, %377 : vector<8x128xf32>
    %380 = arith.divf %378, %379 : vector<8x128xf32>
    %381 = arith.mulf %372, %352 : vector<8x128xf32>
    %382 = arith.mulf %366, %374 : vector<8x128xf32>
    %383 = arith.addf %381, %382 : vector<8x128xf32>
    %384 = math.tanh %383 : vector<8x128xf32>
    %385 = arith.mulf %380, %384 : vector<8x128xf32>
    %c24_106 = arith.constant 24 : index
    %c0_107 = arith.constant 0 : index
    %386 = vector.load %arg11[%c24_106, %c0_107] : memref<64x512xf32, #tpu.memory_space<vmem>>, vector<8x512xf32>
    %c32_108 = arith.constant 32 : index
    %c0_109 = arith.constant 0 : index
    %387 = vector.load %arg11[%c32_108, %c0_109] : memref<64x512xf32, #tpu.memory_space<vmem>>, vector<8x512xf32>
    %388 = arith.select %8, %386, %387 : vector<8x512xi1>, vector<8x512xf32>
    %389 = arith.truncf %385 : vector<8x128xf32> to vector<8x128xbf16>
    %cst_110 = arith.constant dense<0.000000e+00> : vector<8x512xf32>
    %390 = tpu.matmul %389, %290, %cst_110 {dimension_numbers = #tpu.dot_dimension_numbers<[1], [0], [0], [1], [0, 0, 1, 1], [], []>} : vector<8x128xbf16>, vector<128x512xbf16>, vector<8x512xf32> -> vector<8x512xf32>
    %391 = arith.addf %388, %390 : vector<8x512xf32>
    %392 = vector.extract_strided_slice %391 {offsets = [0, 0], sizes = [8, 128], strides = [1, 1]} : vector<8x512xf32> to vector<8x128xf32>
    %393 = arith.negf %392 : vector<8x128xf32>
    %394 = math.exp %393 : vector<8x128xf32>
    %cst_111 = arith.constant 1.000000e+00 : f32
    %395 = vector.broadcast %cst_111 : f32 to vector<8x128xf32>
    %396 = arith.addf %395, %394 : vector<8x128xf32>
    %397 = arith.divf %395, %396 : vector<8x128xf32>
    %398 = vector.extract_strided_slice %391 {offsets = [0, 128], sizes = [8, 128], strides = [1, 1]} : vector<8x512xf32> to vector<8x128xf32>
    %399 = arith.negf %398 : vector<8x128xf32>
    %400 = math.exp %399 : vector<8x128xf32>
    %cst_112 = arith.constant 1.000000e+00 : f32
    %401 = vector.broadcast %cst_112 : f32 to vector<8x128xf32>
    %402 = arith.addf %401, %400 : vector<8x128xf32>
    %403 = arith.divf %401, %402 : vector<8x128xf32>
    %404 = vector.extract_strided_slice %391 {offsets = [0, 256], sizes = [8, 128], strides = [1, 1]} : vector<8x512xf32> to vector<8x128xf32>
    %405 = math.tanh %404 : vector<8x128xf32>
    %406 = vector.extract_strided_slice %391 {offsets = [0, 384], sizes = [8, 128], strides = [1, 1]} : vector<8x512xf32> to vector<8x128xf32>
    %407 = arith.negf %406 : vector<8x128xf32>
    %408 = math.exp %407 : vector<8x128xf32>
    %cst_113 = arith.constant 1.000000e+00 : f32
    %409 = vector.broadcast %cst_113 : f32 to vector<8x128xf32>
    %410 = arith.addf %409, %408 : vector<8x128xf32>
    %411 = arith.divf %409, %410 : vector<8x128xf32>
    %412 = arith.mulf %403, %383 : vector<8x128xf32>
    %413 = arith.mulf %397, %405 : vector<8x128xf32>
    %414 = arith.addf %412, %413 : vector<8x128xf32>
    %415 = math.tanh %414 : vector<8x128xf32>
    %416 = arith.mulf %411, %415 : vector<8x128xf32>
    %c32_114 = arith.constant 32 : index
    %c0_115 = arith.constant 0 : index
    %417 = vector.load %arg11[%c32_114, %c0_115] : memref<64x512xf32, #tpu.memory_space<vmem>>, vector<8x512xf32>
    %c24_116 = arith.constant 24 : index
    %c0_117 = arith.constant 0 : index
    %418 = vector.load %arg11[%c24_116, %c0_117] : memref<64x512xf32, #tpu.memory_space<vmem>>, vector<8x512xf32>
    %419 = arith.select %8, %417, %418 : vector<8x512xi1>, vector<8x512xf32>
    %420 = arith.truncf %416 : vector<8x128xf32> to vector<8x128xbf16>
    %cst_118 = arith.constant dense<0.000000e+00> : vector<8x512xf32>
    %421 = tpu.matmul %420, %290, %cst_118 {dimension_numbers = #tpu.dot_dimension_numbers<[1], [0], [0], [1], [0, 0, 1, 1], [], []>} : vector<8x128xbf16>, vector<128x512xbf16>, vector<8x512xf32> -> vector<8x512xf32>
    %422 = arith.addf %419, %421 : vector<8x512xf32>
    %423 = vector.extract_strided_slice %422 {offsets = [0, 0], sizes = [8, 128], strides = [1, 1]} : vector<8x512xf32> to vector<8x128xf32>
    %424 = arith.negf %423 : vector<8x128xf32>
    %425 = math.exp %424 : vector<8x128xf32>
    %cst_119 = arith.constant 1.000000e+00 : f32
    %426 = vector.broadcast %cst_119 : f32 to vector<8x128xf32>
    %427 = arith.addf %426, %425 : vector<8x128xf32>
    %428 = arith.divf %426, %427 : vector<8x128xf32>
    %429 = vector.extract_strided_slice %422 {offsets = [0, 128], sizes = [8, 128], strides = [1, 1]} : vector<8x512xf32> to vector<8x128xf32>
    %430 = arith.negf %429 : vector<8x128xf32>
    %431 = math.exp %430 : vector<8x128xf32>
    %cst_120 = arith.constant 1.000000e+00 : f32
    %432 = vector.broadcast %cst_120 : f32 to vector<8x128xf32>
    %433 = arith.addf %432, %431 : vector<8x128xf32>
    %434 = arith.divf %432, %433 : vector<8x128xf32>
    %435 = vector.extract_strided_slice %422 {offsets = [0, 256], sizes = [8, 128], strides = [1, 1]} : vector<8x512xf32> to vector<8x128xf32>
    %436 = math.tanh %435 : vector<8x128xf32>
    %437 = vector.extract_strided_slice %422 {offsets = [0, 384], sizes = [8, 128], strides = [1, 1]} : vector<8x512xf32> to vector<8x128xf32>
    %438 = arith.negf %437 : vector<8x128xf32>
    %439 = math.exp %438 : vector<8x128xf32>
    %cst_121 = arith.constant 1.000000e+00 : f32
    %440 = vector.broadcast %cst_121 : f32 to vector<8x128xf32>
    %441 = arith.addf %440, %439 : vector<8x128xf32>
    %442 = arith.divf %440, %441 : vector<8x128xf32>
    %443 = arith.mulf %434, %414 : vector<8x128xf32>
    %444 = arith.mulf %428, %436 : vector<8x128xf32>
    %445 = arith.addf %443, %444 : vector<8x128xf32>
    %446 = math.tanh %445 : vector<8x128xf32>
    %447 = arith.mulf %442, %446 : vector<8x128xf32>
    %c40_122 = arith.constant 40 : index
    %c0_123 = arith.constant 0 : index
    %448 = vector.load %arg11[%c40_122, %c0_123] : memref<64x512xf32, #tpu.memory_space<vmem>>, vector<8x512xf32>
    %c16_124 = arith.constant 16 : index
    %c0_125 = arith.constant 0 : index
    %449 = vector.load %arg11[%c16_124, %c0_125] : memref<64x512xf32, #tpu.memory_space<vmem>>, vector<8x512xf32>
    %450 = arith.select %8, %448, %449 : vector<8x512xi1>, vector<8x512xf32>
    %451 = arith.truncf %447 : vector<8x128xf32> to vector<8x128xbf16>
    %cst_126 = arith.constant dense<0.000000e+00> : vector<8x512xf32>
    %452 = tpu.matmul %451, %290, %cst_126 {dimension_numbers = #tpu.dot_dimension_numbers<[1], [0], [0], [1], [0, 0, 1, 1], [], []>} : vector<8x128xbf16>, vector<128x512xbf16>, vector<8x512xf32> -> vector<8x512xf32>
    %453 = arith.addf %450, %452 : vector<8x512xf32>
    %454 = vector.extract_strided_slice %453 {offsets = [0, 0], sizes = [8, 128], strides = [1, 1]} : vector<8x512xf32> to vector<8x128xf32>
    %455 = arith.negf %454 : vector<8x128xf32>
    %456 = math.exp %455 : vector<8x128xf32>
    %cst_127 = arith.constant 1.000000e+00 : f32
    %457 = vector.broadcast %cst_127 : f32 to vector<8x128xf32>
    %458 = arith.addf %457, %456 : vector<8x128xf32>
    %459 = arith.divf %457, %458 : vector<8x128xf32>
    %460 = vector.extract_strided_slice %453 {offsets = [0, 128], sizes = [8, 128], strides = [1, 1]} : vector<8x512xf32> to vector<8x128xf32>
    %461 = arith.negf %460 : vector<8x128xf32>
    %462 = math.exp %461 : vector<8x128xf32>
    %cst_128 = arith.constant 1.000000e+00 : f32
    %463 = vector.broadcast %cst_128 : f32 to vector<8x128xf32>
    %464 = arith.addf %463, %462 : vector<8x128xf32>
    %465 = arith.divf %463, %464 : vector<8x128xf32>
    %466 = vector.extract_strided_slice %453 {offsets = [0, 256], sizes = [8, 128], strides = [1, 1]} : vector<8x512xf32> to vector<8x128xf32>
    %467 = math.tanh %466 : vector<8x128xf32>
    %468 = vector.extract_strided_slice %453 {offsets = [0, 384], sizes = [8, 128], strides = [1, 1]} : vector<8x512xf32> to vector<8x128xf32>
    %469 = arith.negf %468 : vector<8x128xf32>
    %470 = math.exp %469 : vector<8x128xf32>
    %cst_129 = arith.constant 1.000000e+00 : f32
    %471 = vector.broadcast %cst_129 : f32 to vector<8x128xf32>
    %472 = arith.addf %471, %470 : vector<8x128xf32>
    %473 = arith.divf %471, %472 : vector<8x128xf32>
    %474 = arith.mulf %465, %445 : vector<8x128xf32>
    %475 = arith.mulf %459, %467 : vector<8x128xf32>
    %476 = arith.addf %474, %475 : vector<8x128xf32>
    %477 = math.tanh %476 : vector<8x128xf32>
    %478 = arith.mulf %473, %477 : vector<8x128xf32>
    %c48_130 = arith.constant 48 : index
    %c0_131 = arith.constant 0 : index
    %479 = vector.load %arg11[%c48_130, %c0_131] : memref<64x512xf32, #tpu.memory_space<vmem>>, vector<8x512xf32>
    %c8_132 = arith.constant 8 : index
    %c0_133 = arith.constant 0 : index
    %480 = vector.load %arg11[%c8_132, %c0_133] : memref<64x512xf32, #tpu.memory_space<vmem>>, vector<8x512xf32>
    %481 = arith.select %8, %479, %480 : vector<8x512xi1>, vector<8x512xf32>
    %482 = arith.truncf %478 : vector<8x128xf32> to vector<8x128xbf16>
    %cst_134 = arith.constant dense<0.000000e+00> : vector<8x512xf32>
    %483 = tpu.matmul %482, %290, %cst_134 {dimension_numbers = #tpu.dot_dimension_numbers<[1], [0], [0], [1], [0, 0, 1, 1], [], []>} : vector<8x128xbf16>, vector<128x512xbf16>, vector<8x512xf32> -> vector<8x512xf32>
    %484 = arith.addf %481, %483 : vector<8x512xf32>
    %485 = vector.extract_strided_slice %484 {offsets = [0, 0], sizes = [8, 128], strides = [1, 1]} : vector<8x512xf32> to vector<8x128xf32>
    %486 = arith.negf %485 : vector<8x128xf32>
    %487 = math.exp %486 : vector<8x128xf32>
    %cst_135 = arith.constant 1.000000e+00 : f32
    %488 = vector.broadcast %cst_135 : f32 to vector<8x128xf32>
    %489 = arith.addf %488, %487 : vector<8x128xf32>
    %490 = arith.divf %488, %489 : vector<8x128xf32>
    %491 = vector.extract_strided_slice %484 {offsets = [0, 128], sizes = [8, 128], strides = [1, 1]} : vector<8x512xf32> to vector<8x128xf32>
    %492 = arith.negf %491 : vector<8x128xf32>
    %493 = math.exp %492 : vector<8x128xf32>
    %cst_136 = arith.constant 1.000000e+00 : f32
    %494 = vector.broadcast %cst_136 : f32 to vector<8x128xf32>
    %495 = arith.addf %494, %493 : vector<8x128xf32>
    %496 = arith.divf %494, %495 : vector<8x128xf32>
    %497 = vector.extract_strided_slice %484 {offsets = [0, 256], sizes = [8, 128], strides = [1, 1]} : vector<8x512xf32> to vector<8x128xf32>
    %498 = math.tanh %497 : vector<8x128xf32>
    %499 = vector.extract_strided_slice %484 {offsets = [0, 384], sizes = [8, 128], strides = [1, 1]} : vector<8x512xf32> to vector<8x128xf32>
    %500 = arith.negf %499 : vector<8x128xf32>
    %501 = math.exp %500 : vector<8x128xf32>
    %cst_137 = arith.constant 1.000000e+00 : f32
    %502 = vector.broadcast %cst_137 : f32 to vector<8x128xf32>
    %503 = arith.addf %502, %501 : vector<8x128xf32>
    %504 = arith.divf %502, %503 : vector<8x128xf32>
    %505 = arith.mulf %496, %476 : vector<8x128xf32>
    %506 = arith.mulf %490, %498 : vector<8x128xf32>
    %507 = arith.addf %505, %506 : vector<8x128xf32>
    %508 = math.tanh %507 : vector<8x128xf32>
    %509 = arith.mulf %504, %508 : vector<8x128xf32>
    %c56_138 = arith.constant 56 : index
    %c0_139 = arith.constant 0 : index
    %510 = vector.load %arg11[%c56_138, %c0_139] : memref<64x512xf32, #tpu.memory_space<vmem>>, vector<8x512xf32>
    %c0_140 = arith.constant 0 : index
    %c0_141 = arith.constant 0 : index
    %511 = vector.load %arg11[%c0_140, %c0_141] : memref<64x512xf32, #tpu.memory_space<vmem>>, vector<8x512xf32>
    %512 = arith.select %8, %510, %511 : vector<8x512xi1>, vector<8x512xf32>
    %513 = arith.truncf %509 : vector<8x128xf32> to vector<8x128xbf16>
    %cst_142 = arith.constant dense<0.000000e+00> : vector<8x512xf32>
    %514 = tpu.matmul %513, %290, %cst_142 {dimension_numbers = #tpu.dot_dimension_numbers<[1], [0], [0], [1], [0, 0, 1, 1], [], []>} : vector<8x128xbf16>, vector<128x512xbf16>, vector<8x512xf32> -> vector<8x512xf32>
    %515 = arith.addf %512, %514 : vector<8x512xf32>
    %516 = vector.extract_strided_slice %515 {offsets = [0, 0], sizes = [8, 128], strides = [1, 1]} : vector<8x512xf32> to vector<8x128xf32>
    %517 = arith.negf %516 : vector<8x128xf32>
    %518 = math.exp %517 : vector<8x128xf32>
    %cst_143 = arith.constant 1.000000e+00 : f32
    %519 = vector.broadcast %cst_143 : f32 to vector<8x128xf32>
    %520 = arith.addf %519, %518 : vector<8x128xf32>
    %521 = arith.divf %519, %520 : vector<8x128xf32>
    %522 = vector.extract_strided_slice %515 {offsets = [0, 128], sizes = [8, 128], strides = [1, 1]} : vector<8x512xf32> to vector<8x128xf32>
    %523 = arith.negf %522 : vector<8x128xf32>
    %524 = math.exp %523 : vector<8x128xf32>
    %cst_144 = arith.constant 1.000000e+00 : f32
    %525 = vector.broadcast %cst_144 : f32 to vector<8x128xf32>
    %526 = arith.addf %525, %524 : vector<8x128xf32>
    %527 = arith.divf %525, %526 : vector<8x128xf32>
    %528 = vector.extract_strided_slice %515 {offsets = [0, 256], sizes = [8, 128], strides = [1, 1]} : vector<8x512xf32> to vector<8x128xf32>
    %529 = math.tanh %528 : vector<8x128xf32>
    %530 = vector.extract_strided_slice %515 {offsets = [0, 384], sizes = [8, 128], strides = [1, 1]} : vector<8x512xf32> to vector<8x128xf32>
    %531 = arith.negf %530 : vector<8x128xf32>
    %532 = math.exp %531 : vector<8x128xf32>
    %cst_145 = arith.constant 1.000000e+00 : f32
    %533 = vector.broadcast %cst_145 : f32 to vector<8x128xf32>
    %534 = arith.addf %533, %532 : vector<8x128xf32>
    %535 = arith.divf %533, %534 : vector<8x128xf32>
    %536 = arith.mulf %527, %507 : vector<8x128xf32>
    %537 = arith.mulf %521, %529 : vector<8x128xf32>
    %538 = arith.addf %536, %537 : vector<8x128xf32>
    %539 = math.tanh %538 : vector<8x128xf32>
    %540 = arith.mulf %535, %539 : vector<8x128xf32>
    %541 = arith.addf %269, %540 : vector<8x128xf32>
    %c0_146 = arith.constant 0 : index
    %c0_147 = arith.constant 0 : index
    %542 = vector.load %arg7[%c0_146, %c0_147] : memref<128x2xf32, #tpu.memory_space<vmem>>, vector<128x2xf32>
    %cst_148 = arith.constant dense<0.000000e+00> : vector<8x2xf32>
    %543 = tpu.matmul %541, %542, %cst_148 {dimension_numbers = #tpu.dot_dimension_numbers<[1], [0], [0], [1], [0, 0, 1, 1], [], []>} : vector<8x128xf32>, vector<128x2xf32>, vector<8x2xf32> -> vector<8x2xf32>
    %c0_149 = arith.constant 0 : index
    %c0_150 = arith.constant 0 : index
    %544 = vector.load %arg8[%c0_149, %c0_150] : memref<1x2xf32, #tpu.memory_space<vmem>>, vector<1x2xf32>
    %545 = vector.broadcast %544 : vector<1x2xf32> to vector<8x2xf32>
    %546 = arith.addf %543, %545 : vector<8x2xf32>
    %cst_151 = arith.constant dense<0xFF800000> : vector<8xf32>
    %547 = vector.multi_reduction <maximumf>, %546, %cst_151 [1] : vector<8x2xf32> to vector<8xf32>
    %548 = vector.shape_cast %547 : vector<8xf32> to vector<8x1xf32>
    %549 = vector.broadcast %548 : vector<8x1xf32> to vector<8x2xf32>
    %550 = arith.subf %546, %549 : vector<8x2xf32>
    %551 = math.exp %550 : vector<8x2xf32>
    %cst_152 = arith.constant dense<0.000000e+00> : vector<8xf32>
    %552 = vector.multi_reduction <add>, %551, %cst_152 [1] : vector<8x2xf32> to vector<8xf32>
    %553 = vector.shape_cast %552 : vector<8xf32> to vector<8x1xf32>
    %554 = vector.broadcast %553 : vector<8x1xf32> to vector<8x2xf32>
    %555 = arith.divf %551, %554 : vector<8x2xf32>
    %c0_153 = arith.constant 0 : index
    %c0_154 = arith.constant 0 : index
    %556 = vector.load %arg9[%c0_153, %c0_154] : memref<8x2xf32, #tpu.memory_space<vmem>>, vector<8x2xf32>
    tpu.vector_store %arg9[%c0_153, %c0_154], %555 {strides = array<i32>} : memref<8x2xf32, #tpu.memory_space<vmem>>, vector<8x2xf32>,
    return
  }
}

</mosaic_0001>

<llo_original>
// kernel: _lambda_.1
$region0: #{_lambda_.1}
  #allocation0 [shape = 'u32[]', space=smem, size = 0x4, offset = 0x4, fixed_abs, tag = 'smem constant byte address 0x4 - core index']
  #allocation1 [shape = 'u32[144,128]{1,0:T(1,128)}', space=vmem, size = 0x12000, scoped, tag = 'internal scratch']
  #allocation2 [shape = 'f32[64,512]{1,0:T(8,128)}', space=vmem, size = 0x20000, scoped, tag = 'scratch operand']
  #allocation3 [shape = 'f32[64,512]{1,0:T(8,128)}', space=vmem, size = 0x20000, scoped, tag = 'scratch operand']
  #allocation4 [shape = 'bf16[128,512]{1,0:T(16,128)(2,1)}', space=vmem, size = 0x20000, scoped, tag = 'scratch operand']
  #allocation5 [shape = 'bf16[128,512]{1,0:T(16,128)(2,1)}', space=vmem, size = 0x20000, scoped, tag = 'scratch operand']
  #allocation6 [shape = 's32[2]{0}', space=sflag, size = 0x8, scoped, tag = 'scratch operand']
  #allocation7 [shape = 's32[]', space=sflag, size = 0x4, offset = 0, fixed_abs, tag = 'sflag constant byte address 0x0 - dummy sync flag']
  #allocation8 [shape = 's32[]', space=sflag, size = 0x4, offset = 0, fixed_abs, tag = 'sflag constant byte address 0x0 - dummy sync flag']
  %s0 = inlined_call_operand.vmem [shape: bf16[64,512], index: 0, kind: input, shape index: {}]
  %s1 = inlined_call_operand.vmem [shape: bf16[512,512], index: 1, kind: input, shape index: {}]
  %s2 = inlined_call_operand.vmem [shape: f32[1,512], index: 2, kind: input, shape index: {}]
  %s3 = inlined_call_operand.vmem [shape: bf16[128,512], index: 3, kind: input, shape index: {}]
  %s4 = inlined_call_operand.vmem [shape: bf16[128,512], index: 4, kind: input, shape index: {}]
  %s5 = inlined_call_operand.vmem [shape: f32[1,512], index: 5, kind: input, shape index: {}]
  %s6 = inlined_call_operand.vmem [shape: bf16[128,512], index: 6, kind: input, shape index: {}]
  %s7 = inlined_call_operand.vmem [shape: f32[128,2], index: 7, kind: input, shape index: {}]
  %s8 = inlined_call_operand.vmem [shape: f32[1,2], index: 8, kind: input, shape index: {}]
  %s9 = inlined_call_operand.vmem [shape: f32[8,2], index: 9, kind: output, shape index: {}]
  %s10 = sld [smem:[#allocation0]]
  $region112: #{_lambda_.1} parent=0
    _
  %s12 = ssub.s32 1, %s10
  %s13 = scalar_select 0, %s12, %s10
  // Predicated region
  $region2: #{_lambda_.1} parent=0 // pred_check
    _
  $region3: #{_lambda_.1} parent=0 // pred_check_branch
    %15 = sbr.rel (0) target = $region5
  $region4: #{_lambda_.1} parent=0 // pred_region
    _
  $region5: #{_lambda_.1} parent=0 // pred_fallthru
    _
  // Predicated region
  $region6: #{_lambda_.1} parent=0 // pred_check
    _
  $region7: #{_lambda_.1} parent=0 // pred_check_branch
    %17 = sbr.rel (0) target = $region9
  $region8: #{_lambda_.1} parent=0 // pred_region
    _
  $region9: #{_lambda_.1} parent=0 // pred_fallthru
    _
  // Predicated region
  $region10: #{_lambda_.1} parent=0 // pred_check
    _
  $region11: #{_lambda_.1} parent=0 // pred_check_branch
    %19 = sbr.rel (0) target = $region13
  $region12: #{_lambda_.1} parent=0 // pred_region
    _
  $region13: #{_lambda_.1} parent=0 // pred_fallthru
    _
  // Predicated region
  $region14: #{_lambda_.1} parent=0 // pred_check
    _
  $region15: #{_lambda_.1} parent=0 // pred_check_branch
    %21 = sbr.rel (0) target = $region17
  $region16: #{_lambda_.1} parent=0 // pred_region
    _
  $region17: #{_lambda_.1} parent=0 // pred_fallthru
    _
  // Predicated region
  $region18: #{_lambda_.1} parent=0 // pred_check
    _
  $region19: #{_lambda_.1} parent=0 // pred_check_branch
    %23 = sbr.rel (0) target = $region21
  $region20: #{_lambda_.1} parent=0 // pred_region
    _
  $region21: #{_lambda_.1} parent=0 // pred_fallthru
    _
  // Predicated region
  $region22: #{_lambda_.1} parent=0 // pred_check
    _
  $region23: #{_lambda_.1} parent=0 // pred_check_branch
    %25 = sbr.rel (0) target = $region25
  $region24: #{_lambda_.1} parent=0 // pred_region
    _
  $region25: #{_lambda_.1} parent=0 // pred_fallthru
    _
  // Predicated region
  $region26: #{_lambda_.1} parent=0 // pred_check
    _
  $region27: #{_lambda_.1} parent=0 // pred_check_branch
    %27 = sbr.rel (0) target = $region29
  $region28: #{_lambda_.1} parent=0 // pred_region
    _
  $region29: #{_lambda_.1} parent=0 // pred_fallthru
    _
  %p30 = scmp.lt.u32.totalorder 4, 8
  %p31 = pneg %p30
  // Predicated region
  $region30: #{_lambda_.1} parent=0 // pred_check
    _
  $region31: #{_lambda_.1} parent=0 // pred_check_branch
    %33 = sbr.rel (%p30) target = $region33
  $region32: #{_lambda_.1} parent=0 // pred_region
    %s174 = sand.u32 4, 7
    %p175 = scmp.eq.s32.totalorder %s174, 0
    %p176 = pneg %p175
    // Predicated region
    $region45: #{_lambda_.1} parent=32 // pred_check
      _
    $region46: #{_lambda_.1} parent=32 // pred_check_branch
      %178 = sbr.rel (%p175) target = $region48
    $region47: #{_lambda_.1} parent=32 // pred_region
      %s179 = sand.u32 4, 7
      %s180 = ssub.s32 4, %s179
      %s181 = scalar_lea.vmem %s4, %s180
      %s182 = ssub.s32 4, %s179
      %s183 = scalar_lea.vmem [#allocation4], %s182
      loop: start=0, step=1, limit=1
      $region49: #{_lambda_.1} parent=47 // loop_pre_header
        _
      $region50: #{_lambda_.1} parent=47 // loop_header
        %s185 = sphi 0, %s189
        %p186 = scmp.ge.s32.totalorder %s185, 1
        %s190 = sphi %s4, %s4
        %s191 = sphi [#allocation4], [#allocation4]
      $region51: #{_lambda_.1} parent=47 // loop_header_branch
        %188 = sbr.rel (%p186) target = $region55
      $region52: #{_lambda_.1} parent=47 // loop_body
        _
      $region53: #{_lambda_.1} parent=47 // loop_footer
        %s189 = sadd.s32 1, %s185
      $region54: #{_lambda_.1} parent=47 // loop_footer_branch
        %184 = sbr.rel target = $region50
      $region55: #{_lambda_.1} parent=47 // loop_exit
        _
      %s192 = sshllo.u32 0, %s179
      loop: start=0, step=1, limit=1
      $region56: #{_lambda_.1} parent=47 // loop_pre_header
        _
      $region57: #{_lambda_.1} parent=47 // loop_header
        %s194 = sphi 0, %s198
        %p195 = scmp.ge.s32.totalorder %s194, 1
        %s199 = sphi %s181, %s181
        %s200 = sphi %s183, %s183
      $region58: #{_lambda_.1} parent=47 // loop_header_branch
        %197 = sbr.rel (%p195) target = $region62
      $region59: #{_lambda_.1} parent=47 // loop_body
        %v201 = vld [vmem:[%s199] sm:%s192]
        %202 = vst [vmem:[%s200] sm:%s192] %v201
        %v203 = vld [vmem:[%s199 + $0x10] sm:%s192]
        %204 = vst [vmem:[%s200 + $0x4] sm:%s192] %v203
        %v205 = vld [vmem:[%s199 + $0x4] sm:%s192]
        %206 = vst [vmem:[%s200 + $0x8] sm:%s192] %v205
        %v207 = vld [vmem:[%s199 + $0x14] sm:%s192]
        %208 = vst [vmem:[%s200 + $0xc] sm:%s192] %v207
        %v209 = vld [vmem:[%s199 + $0x8] sm:%s192]
        %210 = vst [vmem:[%s200 + $0x10] sm:%s192] %v209
        %v211 = vld [vmem:[%s199 + $0x18] sm:%s192]
        %212 = vst [vmem:[%s200 + $0x14] sm:%s192] %v211
        %v213 = vld [vmem:[%s199 + $0xc] sm:%s192]
        %214 = vst [vmem:[%s200 + $0x18] sm:%s192] %v213
        %v215 = vld [vmem:[%s199 + $0x1c] sm:%s192]
        %216 = vst [vmem:[%s200 + $0x1c] sm:%s192] %v215
        %v217 = vld [vmem:[%s199 + $0x20] sm:%s192]
        %218 = vst [vmem:[%s200 + $0x20] sm:%s192] %v217
        %v219 = vld [vmem:[%s199 + $0x30] sm:%s192]
        %220 = vst [vmem:[%s200 + $0x24] sm:%s192] %v219
        %v221 = vld [vmem:[%s199 + $0x24] sm:%s192]
        %222 = vst [vmem:[%s200 + $0x28] sm:%s192] %v221
        %v223 = vld [vmem:[%s199 + $0x34] sm:%s192]
        %224 = vst [vmem:[%s200 + $0x2c] sm:%s192] %v223
        %v225 = vld [vmem:[%s199 + $0x28] sm:%s192]
        %226 = vst [vmem:[%s200 + $0x30] sm:%s192] %v225
        %v227 = vld [vmem:[%s199 + $0x38] sm:%s192]
        %228 = vst [vmem:[%s200 + $0x34] sm:%s192] %v227
        %v229 = vld [vmem:[%s199 + $0x2c] sm:%s192]
        %230 = vst [vmem:[%s200 + $0x38] sm:%s192] %v229
        %v231 = vld [vmem:[%s199 + $0x3c] sm:%s192]
        %232 = vst [vmem:[%s200 + $0x3c] sm:%s192] %v231
        %v233 = vld [vmem:[%s199 + $0x40] sm:%s192]
        %234 = vst [vmem:[%s200 + $0x40] sm:%s192] %v233
        %v235 = vld [vmem:[%s199 + $0x50] sm:%s192]
        %236 = vst [vmem:[%s200 + $0x44] sm:%s192] %v235
        %v237 = vld [vmem:[%s199 + $0x44] sm:%s192]
        %238 = vst [vmem:[%s200 + $0x48] sm:%s192] %v237
        %v239 = vld [vmem:[%s199 + $0x54] sm:%s192]
        %240 = vst [vmem:[%s200 + $0x4c] sm:%s192] %v239
        %v241 = vld [vmem:[%s199 + $0x48] sm:%s192]
        %242 = vst [vmem:[%s200 + $0x50] sm:%s192] %v241
        %v243 = vld [vmem:[%s199 + $0x58] sm:%s192]
        %244 = vst [vmem:[%s200 + $0x54] sm:%s192] %v243
        %v245 = vld [vmem:[%s199 + $0x4c] sm:%s192]
        %246 = vst [vmem:[%s200 + $0x58] sm:%s192] %v245
        %v247 = vld [vmem:[%s199 + $0x5c] sm:%s192]
        %248 = vst [vmem:[%s200 + $0x5c] sm:%s192] %v247
        %v249 = vld [vmem:[%s199 + $0x60] sm:%s192]
        %250 = vst [vmem:[%s200 + $0x60] sm:%s192] %v249
        %v251 = vld [vmem:[%s199 + $0x70] sm:%s192]
        %252 = vst [vmem:[%s200 + $0x64] sm:%s192] %v251
        %v253 = vld [vmem:[%s199 + $0x64] sm:%s192]
        %254 = vst [vmem:[%s200 + $0x68] sm:%s192] %v253
        %v255 = vld [vmem:[%s199 + $0x74] sm:%s192]
        %256 = vst [vmem:[%s200 + $0x6c] sm:%s192] %v255
        %v257 = vld [vmem:[%s199 + $0x68] sm:%s192]
        %258 = vst [vmem:[%s200 + $0x70] sm:%s192] %v257
        %v259 = vld [vmem:[%s199 + $0x78] sm:%s192]
        %260 = vst [vmem:[%s200 + $0x74] sm:%s192] %v259
        %v261 = vld [vmem:[%s199 + $0x6c] sm:%s192]
        %262 = vst [vmem:[%s200 + $0x78] sm:%s192] %v261
        %v263 = vld [vmem:[%s199 + $0x7c] sm:%s192]
        %264 = vst [vmem:[%s200 + $0x7c] sm:%s192] %v263
        %v265 = vld [vmem:[%s199 + $0x80] sm:%s192]
        %266 = vst [vmem:[%s200 + $0x80] sm:%s192] %v265
        %v267 = vld [vmem:[%s199 + $0x90] sm:%s192]
        %268 = vst [vmem:[%s200 + $0x84] sm:%s192] %v267
        %v269 = vld [vmem:[%s199 + $0x84] sm:%s192]
        %270 = vst [vmem:[%s200 + $0x88] sm:%s192] %v269
        %v271 = vld [vmem:[%s199 + $0x94] sm:%s192]
        %272 = vst [vmem:[%s200 + $0x8c] sm:%s192] %v271
        %v273 = vld [vmem:[%s199 + $0x88] sm:%s192]
        %274 = vst [vmem:[%s200 + $0x90] sm:%s192] %v273
        %v275 = vld [vmem:[%s199 + $0x98] sm:%s192]
        %276 = vst [vmem:[%s200 + $0x94] sm:%s192] %v275
        %v277 = vld [vmem:[%s199 + $0x8c] sm:%s192]
        %278 = vst [vmem:[%s200 + $0x98] sm:%s192] %v277
        %v279 = vld [vmem:[%s199 + $0x9c] sm:%s192]
        %280 = vst [vmem:[%s200 + $0x9c] sm:%s192] %v279
        %v281 = vld [vmem:[%s199 + $0xa0] sm:%s192]
        %282 = vst [vmem:[%s200 + $0xa0] sm:%s192] %v281
        %v283 = vld [vmem:[%s199 + $0xb0] sm:%s192]
        %284 = vst [vmem:[%s200 + $0xa4] sm:%s192] %v283
        %v285 = vld [vmem:[%s199 + $0xa4] sm:%s192]
        %286 = vst [vmem:[%s200 + $0xa8] sm:%s192] %v285
        %v287 = vld [vmem:[%s199 + $0xb4] sm:%s192]
        %288 = vst [vmem:[%s200 + $0xac] sm:%s192] %v287
        %v289 = vld [vmem:[%s199 + $0xa8] sm:%s192]
        %290 = vst [vmem:[%s200 + $0xb0] sm:%s192] %v289
        %v291 = vld [vmem:[%s199 + $0xb8] sm:%s192]
        %292 = vst [vmem:[%s200 + $0xb4] sm:%s192] %v291
        %v293 = vld [vmem:[%s199 + $0xac] sm:%s192]
        %294 = vst [vmem:[%s200 + $0xb8] sm:%s192] %v293
        %v295 = vld [vmem:[%s199 + $0xbc] sm:%s192]
        %296 = vst [vmem:[%s200 + $0xbc] sm:%s192] %v295
        %v297 = vld [vmem:[%s199 + $0xc0] sm:%s192]
        %298 = vst [vmem:[%s200 + $0xc0] sm:%s192] %v297
        %v299 = vld [vmem:[%s199 + $0xd0] sm:%s192]
        %300 = vst [vmem:[%s200 + $0xc4] sm:%s192] %v299
        %v301 = vld [vmem:[%s199 + $0xc4] sm:%s192]
        %302 = vst [vmem:[%s200 + $0xc8] sm:%s192] %v301
        %v303 = vld [vmem:[%s199 + $0xd4] sm:%s192]
        %304 = vst [vmem:[%s200 + $0xcc] sm:%s192] %v303
        %v305 = vld [vmem:[%s199 + $0xc8] sm:%s192]
        %306 = vst [vmem:[%s200 + $0xd0] sm:%s192] %v305
        %v307 = vld [vmem:[%s199 + $0xd8] sm:%s192]
        %308 = vst [vmem:[%s200 + $0xd4] sm:%s192] %v307
        %v309 = vld [vmem:[%s199 + $0xcc] sm:%s192]
        %310 = vst [vmem:[%s200 + $0xd8] sm:%s192] %v309
        %v311 = vld [vmem:[%s199 + $0xdc] sm:%s192]
        %312 = vst [vmem:[%s200 + $0xdc] sm:%s192] %v311
        %v313 = vld [vmem:[%s199 + $0xe0] sm:%s192]
        %314 = vst [vmem:[%s200 + $0xe0] sm:%s192] %v313
        %v315 = vld [vmem:[%s199 + $0xf0] sm:%s192]
        %316 = vst [vmem:[%s200 + $0xe4] sm:%s192] %v315
        %v317 = vld [vmem:[%s199 + $0xe4] sm:%s192]
        %318 = vst [vmem:[%s200 + $0xe8] sm:%s192] %v317
        %v319 = vld [vmem:[%s199 + $0xf4] sm:%s192]
        %320 = vst [vmem:[%s200 + $0xec] sm:%s192] %v319
        %v321 = vld [vmem:[%s199 + $0xe8] sm:%s192]
        %322 = vst [vmem:[%s200 + $0xf0] sm:%s192] %v321
        %v323 = vld [vmem:[%s199 + $0xf8] sm:%s192]
        %324 = vst [vmem:[%s200 + $0xf4] sm:%s192] %v323
        %v325 = vld [vmem:[%s199 + $0xec] sm:%s192]
        %326 = vst [vmem:[%s200 + $0xf8] sm:%s192] %v325
        %v327 = vld [vmem:[%s199 + $0xfc] sm:%s192]
        %328 = vst [vmem:[%s200 + $0xfc] sm:%s192] %v327
      $region60: #{_lambda_.1} parent=47 // loop_footer
        %s198 = sadd.s32 1, %s194
      $region61: #{_lambda_.1} parent=47 // loop_footer_branch
        %193 = sbr.rel target = $region57
      $region62: #{_lambda_.1} parent=47 // loop_exit
        _
    $region48: #{_lambda_.1} parent=32 // pred_fallthru
      _
  $region33: #{_lambda_.1} parent=0 // pred_fallthru
    _
  // Predicated region
  $region34: #{_lambda_.1} parent=0 // pred_check
    %p34 = pneg %p30
  $region35: #{_lambda_.1} parent=0 // pred_check_branch
    %36 = sbr.rel (%p34) target = $region37
  $region36: #{_lambda_.1} parent=0 // pred_region
    %s37 = sshllo.u32 0, 4
    loop: start=0, step=1, limit=1
    $region38: #{_lambda_.1} parent=36 // loop_pre_header
      _
    $region39: #{_lambda_.1} parent=36 // loop_header
      %s39 = sphi 0, %s43
      %p40 = scmp.ge.s32.totalorder %s39, 1
      %s44 = sphi %s4, %s4
      %s45 = sphi [#allocation4], [#allocation4]
    $region40: #{_lambda_.1} parent=36 // loop_header_branch
      %42 = sbr.rel (%p40) target = $region44
    $region41: #{_lambda_.1} parent=36 // loop_body
      %v46 = vld [vmem:[%s44] sm:%s37]
      %47 = vst [vmem:[%s45] sm:%s37] %v46
      %v48 = vld [vmem:[%s44 + $0x10] sm:%s37]
      %49 = vst [vmem:[%s45 + $0x4] sm:%s37] %v48
      %v50 = vld [vmem:[%s44 + $0x4] sm:%s37]
      %51 = vst [vmem:[%s45 + $0x8] sm:%s37] %v50
      %v52 = vld [vmem:[%s44 + $0x14] sm:%s37]
      %53 = vst [vmem:[%s45 + $0xc] sm:%s37] %v52
      %v54 = vld [vmem:[%s44 + $0x8] sm:%s37]
      %55 = vst [vmem:[%s45 + $0x10] sm:%s37] %v54
      %v56 = vld [vmem:[%s44 + $0x18] sm:%s37]
      %57 = vst [vmem:[%s45 + $0x14] sm:%s37] %v56
      %v58 = vld [vmem:[%s44 + $0xc] sm:%s37]
      %59 = vst [vmem:[%s45 + $0x18] sm:%s37] %v58
      %v60 = vld [vmem:[%s44 + $0x1c] sm:%s37]
      %61 = vst [vmem:[%s45 + $0x1c] sm:%s37] %v60
      %v62 = vld [vmem:[%s44 + $0x20] sm:%s37]
      %63 = vst [vmem:[%s45 + $0x20] sm:%s37] %v62
      %v64 = vld [vmem:[%s44 + $0x30] sm:%s37]
      %65 = vst [vmem:[%s45 + $0x24] sm:%s37] %v64
      %v66 = vld [vmem:[%s44 + $0x24] sm:%s37]
      %67 = vst [vmem:[%s45 + $0x28] sm:%s37] %v66
      %v68 = vld [vmem:[%s44 + $0x34] sm:%s37]
      %69 = vst [vmem:[%s45 + $0x2c] sm:%s37] %v68
      %v70 = vld [vmem:[%s44 + $0x28] sm:%s37]
      %71 = vst [vmem:[%s45 + $0x30] sm:%s37] %v70
      %v72 = vld [vmem:[%s44 + $0x38] sm:%s37]
      %73 = vst [vmem:[%s45 + $0x34] sm:%s37] %v72
      %v74 = vld [vmem:[%s44 + $0x2c] sm:%s37]
      %75 = vst [vmem:[%s45 + $0x38] sm:%s37] %v74
      %v76 = vld [vmem:[%s44 + $0x3c] sm:%s37]
      %77 = vst [vmem:[%s45 + $0x3c] sm:%s37] %v76
      %v78 = vld [vmem:[%s44 + $0x40] sm:%s37]
      %79 = vst [vmem:[%s45 + $0x40] sm:%s37] %v78
      %v80 = vld [vmem:[%s44 + $0x50] sm:%s37]
      %81 = vst [vmem:[%s45 + $0x44] sm:%s37] %v80
      %v82 = vld [vmem:[%s44 + $0x44] sm:%s37]
      %83 = vst [vmem:[%s45 + $0x48] sm:%s37] %v82
      %v84 = vld [vmem:[%s44 + $0x54] sm:%s37]
      %85 = vst [vmem:[%s45 + $0x4c] sm:%s37] %v84
      %v86 = vld [vmem:[%s44 + $0x48] sm:%s37]
      %87 = vst [vmem:[%s45 + $0x50] sm:%s37] %v86
      %v88 = vld [vmem:[%s44 + $0x58] sm:%s37]
      %89 = vst [vmem:[%s45 + $0x54] sm:%s37] %v88
      %v90 = vld [vmem:[%s44 + $0x4c] sm:%s37]
      %91 = vst [vmem:[%s45 + $0x58] sm:%s37] %v90
      %v92 = vld [vmem:[%s44 + $0x5c] sm:%s37]
      %93 = vst [vmem:[%s45 + $0x5c] sm:%s37] %v92
      %v94 = vld [vmem:[%s44 + $0x60] sm:%s37]
      %95 = vst [vmem:[%s45 + $0x60] sm:%s37] %v94
      %v96 = vld [vmem:[%s44 + $0x70] sm:%s37]
      %97 = vst [vmem:[%s45 + $0x64] sm:%s37] %v96
      %v98 = vld [vmem:[%s44 + $0x64] sm:%s37]
      %99 = vst [vmem:[%s45 + $0x68] sm:%s37] %v98
      %v100 = vld [vmem:[%s44 + $0x74] sm:%s37]
      %101 = vst [vmem:[%s45 + $0x6c] sm:%s37] %v100
      %v102 = vld [vmem:[%s44 + $0x68] sm:%s37]
      %103 = vst [vmem:[%s45 + $0x70] sm:%s37] %v102
      %v104 = vld [vmem:[%s44 + $0x78] sm:%s37]
      %105 = vst [vmem:[%s45 + $0x74] sm:%s37] %v104
      %v106 = vld [vmem:[%s44 + $0x6c] sm:%s37]
      %107 = vst [vmem:[%s45 + $0x78] sm:%s37] %v106
      %v108 = vld [vmem:[%s44 + $0x7c] sm:%s37]
      %109 = vst [vmem:[%s45 + $0x7c] sm:%s37] %v108
      %v110 = vld [vmem:[%s44 + $0x80] sm:%s37]
      %111 = vst [vmem:[%s45 + $0x80] sm:%s37] %v110
      %v112 = vld [vmem:[%s44 + $0x90] sm:%s37]
      %113 = vst [vmem:[%s45 + $0x84] sm:%s37] %v112
      %v114 = vld [vmem:[%s44 + $0x84] sm:%s37]
      %115 = vst [vmem:[%s45 + $0x88] sm:%s37] %v114
      %v116 = vld [vmem:[%s44 + $0x94] sm:%s37]
      %117 = vst [vmem:[%s45 + $0x8c] sm:%s37] %v116
      %v118 = vld [vmem:[%s44 + $0x88] sm:%s37]
      %119 = vst [vmem:[%s45 + $0x90] sm:%s37] %v118
      %v120 = vld [vmem:[%s44 + $0x98] sm:%s37]
      %121 = vst [vmem:[%s45 + $0x94] sm:%s37] %v120
      %v122 = vld [vmem:[%s44 + $0x8c] sm:%s37]
      %123 = vst [vmem:[%s45 + $0x98] sm:%s37] %v122
      %v124 = vld [vmem:[%s44 + $0x9c] sm:%s37]
      %125 = vst [vmem:[%s45 + $0x9c] sm:%s37] %v124
      %v126 = vld [vmem:[%s44 + $0xa0] sm:%s37]
      %127 = vst [vmem:[%s45 + $0xa0] sm:%s37] %v126
      %v128 = vld [vmem:[%s44 + $0xb0] sm:%s37]
      %129 = vst [vmem:[%s45 + $0xa4] sm:%s37] %v128
      %v130 = vld [vmem:[%s44 + $0xa4] sm:%s37]
      %131 = vst [vmem:[%s45 + $0xa8] sm:%s37] %v130
      %v132 = vld [vmem:[%s44 + $0xb4] sm:%s37]
      %133 = vst [vmem:[%s45 + $0xac] sm:%s37] %v132
      %v134 = vld [vmem:[%s44 + $0xa8] sm:%s37]
      %135 = vst [vmem:[%s45 + $0xb0] sm:%s37] %v134
      %v136 = vld [vmem:[%s44 + $0xb8] sm:%s37]
      %137 = vst [vmem:[%s45 + $0xb4] sm:%s37] %v136
      %v138 = vld [vmem:[%s44 + $0xac] sm:%s37]
      %139 = vst [vmem:[%s45 + $0xb8] sm:%s37] %v138
      %v140 = vld [vmem:[%s44 + $0xbc] sm:%s37]
      %141 = vst [vmem:[%s45 + $0xbc] sm:%s37] %v140
      %v142 = vld [vmem:[%s44 + $0xc0] sm:%s37]
      %143 = vst [vmem:[%s45 + $0xc0] sm:%s37] %v142
      %v144 = vld [vmem:[%s44 + $0xd0] sm:%s37]
      %145 = vst [vmem:[%s45 + $0xc4] sm:%s37] %v144
      %v146 = vld [vmem:[%s44 + $0xc4] sm:%s37]
      %147 = vst [vmem:[%s45 + $0xc8] sm:%s37] %v146
      %v148 = vld [vmem:[%s44 + $0xd4] sm:%s37]
      %149 = vst [vmem:[%s45 + $0xcc] sm:%s37] %v148
      %v150 = vld [vmem:[%s44 + $0xc8] sm:%s37]
      %151 = vst [vmem:[%s45 + $0xd0] sm:%s37] %v150
      %v152 = vld [vmem:[%s44 + $0xd8] sm:%s37]
      %153 = vst [vmem:[%s45 + $0xd4] sm:%s37] %v152
      %v154 = vld [vmem:[%s44 + $0xcc] sm:%s37]
      %155 = vst [vmem:[%s45 + $0xd8] sm:%s37] %v154
      %v156 = vld [vmem:[%s44 + $0xdc] sm:%s37]
      %157 = vst [vmem:[%s45 + $0xdc] sm:%s37] %v156
      %v158 = vld [vmem:[%s44 + $0xe0] sm:%s37]
      %159 = vst [vmem:[%s45 + $0xe0] sm:%s37] %v158
      %v160 = vld [vmem:[%s44 + $0xf0] sm:%s37]
      %161 = vst [vmem:[%s45 + $0xe4] sm:%s37] %v160
      %v162 = vld [vmem:[%s44 + $0xe4] sm:%s37]
      %163 = vst [vmem:[%s45 + $0xe8] sm:%s37] %v162
      %v164 = vld [vmem:[%s44 + $0xf4] sm:%s37]
      %165 = vst [vmem:[%s45 + $0xec] sm:%s37] %v164
      %v166 = vld [vmem:[%s44 + $0xe8] sm:%s37]
      %167 = vst [vmem:[%s45 + $0xf0] sm:%s37] %v166
      %v168 = vld [vmem:[%s44 + $0xf8] sm:%s37]
      %169 = vst [vmem:[%s45 + $0xf4] sm:%s37] %v168
      %v170 = vld [vmem:[%s44 + $0xec] sm:%s37]
      %171 = vst [vmem:[%s45 + $0xf8] sm:%s37] %v170
      %v172 = vld [vmem:[%s44 + $0xfc] sm:%s37]
      %173 = vst [vmem:[%s45 + $0xfc] sm:%s37] %v172
    $region42: #{_lambda_.1} parent=36 // loop_footer
      %s43 = sadd.s32 1, %s39
    $region43: #{_lambda_.1} parent=36 // loop_footer_branch
      %38 = sbr.rel target = $region39
    $region44: #{_lambda_.1} parent=36 // loop_exit
      _
  $region37: #{_lambda_.1} parent=0 // pred_fallthru
    _
  // Predicated region
  $region63: #{_lambda_.1} parent=0 // pred_check
    _
  $region64: #{_lambda_.1} parent=0 // pred_check_branch
    %331 = sbr.rel (0) target = $region66
  $region65: #{_lambda_.1} parent=0 // pred_region
    %332 = vsyncadd [#allocation6], 4096
  $region66: #{_lambda_.1} parent=0 // pred_fallthru
    _
  %s333 = scalar_lea.sflag [#allocation6], 1
  %p335 = scmp.lt.u32.totalorder 4, 8
  %p336 = pneg %p335
  // Predicated region
  $region67: #{_lambda_.1} parent=0 // pred_check
    _
  $region68: #{_lambda_.1} parent=0 // pred_check_branch
    %338 = sbr.rel (%p335) target = $region70
  $region69: #{_lambda_.1} parent=0 // pred_region
    %s479 = sand.u32 4, 7
    %p480 = scmp.eq.s32.totalorder %s479, 0
    %p481 = pneg %p480
    // Predicated region
    $region82: #{_lambda_.1} parent=69 // pred_check
      _
    $region83: #{_lambda_.1} parent=69 // pred_check_branch
      %483 = sbr.rel (%p480) target = $region85
    $region84: #{_lambda_.1} parent=69 // pred_region
      %s484 = sand.u32 4, 7
      %s485 = ssub.s32 4, %s484
      %s486 = scalar_lea.vmem %s6, %s485
      %s487 = ssub.s32 4, %s484
      %s488 = scalar_lea.vmem [#allocation5], %s487
      loop: start=0, step=1, limit=1
      $region86: #{_lambda_.1} parent=84 // loop_pre_header
        _
      $region87: #{_lambda_.1} parent=84 // loop_header
        %s490 = sphi 0, %s494
        %p491 = scmp.ge.s32.totalorder %s490, 1
        %s495 = sphi %s6, %s6
        %s496 = sphi [#allocation5], [#allocation5]
      $region88: #{_lambda_.1} parent=84 // loop_header_branch
        %493 = sbr.rel (%p491) target = $region92
      $region89: #{_lambda_.1} parent=84 // loop_body
        _
      $region90: #{_lambda_.1} parent=84 // loop_footer
        %s494 = sadd.s32 1, %s490
      $region91: #{_lambda_.1} parent=84 // loop_footer_branch
        %489 = sbr.rel target = $region87
      $region92: #{_lambda_.1} parent=84 // loop_exit
        _
      %s497 = sshllo.u32 0, %s484
      loop: start=0, step=1, limit=1
      $region93: #{_lambda_.1} parent=84 // loop_pre_header
        _
      $region94: #{_lambda_.1} parent=84 // loop_header
        %s499 = sphi 0, %s503
        %p500 = scmp.ge.s32.totalorder %s499, 1
        %s504 = sphi %s486, %s486
        %s505 = sphi %s488, %s488
      $region95: #{_lambda_.1} parent=84 // loop_header_branch
        %502 = sbr.rel (%p500) target = $region99
      $region96: #{_lambda_.1} parent=84 // loop_body
        %v506 = vld [vmem:[%s504] sm:%s497]
        %507 = vst [vmem:[%s505] sm:%s497] %v506
        %v508 = vld [vmem:[%s504 + $0x10] sm:%s497]
        %509 = vst [vmem:[%s505 + $0x4] sm:%s497] %v508
        %v510 = vld [vmem:[%s504 + $0x4] sm:%s497]
        %511 = vst [vmem:[%s505 + $0x8] sm:%s497] %v510
        %v512 = vld [vmem:[%s504 + $0x14] sm:%s497]
        %513 = vst [vmem:[%s505 + $0xc] sm:%s497] %v512
        %v514 = vld [vmem:[%s504 + $0x8] sm:%s497]
        %515 = vst [vmem:[%s505 + $0x10] sm:%s497] %v514
        %v516 = vld [vmem:[%s504 + $0x18] sm:%s497]
        %517 = vst [vmem:[%s505 + $0x14] sm:%s497] %v516
        %v518 = vld [vmem:[%s504 + $0xc] sm:%s497]
        %519 = vst [vmem:[%s505 + $0x18] sm:%s497] %v518
        %v520 = vld [vmem:[%s504 + $0x1c] sm:%s497]
        %521 = vst [vmem:[%s505 + $0x1c] sm:%s497] %v520
        %v522 = vld [vmem:[%s504 + $0x20] sm:%s497]
        %523 = vst [vmem:[%s505 + $0x20] sm:%s497] %v522
        %v524 = vld [vmem:[%s504 + $0x30] sm:%s497]
        %525 = vst [vmem:[%s505 + $0x24] sm:%s497] %v524
        %v526 = vld [vmem:[%s504 + $0x24] sm:%s497]
        %527 = vst [vmem:[%s505 + $0x28] sm:%s497] %v526
        %v528 = vld [vmem:[%s504 + $0x34] sm:%s497]
        %529 = vst [vmem:[%s505 + $0x2c] sm:%s497] %v528
        %v530 = vld [vmem:[%s504 + $0x28] sm:%s497]
        %531 = vst [vmem:[%s505 + $0x30] sm:%s497] %v530
        %v532 = vld [vmem:[%s504 + $0x38] sm:%s497]
        %533 = vst [vmem:[%s505 + $0x34] sm:%s497] %v532
        %v534 = vld [vmem:[%s504 + $0x2c] sm:%s497]
        %535 = vst [vmem:[%s505 + $0x38] sm:%s497] %v534
        %v536 = vld [vmem:[%s504 + $0x3c] sm:%s497]
        %537 = vst [vmem:[%s505 + $0x3c] sm:%s497] %v536
        %v538 = vld [vmem:[%s504 + $0x40] sm:%s497]
        %539 = vst [vmem:[%s505 + $0x40] sm:%s497] %v538
        %v540 = vld [vmem:[%s504 + $0x50] sm:%s497]
        %541 = vst [vmem:[%s505 + $0x44] sm:%s497] %v540
        %v542 = vld [vmem:[%s504 + $0x44] sm:%s497]
        %543 = vst [vmem:[%s505 + $0x48] sm:%s497] %v542
        %v544 = vld [vmem:[%s504 + $0x54] sm:%s497]
        %545 = vst [vmem:[%s505 + $0x4c] sm:%s497] %v544
        %v546 = vld [vmem:[%s504 + $0x48] sm:%s497]
        %547 = vst [vmem:[%s505 + $0x50] sm:%s497] %v546
        %v548 = vld [vmem:[%s504 + $0x58] sm:%s497]
        %549 = vst [vmem:[%s505 + $0x54] sm:%s497] %v548
        %v550 = vld [vmem:[%s504 + $0x4c] sm:%s497]
        %551 = vst [vmem:[%s505 + $0x58] sm:%s497] %v550
        %v552 = vld [vmem:[%s504 + $0x5c] sm:%s497]
        %553 = vst [vmem:[%s505 + $0x5c] sm:%s497] %v552
        %v554 = vld [vmem:[%s504 + $0x60] sm:%s497]
        %555 = vst [vmem:[%s505 + $0x60] sm:%s497] %v554
        %v556 = vld [vmem:[%s504 + $0x70] sm:%s497]
        %557 = vst [vmem:[%s505 + $0x64] sm:%s497] %v556
        %v558 = vld [vmem:[%s504 + $0x64] sm:%s497]
        %559 = vst [vmem:[%s505 + $0x68] sm:%s497] %v558
        %v560 = vld [vmem:[%s504 + $0x74] sm:%s497]
        %561 = vst [vmem:[%s505 + $0x6c] sm:%s497] %v560
        %v562 = vld [vmem:[%s504 + $0x68] sm:%s497]
        %563 = vst [vmem:[%s505 + $0x70] sm:%s497] %v562
        %v564 = vld [vmem:[%s504 + $0x78] sm:%s497]
        %565 = vst [vmem:[%s505 + $0x74] sm:%s497] %v564
        %v566 = vld [vmem:[%s504 + $0x6c] sm:%s497]
        %567 = vst [vmem:[%s505 + $0x78] sm:%s497] %v566
        %v568 = vld [vmem:[%s504 + $0x7c] sm:%s497]
        %569 = vst [vmem:[%s505 + $0x7c] sm:%s497] %v568
        %v570 = vld [vmem:[%s504 + $0x80] sm:%s497]
        %571 = vst [vmem:[%s505 + $0x80] sm:%s497] %v570
        %v572 = vld [vmem:[%s504 + $0x90] sm:%s497]
        %573 = vst [vmem:[%s505 + $0x84] sm:%s497] %v572
        %v574 = vld [vmem:[%s504 + $0x84] sm:%s497]
        %575 = vst [vmem:[%s505 + $0x88] sm:%s497] %v574
        %v576 = vld [vmem:[%s504 + $0x94] sm:%s497]
        %577 = vst [vmem:[%s505 + $0x8c] sm:%s497] %v576
        %v578 = vld [vmem:[%s504 + $0x88] sm:%s497]
        %579 = vst [vmem:[%s505 + $0x90] sm:%s497] %v578
        %v580 = vld [vmem:[%s504 + $0x98] sm:%s497]
        %581 = vst [vmem:[%s505 + $0x94] sm:%s497] %v580
        %v582 = vld [vmem:[%s504 + $0x8c] sm:%s497]
        %583 = vst [vmem:[%s505 + $0x98] sm:%s497] %v582
        %v584 = vld [vmem:[%s504 + $0x9c] sm:%s497]
        %585 = vst [vmem:[%s505 + $0x9c] sm:%s497] %v584
        %v586 = vld [vmem:[%s504 + $0xa0] sm:%s497]
        %587 = vst [vmem:[%s505 + $0xa0] sm:%s497] %v586
        %v588 = vld [vmem:[%s504 + $0xb0] sm:%s497]
        %589 = vst [vmem:[%s505 + $0xa4] sm:%s497] %v588
        %v590 = vld [vmem:[%s504 + $0xa4] sm:%s497]
        %591 = vst [vmem:[%s505 + $0xa8] sm:%s497] %v590
        %v592 = vld [vmem:[%s504 + $0xb4] sm:%s497]
        %593 = vst [vmem:[%s505 + $0xac] sm:%s497] %v592
        %v594 = vld [vmem:[%s504 + $0xa8] sm:%s497]
        %595 = vst [vmem:[%s505 + $0xb0] sm:%s497] %v594
        %v596 = vld [vmem:[%s504 + $0xb8] sm:%s497]
        %597 = vst [vmem:[%s505 + $0xb4] sm:%s497] %v596
        %v598 = vld [vmem:[%s504 + $0xac] sm:%s497]
        %599 = vst [vmem:[%s505 + $0xb8] sm:%s497] %v598
        %v600 = vld [vmem:[%s504 + $0xbc] sm:%s497]
        %601 = vst [vmem:[%s505 + $0xbc] sm:%s497] %v600
        %v602 = vld [vmem:[%s504 + $0xc0] sm:%s497]
        %603 = vst [vmem:[%s505 + $0xc0] sm:%s497] %v602
        %v604 = vld [vmem:[%s504 + $0xd0] sm:%s497]
        %605 = vst [vmem:[%s505 + $0xc4] sm:%s497] %v604
        %v606 = vld [vmem:[%s504 + $0xc4] sm:%s497]
        %607 = vst [vmem:[%s505 + $0xc8] sm:%s497] %v606
        %v608 = vld [vmem:[%s504 + $0xd4] sm:%s497]
        %609 = vst [vmem:[%s505 + $0xcc] sm:%s497] %v608
        %v610 = vld [vmem:[%s504 + $0xc8] sm:%s497]
        %611 = vst [vmem:[%s505 + $0xd0] sm:%s497] %v610
        %v612 = vld [vmem:[%s504 + $0xd8] sm:%s497]
        %613 = vst [vmem:[%s505 + $0xd4] sm:%s497] %v612
        %v614 = vld [vmem:[%s504 + $0xcc] sm:%s497]
        %615 = vst [vmem:[%s505 + $0xd8] sm:%s497] %v614
        %v616 = vld [vmem:[%s504 + $0xdc] sm:%s497]
        %617 = vst [vmem:[%s505 + $0xdc] sm:%s497] %v616
        %v618 = vld [vmem:[%s504 + $0xe0] sm:%s497]
        %619 = vst [vmem:[%s505 + $0xe0] sm:%s497] %v618
        %v620 = vld [vmem:[%s504 + $0xf0] sm:%s497]
        %621 = vst [vmem:[%s505 + $0xe4] sm:%s497] %v620
        %v622 = vld [vmem:[%s504 + $0xe4] sm:%s497]
        %623 = vst [vmem:[%s505 + $0xe8] sm:%s497] %v622
        %v624 = vld [vmem:[%s504 + $0xf4] sm:%s497]
        %625 = vst [vmem:[%s505 + $0xec] sm:%s497] %v624
        %v626 = vld [vmem:[%s504 + $0xe8] sm:%s497]
        %627 = vst [vmem:[%s505 + $0xf0] sm:%s497] %v626
        %v628 = vld [vmem:[%s504 + $0xf8] sm:%s497]
        %629 = vst [vmem:[%s505 + $0xf4] sm:%s497] %v628
        %v630 = vld [vmem:[%s504 + $0xec] sm:%s497]
        %631 = vst [vmem:[%s505 + $0xf8] sm:%s497] %v630
        %v632 = vld [vmem:[%s504 + $0xfc] sm:%s497]
        %633 = vst [vmem:[%s505 + $0xfc] sm:%s497] %v632
      $region97: #{_lambda_.1} parent=84 // loop_footer
        %s503 = sadd.s32 1, %s499
      $region98: #{_lambda_.1} parent=84 // loop_footer_branch
        %498 = sbr.rel target = $region94
      $region99: #{_lambda_.1} parent=84 // loop_exit
        _
    $region85: #{_lambda_.1} parent=69 // pred_fallthru
      _
  $region70: #{_lambda_.1} parent=0 // pred_fallthru
    _
  // Predicated region
  $region71: #{_lambda_.1} parent=0 // pred_check
    %p339 = pneg %p335
  $region72: #{_lambda_.1} parent=0 // pred_check_branch
    %341 = sbr.rel (%p339) target = $region74
  $region73: #{_lambda_.1} parent=0 // pred_region
    %s342 = sshllo.u32 0, 4
    loop: start=0, step=1, limit=1
    $region75: #{_lambda_.1} parent=73 // loop_pre_header
      _
    $region76: #{_lambda_.1} parent=73 // loop_header
      %s344 = sphi 0, %s348
      %p345 = scmp.ge.s32.totalorder %s344, 1
      %s349 = sphi %s6, %s6
      %s350 = sphi [#allocation5], [#allocation5]
    $region77: #{_lambda_.1} parent=73 // loop_header_branch
      %347 = sbr.rel (%p345) target = $region81
    $region78: #{_lambda_.1} parent=73 // loop_body
      %v351 = vld [vmem:[%s349] sm:%s342]
      %352 = vst [vmem:[%s350] sm:%s342] %v351
      %v353 = vld [vmem:[%s349 + $0x10] sm:%s342]
      %354 = vst [vmem:[%s350 + $0x4] sm:%s342] %v353
      %v355 = vld [vmem:[%s349 + $0x4] sm:%s342]
      %356 = vst [vmem:[%s350 + $0x8] sm:%s342] %v355
      %v357 = vld [vmem:[%s349 + $0x14] sm:%s342]
      %358 = vst [vmem:[%s350 + $0xc] sm:%s342] %v357
      %v359 = vld [vmem:[%s349 + $0x8] sm:%s342]
      %360 = vst [vmem:[%s350 + $0x10] sm:%s342] %v359
      %v361 = vld [vmem:[%s349 + $0x18] sm:%s342]
      %362 = vst [vmem:[%s350 + $0x14] sm:%s342] %v361
      %v363 = vld [vmem:[%s349 + $0xc] sm:%s342]
      %364 = vst [vmem:[%s350 + $0x18] sm:%s342] %v363
      %v365 = vld [vmem:[%s349 + $0x1c] sm:%s342]
      %366 = vst [vmem:[%s350 + $0x1c] sm:%s342] %v365
      %v367 = vld [vmem:[%s349 + $0x20] sm:%s342]
      %368 = vst [vmem:[%s350 + $0x20] sm:%s342] %v367
      %v369 = vld [vmem:[%s349 + $0x30] sm:%s342]
      %370 = vst [vmem:[%s350 + $0x24] sm:%s342] %v369
      %v371 = vld [vmem:[%s349 + $0x24] sm:%s342]
      %372 = vst [vmem:[%s350 + $0x28] sm:%s342] %v371
      %v373 = vld [vmem:[%s349 + $0x34] sm:%s342]
      %374 = vst [vmem:[%s350 + $0x2c] sm:%s342] %v373
      %v375 = vld [vmem:[%s349 + $0x28] sm:%s342]
      %376 = vst [vmem:[%s350 + $0x30] sm:%s342] %v375
      %v377 = vld [vmem:[%s349 + $0x38] sm:%s342]
      %378 = vst [vmem:[%s350 + $0x34] sm:%s342] %v377
      %v379 = vld [vmem:[%s349 + $0x2c] sm:%s342]
      %380 = vst [vmem:[%s350 + $0x38] sm:%s342] %v379
      %v381 = vld [vmem:[%s349 + $0x3c] sm:%s342]
      %382 = vst [vmem:[%s350 + $0x3c] sm:%s342] %v381
      %v383 = vld [vmem:[%s349 + $0x40] sm:%s342]
      %384 = vst [vmem:[%s350 + $0x40] sm:%s342] %v383
      %v385 = vld [vmem:[%s349 + $0x50] sm:%s342]
      %386 = vst [vmem:[%s350 + $0x44] sm:%s342] %v385
      %v387 = vld [vmem:[%s349 + $0x44] sm:%s342]
      %388 = vst [vmem:[%s350 + $0x48] sm:%s342] %v387
      %v389 = vld [vmem:[%s349 + $0x54] sm:%s342]
      %390 = vst [vmem:[%s350 + $0x4c] sm:%s342] %v389
      %v391 = vld [vmem:[%s349 + $0x48] sm:%s342]
      %392 = vst [vmem:[%s350 + $0x50] sm:%s342] %v391
      %v393 = vld [vmem:[%s349 + $0x58] sm:%s342]
      %394 = vst [vmem:[%s350 + $0x54] sm:%s342] %v393
      %v395 = vld [vmem:[%s349 + $0x4c] sm:%s342]
      %396 = vst [vmem:[%s350 + $0x58] sm:%s342] %v395
      %v397 = vld [vmem:[%s349 + $0x5c] sm:%s342]
      %398 = vst [vmem:[%s350 + $0x5c] sm:%s342] %v397
      %v399 = vld [vmem:[%s349 + $0x60] sm:%s342]
      %400 = vst [vmem:[%s350 + $0x60] sm:%s342] %v399
      %v401 = vld [vmem:[%s349 + $0x70] sm:%s342]
      %402 = vst [vmem:[%s350 + $0x64] sm:%s342] %v401
      %v403 = vld [vmem:[%s349 + $0x64] sm:%s342]
      %404 = vst [vmem:[%s350 + $0x68] sm:%s342] %v403
      %v405 = vld [vmem:[%s349 + $0x74] sm:%s342]
      %406 = vst [vmem:[%s350 + $0x6c] sm:%s342] %v405
      %v407 = vld [vmem:[%s349 + $0x68] sm:%s342]
      %408 = vst [vmem:[%s350 + $0x70] sm:%s342] %v407
      %v409 = vld [vmem:[%s349 + $0x78] sm:%s342]
      %410 = vst [vmem:[%s350 + $0x74] sm:%s342] %v409
      %v411 = vld [vmem:[%s349 + $0x6c] sm:%s342]
      %412 = vst [vmem:[%s350 + $0x78] sm:%s342] %v411
      %v413 = vld [vmem:[%s349 + $0x7c] sm:%s342]
      %414 = vst [vmem:[%s350 + $0x7c] sm:%s342] %v413
      %v415 = vld [vmem:[%s349 + $0x80] sm:%s342]
      %416 = vst [vmem:[%s350 + $0x80] sm:%s342] %v415
      %v417 = vld [vmem:[%s349 + $0x90] sm:%s342]
      %418 = vst [vmem:[%s350 + $0x84] sm:%s342] %v417
      %v419 = vld [vmem:[%s349 + $0x84] sm:%s342]
      %420 = vst [vmem:[%s350 + $0x88] sm:%s342] %v419
      %v421 = vld [vmem:[%s349 + $0x94] sm:%s342]
      %422 = vst [vmem:[%s350 + $0x8c] sm:%s342] %v421
      %v423 = vld [vmem:[%s349 + $0x88] sm:%s342]
      %424 = vst [vmem:[%s350 + $0x90] sm:%s342] %v423
      %v425 = vld [vmem:[%s349 + $0x98] sm:%s342]
      %426 = vst [vmem:[%s350 + $0x94] sm:%s342] %v425
      %v427 = vld [vmem:[%s349 + $0x8c] sm:%s342]
      %428 = vst [vmem:[%s350 + $0x98] sm:%s342] %v427
      %v429 = vld [vmem:[%s349 + $0x9c] sm:%s342]
      %430 = vst [vmem:[%s350 + $0x9c] sm:%s342] %v429
      %v431 = vld [vmem:[%s349 + $0xa0] sm:%s342]
      %432 = vst [vmem:[%s350 + $0xa0] sm:%s342] %v431
      %v433 = vld [vmem:[%s349 + $0xb0] sm:%s342]
      %434 = vst [vmem:[%s350 + $0xa4] sm:%s342] %v433
      %v435 = vld [vmem:[%s349 + $0xa4] sm:%s342]
      %436 = vst [vmem:[%s350 + $0xa8] sm:%s342] %v435
      %v437 = vld [vmem:[%s349 + $0xb4] sm:%s342]
      %438 = vst [vmem:[%s350 + $0xac] sm:%s342] %v437
      %v439 = vld [vmem:[%s349 + $0xa8] sm:%s342]
      %440 = vst [vmem:[%s350 + $0xb0] sm:%s342] %v439
      %v441 = vld [vmem:[%s349 + $0xb8] sm:%s342]
      %442 = vst [vmem:[%s350 + $0xb4] sm:%s342] %v441
      %v443 = vld [vmem:[%s349 + $0xac] sm:%s342]
      %444 = vst [vmem:[%s350 + $0xb8] sm:%s342] %v443
      %v445 = vld [vmem:[%s349 + $0xbc] sm:%s342]
      %446 = vst [vmem:[%s350 + $0xbc] sm:%s342] %v445
      %v447 = vld [vmem:[%s349 + $0xc0] sm:%s342]
      %448 = vst [vmem:[%s350 + $0xc0] sm:%s342] %v447
      %v449 = vld [vmem:[%s349 + $0xd0] sm:%s342]
      %450 = vst [vmem:[%s350 + $0xc4] sm:%s342] %v449
      %v451 = vld [vmem:[%s349 + $0xc4] sm:%s342]
      %452 = vst [vmem:[%s350 + $0xc8] sm:%s342] %v451
      %v453 = vld [vmem:[%s349 + $0xd4] sm:%s342]
      %454 = vst [vmem:[%s350 + $0xcc] sm:%s342] %v453
      %v455 = vld [vmem:[%s349 + $0xc8] sm:%s342]
      %456 = vst [vmem:[%s350 + $0xd0] sm:%s342] %v455
      %v457 = vld [vmem:[%s349 + $0xd8] sm:%s342]
      %458 = vst [vmem:[%s350 + $0xd4] sm:%s342] %v457
      %v459 = vld [vmem:[%s349 + $0xcc] sm:%s342]
      %460 = vst [vmem:[%s350 + $0xd8] sm:%s342] %v459
      %v461 = vld [vmem:[%s349 + $0xdc] sm:%s342]
      %462 = vst [vmem:[%s350 + $0xdc] sm:%s342] %v461
      %v463 = vld [vmem:[%s349 + $0xe0] sm:%s342]
      %464 = vst [vmem:[%s350 + $0xe0] sm:%s342] %v463
      %v465 = vld [vmem:[%s349 + $0xf0] sm:%s342]
      %466 = vst [vmem:[%s350 + $0xe4] sm:%s342] %v465
      %v467 = vld [vmem:[%s349 + $0xe4] sm:%s342]
      %468 = vst [vmem:[%s350 + $0xe8] sm:%s342] %v467
      %v469 = vld [vmem:[%s349 + $0xf4] sm:%s342]
      %470 = vst [vmem:[%s350 + $0xec] sm:%s342] %v469
      %v471 = vld [vmem:[%s349 + $0xe8] sm:%s342]
      %472 = vst [vmem:[%s350 + $0xf0] sm:%s342] %v471
      %v473 = vld [vmem:[%s349 + $0xf8] sm:%s342]
      %474 = vst [vmem:[%s350 + $0xf4] sm:%s342] %v473
      %v475 = vld [vmem:[%s349 + $0xec] sm:%s342]
      %476 = vst [vmem:[%s350 + $0xf8] sm:%s342] %v475
      %v477 = vld [vmem:[%s349 + $0xfc] sm:%s342]
      %478 = vst [vmem:[%s350 + $0xfc] sm:%s342] %v477
    $region79: #{_lambda_.1} parent=73 // loop_footer
      %s348 = sadd.s32 1, %s344
    $region80: #{_lambda_.1} parent=73 // loop_footer_branch
      %343 = sbr.rel target = $region76
    $region81: #{_lambda_.1} parent=73 // loop_exit
      _
  $region74: #{_lambda_.1} parent=0 // pred_fallthru
    _
  // Predicated region
  $region100: #{_lambda_.1} parent=0 // pred_check
    _
  $region101: #{_lambda_.1} parent=0 // pred_check_branch
    %636 = sbr.rel (0) target = $region103
  $region102: #{_lambda_.1} parent=0 // pred_region
    %637 = vsyncadd %s333, 4096
  $region103: #{_lambda_.1} parent=0 // pred_fallthru
    _
  %v638 = vlaneseq
  %v639 = vand.u32 %v638, 127
  %v640 = vadd.s32 %v639, 128
  %v641 = vadd.s32 %v639, 256
  %v642 = vadd.s32 %v639, 384
  %v643 = vand.u32 %v639, 127
  %v644 = vand.u32 %v640, 127
  %v645 = vand.u32 %v641, 127
  %v646 = vand.u32 %v642, 127
  %vm647 = vcmp.lt.s32.totalorder %v643, 64
  %vm648 = vcmp.lt.s32.totalorder %v644, 64
  %vm649 = vcmp.lt.s32.totalorder %v645, 64
  %vm650 = vcmp.lt.s32.totalorder %v646, 64
  %vm651 = vcmp.lt.s32.totalorder %v639, 64
  %v652 = vld [vmem:[%s0] sm:$0xff]
  %v653 = vld [vmem:[%s0 + $0x8] sm:$0xff]
  %v654 = vld [vmem:[%s0 + $0x10] sm:$0xff]
  %v655 = vld [vmem:[%s0 + $0x18] sm:$0xff]
  %v656 = vld [vmem:[%s0 + $0x20] sm:$0xff]
  %v657 = vld [vmem:[%s0 + $0x28] sm:$0xff]
  %v658 = vld [vmem:[%s0 + $0x30] sm:$0xff]
  %v659 = vld [vmem:[%s0 + $0x38] sm:$0xff]
  %v660 = vld [vmem:[%s0 + $0x40] sm:$0xff]
  %v661 = vld [vmem:[%s0 + $0x48] sm:$0xff]
  %v662 = vld [vmem:[%s0 + $0x50] sm:$0xff]
  %v663 = vld [vmem:[%s0 + $0x58] sm:$0xff]
  %v664 = vld [vmem:[%s0 + $0x60] sm:$0xff]
  %v665 = vld [vmem:[%s0 + $0x68] sm:$0xff]
  %v666 = vld [vmem:[%s0 + $0x70] sm:$0xff]
  %v667 = vld [vmem:[%s0 + $0x78] sm:$0xff]
  %v668 = vld [vmem:[%s1] sm:$0xff]
  %v669 = vld [vmem:[%s1 + $0x8] sm:$0xff]
  %v670 = vld [vmem:[%s1 + $0x10] sm:$0xff]
  %v671 = vld [vmem:[%s1 + $0x18] sm:$0xff]
  %v672 = vld [vmem:[%s1 + $0x20] sm:$0xff]
  %v673 = vld [vmem:[%s1 + $0x28] sm:$0xff]
  %v674 = vld [vmem:[%s1 + $0x30] sm:$0xff]
  %v675 = vld [vmem:[%s1 + $0x38] sm:$0xff]
  %v676 = vld [vmem:[%s1 + $0x40] sm:$0xff]
  %v677 = vld [vmem:[%s1 + $0x48] sm:$0xff]
  %v678 = vld [vmem:[%s1 + $0x50] sm:$0xff]
  %v679 = vld [vmem:[%s1 + $0x58] sm:$0xff]
  %v680 = vld [vmem:[%s1 + $0x60] sm:$0xff]
  %v681 = vld [vmem:[%s1 + $0x68] sm:$0xff]
  %v682 = vld [vmem:[%s1 + $0x70] sm:$0xff]
  %v683 = vld [vmem:[%s1 + $0x78] sm:$0xff]
  %v684 = vld [vmem:[%s1 + $0x80] sm:$0xff]
  %v685 = vld [vmem:[%s1 + $0x88] sm:$0xff]
  %v686 = vld [vmem:[%s1 + $0x90] sm:$0xff]
  %v687 = vld [vmem:[%s1 + $0x98] sm:$0xff]
  %v688 = vld [vmem:[%s1 + $0xa0] sm:$0xff]
  %v689 = vld [vmem:[%s1 + $0xa8] sm:$0xff]
  %v690 = vld [vmem:[%s1 + $0xb0] sm:$0xff]
  %v691 = vld [vmem:[%s1 + $0xb8] sm:$0xff]
  %v692 = vld [vmem:[%s1 + $0xc0] sm:$0xff]
  %v693 = vld [vmem:[%s1 + $0xc8] sm:$0xff]
  %v694 = vld [vmem:[%s1 + $0xd0] sm:$0xff]
  %v695 = vld [vmem:[%s1 + $0xd8] sm:$0xff]
  %v696 = vld [vmem:[%s1 + $0xe0] sm:$0xff]
  %v697 = vld [vmem:[%s1 + $0xe8] sm:$0xff]
  %v698 = vld [vmem:[%s1 + $0xf0] sm:$0xff]
  %v699 = vld [vmem:[%s1 + $0xf8] sm:$0xff]
  %v700 = vld [vmem:[%s1 + $0x100] sm:$0xff]
  %v701 = vld [vmem:[%s1 + $0x108] sm:$0xff]
  %v702 = vld [vmem:[%s1 + $0x110] sm:$0xff]
  %v703 = vld [vmem:[%s1 + $0x118] sm:$0xff]
  %v704 = vld [vmem:[%s1 + $0x120] sm:$0xff]
  %v705 = vld [vmem:[%s1 + $0x128] sm:$0xff]
  %v706 = vld [vmem:[%s1 + $0x130] sm:$0xff]
  %v707 = vld [vmem:[%s1 + $0x138] sm:$0xff]
  %v708 = vld [vmem:[%s1 + $0x140] sm:$0xff]
  %v709 = vld [vmem:[%s1 + $0x148] sm:$0xff]
  %v710 = vld [vmem:[%s1 + $0x150] sm:$0xff]
  %v711 = vld [vmem:[%s1 + $0x158] sm:$0xff]
  %v712 = vld [vmem:[%s1 + $0x160] sm:$0xff]
  %v713 = vld [vmem:[%s1 + $0x168] sm:$0xff]
  %v714 = vld [vmem:[%s1 + $0x170] sm:$0xff]
  %v715 = vld [vmem:[%s1 + $0x178] sm:$0xff]
  %v716 = vld [vmem:[%s1 + $0x180] sm:$0xff]
  %v717 = vld [vmem:[%s1 + $0x188] sm:$0xff]
  %v718 = vld [vmem:[%s1 + $0x190] sm:$0xff]
  %v719 = vld [vmem:[%s1 + $0x198] sm:$0xff]
  %v720 = vld [vmem:[%s1 + $0x1a0] sm:$0xff]
  %v721 = vld [vmem:[%s1 + $0x1a8] sm:$0xff]
  %v722 = vld [vmem:[%s1 + $0x1b0] sm:$0xff]
  %v723 = vld [vmem:[%s1 + $0x1b8] sm:$0xff]
  %v724 = vld [vmem:[%s1 + $0x1c0] sm:$0xff]
  %v725 = vld [vmem:[%s1 + $0x1c8] sm:$0xff]
  %v726 = vld [vmem:[%s1 + $0x1d0] sm:$0xff]
  %v727 = vld [vmem:[%s1 + $0x1d8] sm:$0xff]
  %v728 = vld [vmem:[%s1 + $0x1e0] sm:$0xff]
  %v729 = vld [vmem:[%s1 + $0x1e8] sm:$0xff]
  %v730 = vld [vmem:[%s1 + $0x1f0] sm:$0xff]
  %v731 = vld [vmem:[%s1 + $0x1f8] sm:$0xff]
  %v732 = vld [vmem:[%s1 + $0x200] sm:$0xff]
  %v733 = vld [vmem:[%s1 + $0x208] sm:$0xff]
  %v734 = vld [vmem:[%s1 + $0x210] sm:$0xff]
  %v735 = vld [vmem:[%s1 + $0x218] sm:$0xff]
  %v736 = vld [vmem:[%s1 + $0x220] sm:$0xff]
  %v737 = vld [vmem:[%s1 + $0x228] sm:$0xff]
  %v738 = vld [vmem:[%s1 + $0x230] sm:$0xff]
  %v739 = vld [vmem:[%s1 + $0x238] sm:$0xff]
  %v740 = vld [vmem:[%s1 + $0x240] sm:$0xff]
  %v741 = vld [vmem:[%s1 + $0x248] sm:$0xff]
  %v742 = vld [vmem:[%s1 + $0x250] sm:$0xff]
  %v743 = vld [vmem:[%s1 + $0x258] sm:$0xff]
  %v744 = vld [vmem:[%s1 + $0x260] sm:$0xff]
  %v745 = vld [vmem:[%s1 + $0x268] sm:$0xff]
  %v746 = vld [vmem:[%s1 + $0x270] sm:$0xff]
  %v747 = vld [vmem:[%s1 + $0x278] sm:$0xff]
  %v748 = vld [vmem:[%s1 + $0x280] sm:$0xff]
  %v749 = vld [vmem:[%s1 + $0x288] sm:$0xff]
  %v750 = vld [vmem:[%s1 + $0x290] sm:$0xff]
  %v751 = vld [vmem:[%s1 + $0x298] sm:$0xff]
  %v752 = vld [vmem:[%s1 + $0x2a0] sm:$0xff]
  %v753 = vld [vmem:[%s1 + $0x2a8] sm:$0xff]
  %v754 = vld [vmem:[%s1 + $0x2b0] sm:$0xff]
  %v755 = vld [vmem:[%s1 + $0x2b8] sm:$0xff]
  %v756 = vld [vmem:[%s1 + $0x2c0] sm:$0xff]
  %v757 = vld [vmem:[%s1 + $0x2c8] sm:$0xff]
  %v758 = vld [vmem:[%s1 + $0x2d0] sm:$0xff]
  %v759 = vld [vmem:[%s1 + $0x2d8] sm:$0xff]
  %v760 = vld [vmem:[%s1 + $0x2e0] sm:$0xff]
  %v761 = vld [vmem:[%s1 + $0x2e8] sm:$0xff]
  %v762 = vld [vmem:[%s1 + $0x2f0] sm:$0xff]
  %v763 = vld [vmem:[%s1 + $0x2f8] sm:$0xff]
  %v764 = vld [vmem:[%s1 + $0x300] sm:$0xff]
  %v765 = vld [vmem:[%s1 + $0x308] sm:$0xff]
  %v766 = vld [vmem:[%s1 + $0x310] sm:$0xff]
  %v767 = vld [vmem:[%s1 + $0x318] sm:$0xff]
  %v768 = vld [vmem:[%s1 + $0x320] sm:$0xff]
  %v769 = vld [vmem:[%s1 + $0x328] sm:$0xff]
  %v770 = vld [vmem:[%s1 + $0x330] sm:$0xff]
  %v771 = vld [vmem:[%s1 + $0x338] sm:$0xff]
  %v772 = vld [vmem:[%s1 + $0x340] sm:$0xff]
  %v773 = vld [vmem:[%s1 + $0x348] sm:$0xff]
  %v774 = vld [vmem:[%s1 + $0x350] sm:$0xff]
  %v775 = vld [vmem:[%s1 + $0x358] sm:$0xff]
  %v776 = vld [vmem:[%s1 + $0x360] sm:$0xff]
  %v777 = vld [vmem:[%s1 + $0x368] sm:$0xff]
  %v778 = vld [vmem:[%s1 + $0x370] sm:$0xff]
  %v779 = vld [vmem:[%s1 + $0x378] sm:$0xff]
  %v780 = vld [vmem:[%s1 + $0x380] sm:$0xff]
  %v781 = vld [vmem:[%s1 + $0x388] sm:$0xff]
  %v782 = vld [vmem:[%s1 + $0x390] sm:$0xff]
  %v783 = vld [vmem:[%s1 + $0x398] sm:$0xff]
  %v784 = vld [vmem:[%s1 + $0x3a0] sm:$0xff]
  %v785 = vld [vmem:[%s1 + $0x3a8] sm:$0xff]
  %v786 = vld [vmem:[%s1 + $0x3b0] sm:$0xff]
  %v787 = vld [vmem:[%s1 + $0x3b8] sm:$0xff]
  %v788 = vld [vmem:[%s1 + $0x3c0] sm:$0xff]
  %v789 = vld [vmem:[%s1 + $0x3c8] sm:$0xff]
  %v790 = vld [vmem:[%s1 + $0x3d0] sm:$0xff]
  %v791 = vld [vmem:[%s1 + $0x3d8] sm:$0xff]
  %v792 = vld [vmem:[%s1 + $0x3e0] sm:$0xff]
  %v793 = vld [vmem:[%s1 + $0x3e8] sm:$0xff]
  %v794 = vld [vmem:[%s1 + $0x3f0] sm:$0xff]
  %v795 = vld [vmem:[%s1 + $0x3f8] sm:$0xff]
  %v796 = vld [vmem:[%s2] sm:$0xf]
  %v798 = vlaneseq
  %v799 = vshrl.u32 %v798, 7
  %v800 = vsub.s32 0, %v799
  %v801 = vrot.slane %v796, %v800
  %v802 = vlaneseq
  %v803 = vshrl.u32 %v802, 7
  %v804 = vsub.s32 1, %v803
  %v805 = vrot.slane %v796, %v804
  %v806 = vlaneseq
  %v807 = vshrl.u32 %v806, 7
  %v808 = vsub.s32 2, %v807
  %v809 = vrot.slane %v796, %v808
  %v810 = vlaneseq
  %v811 = vshrl.u32 %v810, 7
  %v812 = vsub.s32 3, %v811
  %v813 = vrot.slane %v796, %v812
  %v834 = vunpack.c.l.b16 %v652
  %v835 = vunpack.c.h.b16 %v652
  %v836 = vunpack.c.l.b16 %v653
  %v837 = vunpack.c.h.b16 %v653
  %v838 = vunpack.c.l.b16 %v654
  %v839 = vunpack.c.h.b16 %v654
  %v840 = vunpack.c.l.b16 %v655
  %v841 = vunpack.c.h.b16 %v655
  %v842 = vunpack.c.l.b16 %v656
  %v843 = vunpack.c.h.b16 %v656
  %v844 = vunpack.c.l.b16 %v657
  %v845 = vunpack.c.h.b16 %v657
  %v846 = vunpack.c.l.b16 %v658
  %v847 = vunpack.c.h.b16 %v658
  %v848 = vunpack.c.l.b16 %v659
  %v849 = vunpack.c.h.b16 %v659
  %v850 = vunpack.c.l.b16 %v660
  %v851 = vunpack.c.h.b16 %v660
  %v852 = vunpack.c.l.b16 %v661
  %v853 = vunpack.c.h.b16 %v661
  %v854 = vunpack.c.l.b16 %v662
  %v855 = vunpack.c.h.b16 %v662
  %v856 = vunpack.c.l.b16 %v663
  %v857 = vunpack.c.h.b16 %v663
  %v858 = vunpack.c.l.b16 %v664
  %v859 = vunpack.c.h.b16 %v664
  %v860 = vunpack.c.l.b16 %v665
  %v861 = vunpack.c.h.b16 %v665
  %v862 = vunpack.c.l.b16 %v666
  %v863 = vunpack.c.h.b16 %v666
  %v864 = vunpack.c.l.b16 %v667
  %v865 = vunpack.c.h.b16 %v667
  %v866 = vpack.c.b16 %v838, %v834
  %v867 = vpack.c.b16 %v839, %v835
  %v868 = vpack.c.b16 %v840, %v836
  %v869 = vpack.c.b16 %v841, %v837
  %v870 = vpack.c.b16 %v846, %v842
  %v871 = vpack.c.b16 %v847, %v843
  %v872 = vpack.c.b16 %v848, %v844
  %v873 = vpack.c.b16 %v849, %v845
  %v874 = vpack.c.b16 %v854, %v850
  %v875 = vpack.c.b16 %v855, %v851
  %v876 = vpack.c.b16 %v856, %v852
  %v877 = vpack.c.b16 %v857, %v853
  %v878 = vpack.c.b16 %v862, %v858
  %v879 = vpack.c.b16 %v863, %v859
  %v880 = vpack.c.b16 %v864, %v860
  %v881 = vpack.c.b16 %v865, %v861
  %v1026 = vunpack.c.l.b16 %v668
  %v1027 = vunpack.c.h.b16 %v668
  %v1028 = vunpack.c.l.b16 %v669
  %v1029 = vunpack.c.h.b16 %v669
  %v1030 = vunpack.c.l.b16 %v670
  %v1031 = vunpack.c.h.b16 %v670
  %v1032 = vunpack.c.l.b16 %v671
  %v1033 = vunpack.c.h.b16 %v671
  %v1034 = vunpack.c.l.b16 %v672
  %v1035 = vunpack.c.h.b16 %v672
  %v1036 = vunpack.c.l.b16 %v673
  %v1037 = vunpack.c.h.b16 %v673
  %v1038 = vunpack.c.l.b16 %v674
  %v1039 = vunpack.c.h.b16 %v674
  %v1040 = vunpack.c.l.b16 %v675
  %v1041 = vunpack.c.h.b16 %v675
  %v1042 = vunpack.c.l.b16 %v676
  %v1043 = vunpack.c.h.b16 %v676
  %v1044 = vunpack.c.l.b16 %v677
  %v1045 = vunpack.c.h.b16 %v677
  %v1046 = vunpack.c.l.b16 %v678
  %v1047 = vunpack.c.h.b16 %v678
  %v1048 = vunpack.c.l.b16 %v679
  %v1049 = vunpack.c.h.b16 %v679
  %v1050 = vunpack.c.l.b16 %v680
  %v1051 = vunpack.c.h.b16 %v680
  %v1052 = vunpack.c.l.b16 %v681
  %v1053 = vunpack.c.h.b16 %v681
  %v1054 = vunpack.c.l.b16 %v682
  %v1055 = vunpack.c.h.b16 %v682
  %v1056 = vunpack.c.l.b16 %v683
  %v1057 = vunpack.c.h.b16 %v683
  %v1058 = vunpack.c.l.b16 %v684
  %v1059 = vunpack.c.h.b16 %v684
  %v1060 = vunpack.c.l.b16 %v685
  %v1061 = vunpack.c.h.b16 %v685
  %v1062 = vunpack.c.l.b16 %v686
  %v1063 = vunpack.c.h.b16 %v686
  %v1064 = vunpack.c.l.b16 %v687
  %v1065 = vunpack.c.h.b16 %v687
  %v1066 = vunpack.c.l.b16 %v688
  %v1067 = vunpack.c.h.b16 %v688
  %v1068 = vunpack.c.l.b16 %v689
  %v1069 = vunpack.c.h.b16 %v689
  %v1070 = vunpack.c.l.b16 %v690
  %v1071 = vunpack.c.h.b16 %v690
  %v1072 = vunpack.c.l.b16 %v691
  %v1073 = vunpack.c.h.b16 %v691
  %v1074 = vunpack.c.l.b16 %v692
  %v1075 = vunpack.c.h.b16 %v692
  %v1076 = vunpack.c.l.b16 %v693
  %v1077 = vunpack.c.h.b16 %v693
  %v1078 = vunpack.c.l.b16 %v694
  %v1079 = vunpack.c.h.b16 %v694
  %v1080 = vunpack.c.l.b16 %v695
  %v1081 = vunpack.c.h.b16 %v695
  %v1082 = vunpack.c.l.b16 %v696
  %v1083 = vunpack.c.h.b16 %v696
  %v1084 = vunpack.c.l.b16 %v697
  %v1085 = vunpack.c.h.b16 %v697
  %v1086 = vunpack.c.l.b16 %v698
  %v1087 = vunpack.c.h.b16 %v698
  %v1088 = vunpack.c.l.b16 %v699
  %v1089 = vunpack.c.h.b16 %v699
  %v1090 = vunpack.c.l.b16 %v700
  %v1091 = vunpack.c.h.b16 %v700
  %v1092 = vunpack.c.l.b16 %v701
  %v1093 = vunpack.c.h.b16 %v701
  %v1094 = vunpack.c.l.b16 %v702
  %v1095 = vunpack.c.h.b16 %v702
  %v1096 = vunpack.c.l.b16 %v703
  %v1097 = vunpack.c.h.b16 %v703
  %v1098 = vunpack.c.l.b16 %v704
  %v1099 = vunpack.c.h.b16 %v704
  %v1100 = vunpack.c.l.b16 %v705
  %v1101 = vunpack.c.h.b16 %v705
  %v1102 = vunpack.c.l.b16 %v706
  %v1103 = vunpack.c.h.b16 %v706
  %v1104 = vunpack.c.l.b16 %v707
  %v1105 = vunpack.c.h.b16 %v707
  %v1106 = vunpack.c.l.b16 %v708
  %v1107 = vunpack.c.h.b16 %v708
  %v1108 = vunpack.c.l.b16 %v709
  %v1109 = vunpack.c.h.b16 %v709
  %v1110 = vunpack.c.l.b16 %v710
  %v1111 = vunpack.c.h.b16 %v710
  %v1112 = vunpack.c.l.b16 %v711
  %v1113 = vunpack.c.h.b16 %v711
  %v1114 = vunpack.c.l.b16 %v712
  %v1115 = vunpack.c.h.b16 %v712
  %v1116 = vunpack.c.l.b16 %v713
  %v1117 = vunpack.c.h.b16 %v713
  %v1118 = vunpack.c.l.b16 %v714
  %v1119 = vunpack.c.h.b16 %v714
  %v1120 = vunpack.c.l.b16 %v715
  %v1121 = vunpack.c.h.b16 %v715
  %v1122 = vunpack.c.l.b16 %v716
  %v1123 = vunpack.c.h.b16 %v716
  %v1124 = vunpack.c.l.b16 %v717
  %v1125 = vunpack.c.h.b16 %v717
  %v1126 = vunpack.c.l.b16 %v718
  %v1127 = vunpack.c.h.b16 %v718
  %v1128 = vunpack.c.l.b16 %v719
  %v1129 = vunpack.c.h.b16 %v719
  %v1130 = vunpack.c.l.b16 %v720
  %v1131 = vunpack.c.h.b16 %v720
  %v1132 = vunpack.c.l.b16 %v721
  %v1133 = vunpack.c.h.b16 %v721
  %v1134 = vunpack.c.l.b16 %v722
  %v1135 = vunpack.c.h.b16 %v722
  %v1136 = vunpack.c.l.b16 %v723
  %v1137 = vunpack.c.h.b16 %v723
  %v1138 = vunpack.c.l.b16 %v724
  %v1139 = vunpack.c.h.b16 %v724
  %v1140 = vunpack.c.l.b16 %v725
  %v1141 = vunpack.c.h.b16 %v725
  %v1142 = vunpack.c.l.b16 %v726
  %v1143 = vunpack.c.h.b16 %v726
  %v1144 = vunpack.c.l.b16 %v727
  %v1145 = vunpack.c.h.b16 %v727
  %v1146 = vunpack.c.l.b16 %v728
  %v1147 = vunpack.c.h.b16 %v728
  %v1148 = vunpack.c.l.b16 %v729
  %v1149 = vunpack.c.h.b16 %v729
  %v1150 = vunpack.c.l.b16 %v730
  %v1151 = vunpack.c.h.b16 %v730
  %v1152 = vunpack.c.l.b16 %v731
  %v1153 = vunpack.c.h.b16 %v731
  %v1154 = vunpack.c.l.b16 %v732
  %v1155 = vunpack.c.h.b16 %v732
  %v1156 = vunpack.c.l.b16 %v733
  %v1157 = vunpack.c.h.b16 %v733
  %v1158 = vunpack.c.l.b16 %v734
  %v1159 = vunpack.c.h.b16 %v734
  %v1160 = vunpack.c.l.b16 %v735
  %v1161 = vunpack.c.h.b16 %v735
  %v1162 = vunpack.c.l.b16 %v736
  %v1163 = vunpack.c.h.b16 %v736
  %v1164 = vunpack.c.l.b16 %v737
  %v1165 = vunpack.c.h.b16 %v737
  %v1166 = vunpack.c.l.b16 %v738
  %v1167 = vunpack.c.h.b16 %v738
  %v1168 = vunpack.c.l.b16 %v739
  %v1169 = vunpack.c.h.b16 %v739
  %v1170 = vunpack.c.l.b16 %v740
  %v1171 = vunpack.c.h.b16 %v740
  %v1172 = vunpack.c.l.b16 %v741
  %v1173 = vunpack.c.h.b16 %v741
  %v1174 = vunpack.c.l.b16 %v742
  %v1175 = vunpack.c.h.b16 %v742
  %v1176 = vunpack.c.l.b16 %v743
  %v1177 = vunpack.c.h.b16 %v743
  %v1178 = vunpack.c.l.b16 %v744
  %v1179 = vunpack.c.h.b16 %v744
  %v1180 = vunpack.c.l.b16 %v745
  %v1181 = vunpack.c.h.b16 %v745
  %v1182 = vunpack.c.l.b16 %v746
  %v1183 = vunpack.c.h.b16 %v746
  %v1184 = vunpack.c.l.b16 %v747
  %v1185 = vunpack.c.h.b16 %v747
  %v1186 = vunpack.c.l.b16 %v748
  %v1187 = vunpack.c.h.b16 %v748
  %v1188 = vunpack.c.l.b16 %v749
  %v1189 = vunpack.c.h.b16 %v749
  %v1190 = vunpack.c.l.b16 %v750
  %v1191 = vunpack.c.h.b16 %v750
  %v1192 = vunpack.c.l.b16 %v751
  %v1193 = vunpack.c.h.b16 %v751
  %v1194 = vunpack.c.l.b16 %v752
  %v1195 = vunpack.c.h.b16 %v752
  %v1196 = vunpack.c.l.b16 %v753
  %v1197 = vunpack.c.h.b16 %v753
  %v1198 = vunpack.c.l.b16 %v754
  %v1199 = vunpack.c.h.b16 %v754
  %v1200 = vunpack.c.l.b16 %v755
  %v1201 = vunpack.c.h.b16 %v755
  %v1202 = vunpack.c.l.b16 %v756
  %v1203 = vunpack.c.h.b16 %v756
  %v1204 = vunpack.c.l.b16 %v757
  %v1205 = vunpack.c.h.b16 %v757
  %v1206 = vunpack.c.l.b16 %v758
  %v1207 = vunpack.c.h.b16 %v758
  %v1208 = vunpack.c.l.b16 %v759
  %v1209 = vunpack.c.h.b16 %v759
  %v1210 = vunpack.c.l.b16 %v760
  %v1211 = vunpack.c.h.b16 %v760
  %v1212 = vunpack.c.l.b16 %v761
  %v1213 = vunpack.c.h.b16 %v761
  %v1214 = vunpack.c.l.b16 %v762
  %v1215 = vunpack.c.h.b16 %v762
  %v1216 = vunpack.c.l.b16 %v763
  %v1217 = vunpack.c.h.b16 %v763
  %v1218 = vunpack.c.l.b16 %v764
  %v1219 = vunpack.c.h.b16 %v764
  %v1220 = vunpack.c.l.b16 %v765
  %v1221 = vunpack.c.h.b16 %v765
  %v1222 = vunpack.c.l.b16 %v766
  %v1223 = vunpack.c.h.b16 %v766
  %v1224 = vunpack.c.l.b16 %v767
  %v1225 = vunpack.c.h.b16 %v767
  %v1226 = vunpack.c.l.b16 %v768
  %v1227 = vunpack.c.h.b16 %v768
  %v1228 = vunpack.c.l.b16 %v769
  %v1229 = vunpack.c.h.b16 %v769
  %v1230 = vunpack.c.l.b16 %v770
  %v1231 = vunpack.c.h.b16 %v770
  %v1232 = vunpack.c.l.b16 %v771
  %v1233 = vunpack.c.h.b16 %v771
  %v1234 = vunpack.c.l.b16 %v772
  %v1235 = vunpack.c.h.b16 %v772
  %v1236 = vunpack.c.l.b16 %v773
  %v1237 = vunpack.c.h.b16 %v773
  %v1238 = vunpack.c.l.b16 %v774
  %v1239 = vunpack.c.h.b16 %v774
  %v1240 = vunpack.c.l.b16 %v775
  %v1241 = vunpack.c.h.b16 %v775
  %v1242 = vunpack.c.l.b16 %v776
  %v1243 = vunpack.c.h.b16 %v776
  %v1244 = vunpack.c.l.b16 %v777
  %v1245 = vunpack.c.h.b16 %v777
  %v1246 = vunpack.c.l.b16 %v778
  %v1247 = vunpack.c.h.b16 %v778
  %v1248 = vunpack.c.l.b16 %v779
  %v1249 = vunpack.c.h.b16 %v779
  %v1250 = vunpack.c.l.b16 %v780
  %v1251 = vunpack.c.h.b16 %v780
  %v1252 = vunpack.c.l.b16 %v781
  %v1253 = vunpack.c.h.b16 %v781
  %v1254 = vunpack.c.l.b16 %v782
  %v1255 = vunpack.c.h.b16 %v782
  %v1256 = vunpack.c.l.b16 %v783
  %v1257 = vunpack.c.h.b16 %v783
  %v1258 = vunpack.c.l.b16 %v784
  %v1259 = vunpack.c.h.b16 %v784
  %v1260 = vunpack.c.l.b16 %v785
  %v1261 = vunpack.c.h.b16 %v785
  %v1262 = vunpack.c.l.b16 %v786
  %v1263 = vunpack.c.h.b16 %v786
  %v1264 = vunpack.c.l.b16 %v787
  %v1265 = vunpack.c.h.b16 %v787
  %v1266 = vunpack.c.l.b16 %v788
  %v1267 = vunpack.c.h.b16 %v788
  %v1268 = vunpack.c.l.b16 %v789
  %v1269 = vunpack.c.h.b16 %v789
  %v1270 = vunpack.c.l.b16 %v790
  %v1271 = vunpack.c.h.b16 %v790
  %v1272 = vunpack.c.l.b16 %v791
  %v1273 = vunpack.c.h.b16 %v791
  %v1274 = vunpack.c.l.b16 %v792
  %v1275 = vunpack.c.h.b16 %v792
  %v1276 = vunpack.c.l.b16 %v793
  %v1277 = vunpack.c.h.b16 %v793
  %v1278 = vunpack.c.l.b16 %v794
  %v1279 = vunpack.c.h.b16 %v794
  %v1280 = vunpack.c.l.b16 %v795
  %v1281 = vunpack.c.h.b16 %v795
  %v1282 = vpack.c.b16 %v1030, %v1026
  %v1283 = vpack.c.b16 %v1031, %v1027
  %v1284 = vpack.c.b16 %v1032, %v1028
  %v1285 = vpack.c.b16 %v1033, %v1029
  %v1286 = vpack.c.b16 %v1038, %v1034
  %v1287 = vpack.c.b16 %v1039, %v1035
  %v1288 = vpack.c.b16 %v1040, %v1036
  %v1289 = vpack.c.b16 %v1041, %v1037
  %v1290 = vpack.c.b16 %v1046, %v1042
  %v1291 = vpack.c.b16 %v1047, %v1043
  %v1292 = vpack.c.b16 %v1048, %v1044
  %v1293 = vpack.c.b16 %v1049, %v1045
  %v1294 = vpack.c.b16 %v1054, %v1050
  %v1295 = vpack.c.b16 %v1055, %v1051
  %v1296 = vpack.c.b16 %v1056, %v1052
  %v1297 = vpack.c.b16 %v1057, %v1053
  %v1298 = vpack.c.b16 %v1062, %v1058
  %v1299 = vpack.c.b16 %v1063, %v1059
  %v1300 = vpack.c.b16 %v1064, %v1060
  %v1301 = vpack.c.b16 %v1065, %v1061
  %v1302 = vpack.c.b16 %v1070, %v1066
  %v1303 = vpack.c.b16 %v1071, %v1067
  %v1304 = vpack.c.b16 %v1072, %v1068
  %v1305 = vpack.c.b16 %v1073, %v1069
  %v1306 = vpack.c.b16 %v1078, %v1074
  %v1307 = vpack.c.b16 %v1079, %v1075
  %v1308 = vpack.c.b16 %v1080, %v1076
  %v1309 = vpack.c.b16 %v1081, %v1077
  %v1310 = vpack.c.b16 %v1086, %v1082
  %v1311 = vpack.c.b16 %v1087, %v1083
  %v1312 = vpack.c.b16 %v1088, %v1084
  %v1313 = vpack.c.b16 %v1089, %v1085
  %v1314 = vpack.c.b16 %v1094, %v1090
  %v1315 = vpack.c.b16 %v1095, %v1091
  %v1316 = vpack.c.b16 %v1096, %v1092
  %v1317 = vpack.c.b16 %v1097, %v1093
  %v1318 = vpack.c.b16 %v1102, %v1098
  %v1319 = vpack.c.b16 %v1103, %v1099
  %v1320 = vpack.c.b16 %v1104, %v1100
  %v1321 = vpack.c.b16 %v1105, %v1101
  %v1322 = vpack.c.b16 %v1110, %v1106
  %v1323 = vpack.c.b16 %v1111, %v1107
  %v1324 = vpack.c.b16 %v1112, %v1108
  %v1325 = vpack.c.b16 %v1113, %v1109
  %v1326 = vpack.c.b16 %v1118, %v1114
  %v1327 = vpack.c.b16 %v1119, %v1115
  %v1328 = vpack.c.b16 %v1120, %v1116
  %v1329 = vpack.c.b16 %v1121, %v1117
  %v1330 = vpack.c.b16 %v1126, %v1122
  %v1331 = vpack.c.b16 %v1127, %v1123
  %v1332 = vpack.c.b16 %v1128, %v1124
  %v1333 = vpack.c.b16 %v1129, %v1125
  %v1334 = vpack.c.b16 %v1134, %v1130
  %v1335 = vpack.c.b16 %v1135, %v1131
  %v1336 = vpack.c.b16 %v1136, %v1132
  %v1337 = vpack.c.b16 %v1137, %v1133
  %v1338 = vpack.c.b16 %v1142, %v1138
  %v1339 = vpack.c.b16 %v1143, %v1139
  %v1340 = vpack.c.b16 %v1144, %v1140
  %v1341 = vpack.c.b16 %v1145, %v1141
  %v1342 = vpack.c.b16 %v1150, %v1146
  %v1343 = vpack.c.b16 %v1151, %v1147
  %v1344 = vpack.c.b16 %v1152, %v1148
  %v1345 = vpack.c.b16 %v1153, %v1149
  %v1346 = vpack.c.b16 %v1158, %v1154
  %v1347 = vpack.c.b16 %v1159, %v1155
  %v1348 = vpack.c.b16 %v1160, %v1156
  %v1349 = vpack.c.b16 %v1161, %v1157
  %v1350 = vpack.c.b16 %v1166, %v1162
  %v1351 = vpack.c.b16 %v1167, %v1163
  %v1352 = vpack.c.b16 %v1168, %v1164
  %v1353 = vpack.c.b16 %v1169, %v1165
  %v1354 = vpack.c.b16 %v1174, %v1170
  %v1355 = vpack.c.b16 %v1175, %v1171
  %v1356 = vpack.c.b16 %v1176, %v1172
  %v1357 = vpack.c.b16 %v1177, %v1173
  %v1358 = vpack.c.b16 %v1182, %v1178
  %v1359 = vpack.c.b16 %v1183, %v1179
  %v1360 = vpack.c.b16 %v1184, %v1180
  %v1361 = vpack.c.b16 %v1185, %v1181
  %v1362 = vpack.c.b16 %v1190, %v1186
  %v1363 = vpack.c.b16 %v1191, %v1187
  %v1364 = vpack.c.b16 %v1192, %v1188
  %v1365 = vpack.c.b16 %v1193, %v1189
  %v1366 = vpack.c.b16 %v1198, %v1194
  %v1367 = vpack.c.b16 %v1199, %v1195
  %v1368 = vpack.c.b16 %v1200, %v1196
  %v1369 = vpack.c.b16 %v1201, %v1197
  %v1370 = vpack.c.b16 %v1206, %v1202
  %v1371 = vpack.c.b16 %v1207, %v1203
  %v1372 = vpack.c.b16 %v1208, %v1204
  %v1373 = vpack.c.b16 %v1209, %v1205
  %v1374 = vpack.c.b16 %v1214, %v1210
  %v1375 = vpack.c.b16 %v1215, %v1211
  %v1376 = vpack.c.b16 %v1216, %v1212
  %v1377 = vpack.c.b16 %v1217, %v1213
  %v1378 = vpack.c.b16 %v1222, %v1218
  %v1379 = vpack.c.b16 %v1223, %v1219
  %v1380 = vpack.c.b16 %v1224, %v1220
  %v1381 = vpack.c.b16 %v1225, %v1221
  %v1382 = vpack.c.b16 %v1230, %v1226
  %v1383 = vpack.c.b16 %v1231, %v1227
  %v1384 = vpack.c.b16 %v1232, %v1228
  %v1385 = vpack.c.b16 %v1233, %v1229
  %v1386 = vpack.c.b16 %v1238, %v1234
  %v1387 = vpack.c.b16 %v1239, %v1235
  %v1388 = vpack.c.b16 %v1240, %v1236
  %v1389 = vpack.c.b16 %v1241, %v1237
  %v1390 = vpack.c.b16 %v1246, %v1242
  %v1391 = vpack.c.b16 %v1247, %v1243
  %v1392 = vpack.c.b16 %v1248, %v1244
  %v1393 = vpack.c.b16 %v1249, %v1245
  %v1394 = vpack.c.b16 %v1254, %v1250
  %v1395 = vpack.c.b16 %v1255, %v1251
  %v1396 = vpack.c.b16 %v1256, %v1252
  %v1397 = vpack.c.b16 %v1257, %v1253
  %v1398 = vpack.c.b16 %v1262, %v1258
  %v1399 = vpack.c.b16 %v1263, %v1259
  %v1400 = vpack.c.b16 %v1264, %v1260
  %v1401 = vpack.c.b16 %v1265, %v1261
  %v1402 = vpack.c.b16 %v1270, %v1266
  %v1403 = vpack.c.b16 %v1271, %v1267
  %v1404 = vpack.c.b16 %v1272, %v1268
  %v1405 = vpack.c.b16 %v1273, %v1269
  %v1406 = vpack.c.b16 %v1278, %v1274
  %v1407 = vpack.c.b16 %v1279, %v1275
  %v1408 = vpack.c.b16 %v1280, %v1276
  %v1409 = vpack.c.b16 %v1281, %v1277
  %1538 = vmatprep.subr.bf16.mxu0 %v1283
  %1539 = vmatpush1.bf16.msra.mxu0 %v1282
  %1540 = vmatprep.subr.bf16.mxu0 %v1287
  %1541 = vmatpush1.bf16.msra.mxu0 %v1286
  %1542 = vmatprep.subr.bf16.mxu0 %v1291
  %1543 = vmatpush1.bf16.msra.mxu0 %v1290
  %1544 = vmatprep.subr.bf16.mxu0 %v1295
  %1545 = vmatpush1.bf16.msra.mxu0 %v1294
  %1546 = vmatprep.subr.bf16.mxu0 %v1299
  %1547 = vmatpush1.bf16.msra.mxu0 %v1298
  %1548 = vmatprep.subr.bf16.mxu0 %v1303
  %1549 = vmatpush1.bf16.msra.mxu0 %v1302
  %1550 = vmatprep.subr.bf16.mxu0 %v1307
  %1551 = vmatpush1.bf16.msra.mxu0 %v1306
  %1552 = vmatprep.subr.bf16.mxu0 %v1311
  %1553 = vmatpush1.bf16.msra.mxu0 %v1310
  %1554 = vmatprep.subr.bf16.mxu0 %v1315
  %1555 = vmatpush1.bf16.msra.mxu0 %v1314
  %1556 = vmatprep.subr.bf16.mxu0 %v1319
  %1557 = vmatpush1.bf16.msra.mxu0 %v1318
  %1558 = vmatprep.subr.bf16.mxu0 %v1323
  %1559 = vmatpush1.bf16.msra.mxu0 %v1322
  %1560 = vmatprep.subr.bf16.mxu0 %v1327
  %1561 = vmatpush1.bf16.msra.mxu0 %v1326
  %1562 = vmatprep.subr.bf16.mxu0 %v1331
  %1563 = vmatpush1.bf16.msra.mxu0 %v1330
  %1564 = vmatprep.subr.bf16.mxu0 %v1335
  %1565 = vmatpush1.bf16.msra.mxu0 %v1334
  %1566 = vmatprep.subr.bf16.mxu0 %v1339
  %1567 = vmatpush1.bf16.msra.mxu0 %v1338
  %1568 = vmatprep.subr.bf16.mxu0 %v1343
  %1569 = vmatpush1.bf16.msra.mxu0 %v1342
  %1570 = vmatprep.mubr.bf16.mxu0 %v867
  %1571 = vmatmul.mubr.bf16.gmra.mrb[0].mxu0 %v866
  %v1572 = vpop.f32.mrb[0].mxu0
  %v1573 = vadd.f32 %v801, %v1572
  %v1574 = vpop.f32.mrb[0].mxu0
  %v1575 = vadd.f32 %v805, %v1574
  %v1576 = vpop.f32.mrb[0].mxu0
  %v1577 = vadd.f32 %v801, %v1576
  %v1578 = vpop.f32.mrb[0].mxu0
  %v1579 = vadd.f32 %v805, %v1578
  %1580 = vmatprep.mubr.bf16.mxu0 %v871
  %1581 = vmatmul.mubr.bf16.gmra.mrb[0].mxu0 %v870
  %v1582 = vpop.f32.mrb[0].mxu0
  %v1583 = vadd.f32 %v801, %v1582
  %v1584 = vpop.f32.mrb[0].mxu0
  %v1585 = vadd.f32 %v805, %v1584
  %v1586 = vpop.f32.mrb[0].mxu0
  %v1587 = vadd.f32 %v801, %v1586
  %v1588 = vpop.f32.mrb[0].mxu0
  %v1589 = vadd.f32 %v805, %v1588
  %1590 = vmatprep.mubr.bf16.mxu0 %v875
  %1591 = vmatmul.mubr.bf16.gmra.mrb[0].mxu0 %v874
  %v1592 = vpop.f32.mrb[0].mxu0
  %v1593 = vadd.f32 %v801, %v1592
  %v1594 = vpop.f32.mrb[0].mxu0
  %v1595 = vadd.f32 %v805, %v1594
  %v1596 = vpop.f32.mrb[0].mxu0
  %v1597 = vadd.f32 %v801, %v1596
  %v1598 = vpop.f32.mrb[0].mxu0
  %v1599 = vadd.f32 %v805, %v1598
  %1600 = vmatprep.mubr.bf16.mxu0 %v879
  %1601 = vmatmul.mubr.bf16.gmra.mrb[0].mxu0 %v878
  %v1602 = vpop.f32.mrb[0].mxu0
  %v1603 = vadd.f32 %v801, %v1602
  %v1604 = vpop.f32.mrb[0].mxu0
  %v1605 = vadd.f32 %v805, %v1604
  %v1606 = vpop.f32.mrb[0].mxu0
  %v1607 = vadd.f32 %v801, %v1606
  %v1608 = vpop.f32.mrb[0].mxu0
  %v1609 = vadd.f32 %v805, %v1608
  %1610 = vdwg.mxu0
  %1611 = vmatprep.subr.bf16.mxu0 %v1347
  %1612 = vmatpush1.bf16.msra.mxu0 %v1346
  %1613 = vmatprep.subr.bf16.mxu0 %v1351
  %1614 = vmatpush1.bf16.msra.mxu0 %v1350
  %1615 = vmatprep.subr.bf16.mxu0 %v1355
  %1616 = vmatpush1.bf16.msra.mxu0 %v1354
  %1617 = vmatprep.subr.bf16.mxu0 %v1359
  %1618 = vmatpush1.bf16.msra.mxu0 %v1358
  %1619 = vmatprep.subr.bf16.mxu0 %v1363
  %1620 = vmatpush1.bf16.msra.mxu0 %v1362
  %1621 = vmatprep.subr.bf16.mxu0 %v1367
  %1622 = vmatpush1.bf16.msra.mxu0 %v1366
  %1623 = vmatprep.subr.bf16.mxu0 %v1371
  %1624 = vmatpush1.bf16.msra.mxu0 %v1370
  %1625 = vmatprep.subr.bf16.mxu0 %v1375
  %1626 = vmatpush1.bf16.msra.mxu0 %v1374
  %1627 = vmatprep.subr.bf16.mxu0 %v1379
  %1628 = vmatpush1.bf16.msra.mxu0 %v1378
  %1629 = vmatprep.subr.bf16.mxu0 %v1383
  %1630 = vmatpush1.bf16.msra.mxu0 %v1382
  %1631 = vmatprep.subr.bf16.mxu0 %v1387
  %1632 = vmatpush1.bf16.msra.mxu0 %v1386
  %1633 = vmatprep.subr.bf16.mxu0 %v1391
  %1634 = vmatpush1.bf16.msra.mxu0 %v1390
  %1635 = vmatprep.subr.bf16.mxu0 %v1395
  %1636 = vmatpush1.bf16.msra.mxu0 %v1394
  %1637 = vmatprep.subr.bf16.mxu0 %v1399
  %1638 = vmatpush1.bf16.msra.mxu0 %v1398
  %1639 = vmatprep.subr.bf16.mxu0 %v1403
  %1640 = vmatpush1.bf16.msra.mxu0 %v1402
  %1641 = vmatprep.subr.bf16.mxu0 %v1407
  %1642 = vmatpush1.bf16.msra.mxu0 %v1406
  %1643 = vmatprep.mubr.bf16.mxu0 %v869
  %1644 = vmatmul.mubr.bf16.gmra.mrb[0].mxu0 %v868
  %v1645 = vpop.f32.mrb[0].mxu0
  %v1646 = vadd.f32 %v1573, %v1645
  %v1647 = vpop.f32.mrb[0].mxu0
  %v1648 = vadd.f32 %v1575, %v1647
  %v1649 = vpop.f32.mrb[0].mxu0
  %v1650 = vadd.f32 %v1577, %v1649
  %v1651 = vpop.f32.mrb[0].mxu0
  %v1652 = vadd.f32 %v1579, %v1651
  %1653 = vmatprep.mubr.bf16.mxu0 %v873
  %1654 = vmatmul.mubr.bf16.gmra.mrb[0].mxu0 %v872
  %v1655 = vpop.f32.mrb[0].mxu0
  %v1656 = vadd.f32 %v1583, %v1655
  %v1657 = vpop.f32.mrb[0].mxu0
  %v1658 = vadd.f32 %v1585, %v1657
  %v1659 = vpop.f32.mrb[0].mxu0
  %v1660 = vadd.f32 %v1587, %v1659
  %v1661 = vpop.f32.mrb[0].mxu0
  %v1662 = vadd.f32 %v1589, %v1661
  %1663 = vmatprep.mubr.bf16.mxu0 %v877
  %1664 = vmatmul.mubr.bf16.gmra.mrb[0].mxu0 %v876
  %v1665 = vpop.f32.mrb[0].mxu0
  %v1666 = vadd.f32 %v1593, %v1665
  %v1667 = vpop.f32.mrb[0].mxu0
  %v1668 = vadd.f32 %v1595, %v1667
  %v1669 = vpop.f32.mrb[0].mxu0
  %v1670 = vadd.f32 %v1597, %v1669
  %v1671 = vpop.f32.mrb[0].mxu0
  %v1672 = vadd.f32 %v1599, %v1671
  %1673 = vmatprep.mubr.bf16.mxu0 %v881
  %1674 = vmatmul.mubr.bf16.gmra.mrb[0].mxu0 %v880
  %v1675 = vpop.f32.mrb[0].mxu0
  %v1676 = vadd.f32 %v1603, %v1675
  %v1677 = vpop.f32.mrb[0].mxu0
  %v1678 = vadd.f32 %v1605, %v1677
  %v1679 = vpop.f32.mrb[0].mxu0
  %v1680 = vadd.f32 %v1607, %v1679
  %v1681 = vpop.f32.mrb[0].mxu0
  %v1682 = vadd.f32 %v1609, %v1681
  %1683 = vdwg.mxu0
  %1684 = vmatprep.subr.bf16.mxu0 %v1285
  %1685 = vmatpush1.bf16.msra.mxu0 %v1284
  %1686 = vmatprep.subr.bf16.mxu0 %v1289
  %1687 = vmatpush1.bf16.msra.mxu0 %v1288
  %1688 = vmatprep.subr.bf16.mxu0 %v1293
  %1689 = vmatpush1.bf16.msra.mxu0 %v1292
  %1690 = vmatprep.subr.bf16.mxu0 %v1297
  %1691 = vmatpush1.bf16.msra.mxu0 %v1296
  %1692 = vmatprep.subr.bf16.mxu0 %v1301
  %1693 = vmatpush1.bf16.msra.mxu0 %v1300
  %1694 = vmatprep.subr.bf16.mxu0 %v1305
  %1695 = vmatpush1.bf16.msra.mxu0 %v1304
  %1696 = vmatprep.subr.bf16.mxu0 %v1309
  %1697 = vmatpush1.bf16.msra.mxu0 %v1308
  %1698 = vmatprep.subr.bf16.mxu0 %v1313
  %1699 = vmatpush1.bf16.msra.mxu0 %v1312
  %1700 = vmatprep.subr.bf16.mxu0 %v1317
  %1701 = vmatpush1.bf16.msra.mxu0 %v1316
  %1702 = vmatprep.subr.bf16.mxu0 %v1321
  %1703 = vmatpush1.bf16.msra.mxu0 %v1320
  %1704 = vmatprep.subr.bf16.mxu0 %v1325
  %1705 = vmatpush1.bf16.msra.mxu0 %v1324
  %1706 = vmatprep.subr.bf16.mxu0 %v1329
  %1707 = vmatpush1.bf16.msra.mxu0 %v1328
  %1708 = vmatprep.subr.bf16.mxu0 %v1333
  %1709 = vmatpush1.bf16.msra.mxu0 %v1332
  %1710 = vmatprep.subr.bf16.mxu0 %v1337
  %1711 = vmatpush1.bf16.msra.mxu0 %v1336
  %1712 = vmatprep.subr.bf16.mxu0 %v1341
  %1713 = vmatpush1.bf16.msra.mxu0 %v1340
  %1714 = vmatprep.subr.bf16.mxu0 %v1345
  %1715 = vmatpush1.bf16.msra.mxu0 %v1344
  %1716 = vmatprep.mubr.bf16.mxu0 %v867
  %1717 = vmatmul.mubr.bf16.gmra.mrb[0].mxu0 %v866
  %v1718 = vpop.f32.mrb[0].mxu0
  %v1719 = vadd.f32 %v809, %v1718
  %v1720 = vpop.f32.mrb[0].mxu0
  %v1721 = vadd.f32 %v813, %v1720
  %v1722 = vpop.f32.mrb[0].mxu0
  %v1723 = vadd.f32 %v809, %v1722
  %v1724 = vpop.f32.mrb[0].mxu0
  %v1725 = vadd.f32 %v813, %v1724
  %1726 = vmatprep.mubr.bf16.mxu0 %v871
  %1727 = vmatmul.mubr.bf16.gmra.mrb[0].mxu0 %v870
  %v1728 = vpop.f32.mrb[0].mxu0
  %v1729 = vadd.f32 %v809, %v1728
  %v1730 = vpop.f32.mrb[0].mxu0
  %v1731 = vadd.f32 %v813, %v1730
  %v1732 = vpop.f32.mrb[0].mxu0
  %v1733 = vadd.f32 %v809, %v1732
  %v1734 = vpop.f32.mrb[0].mxu0
  %v1735 = vadd.f32 %v813, %v1734
  %1736 = vmatprep.mubr.bf16.mxu0 %v875
  %1737 = vmatmul.mubr.bf16.gmra.mrb[0].mxu0 %v874
  %v1738 = vpop.f32.mrb[0].mxu0
  %v1739 = vadd.f32 %v809, %v1738
  %v1740 = vpop.f32.mrb[0].mxu0
  %v1741 = vadd.f32 %v813, %v1740
  %v1742 = vpop.f32.mrb[0].mxu0
  %v1743 = vadd.f32 %v809, %v1742
  %v1744 = vpop.f32.mrb[0].mxu0
  %v1745 = vadd.f32 %v813, %v1744
  %1746 = vmatprep.mubr.bf16.mxu0 %v879
  %1747 = vmatmul.mubr.bf16.gmra.mrb[0].mxu0 %v878
  %v1748 = vpop.f32.mrb[0].mxu0
  %v1749 = vadd.f32 %v809, %v1748
  %v1750 = vpop.f32.mrb[0].mxu0
  %v1751 = vadd.f32 %v813, %v1750
  %v1752 = vpop.f32.mrb[0].mxu0
  %v1753 = vadd.f32 %v809, %v1752
  %v1754 = vpop.f32.mrb[0].mxu0
  %v1755 = vadd.f32 %v813, %v1754
  %1756 = vdwg.mxu0
  %1757 = vmatprep.subr.bf16.mxu0 %v1349
  %1758 = vmatpush1.bf16.msra.mxu0 %v1348
  %1759 = vmatprep.subr.bf16.mxu0 %v1353
  %1760 = vmatpush1.bf16.msra.mxu0 %v1352
  %1761 = vmatprep.subr.bf16.mxu0 %v1357
  %1762 = vmatpush1.bf16.msra.mxu0 %v1356
  %1763 = vmatprep.subr.bf16.mxu0 %v1361
  %1764 = vmatpush1.bf16.msra.mxu0 %v1360
  %1765 = vmatprep.subr.bf16.mxu0 %v1365
  %1766 = vmatpush1.bf16.msra.mxu0 %v1364
  %1767 = vmatprep.subr.bf16.mxu0 %v1369
  %1768 = vmatpush1.bf16.msra.mxu0 %v1368
  %1769 = vmatprep.subr.bf16.mxu0 %v1373
  %1770 = vmatpush1.bf16.msra.mxu0 %v1372
  %1771 = vmatprep.subr.bf16.mxu0 %v1377
  %1772 = vmatpush1.bf16.msra.mxu0 %v1376
  %1773 = vmatprep.subr.bf16.mxu0 %v1381
  %1774 = vmatpush1.bf16.msra.mxu0 %v1380
  %1775 = vmatprep.subr.bf16.mxu0 %v1385
  %1776 = vmatpush1.bf16.msra.mxu0 %v1384
  %1777 = vmatprep.subr.bf16.mxu0 %v1389
  %1778 = vmatpush1.bf16.msra.mxu0 %v1388
  %1779 = vmatprep.subr.bf16.mxu0 %v1393
  %1780 = vmatpush1.bf16.msra.mxu0 %v1392
  %1781 = vmatprep.subr.bf16.mxu0 %v1397
  %1782 = vmatpush1.bf16.msra.mxu0 %v1396
  %1783 = vmatprep.subr.bf16.mxu0 %v1401
  %1784 = vmatpush1.bf16.msra.mxu0 %v1400
  %1785 = vmatprep.subr.bf16.mxu0 %v1405
  %1786 = vmatpush1.bf16.msra.mxu0 %v1404
  %1787 = vmatprep.subr.bf16.mxu0 %v1409
  %1788 = vmatpush1.bf16.msra.mxu0 %v1408
  %1789 = vmatprep.mubr.bf16.mxu0 %v869
  %1790 = vmatmul.mubr.bf16.gmra.mrb[0].mxu0 %v868
  %v1791 = vpop.f32.mrb[0].mxu0
  %v1792 = vadd.f32 %v1719, %v1791
  %v1793 = vpop.f32.mrb[0].mxu0
  %v1794 = vadd.f32 %v1721, %v1793
  %v1795 = vpop.f32.mrb[0].mxu0
  %v1796 = vadd.f32 %v1723, %v1795
  %v1797 = vpop.f32.mrb[0].mxu0
  %v1798 = vadd.f32 %v1725, %v1797
  %1799 = vmatprep.mubr.bf16.mxu0 %v873
  %1800 = vmatmul.mubr.bf16.gmra.mrb[0].mxu0 %v872
  %v1801 = vpop.f32.mrb[0].mxu0
  %v1802 = vadd.f32 %v1729, %v1801
  %v1803 = vpop.f32.mrb[0].mxu0
  %v1804 = vadd.f32 %v1731, %v1803
  %v1805 = vpop.f32.mrb[0].mxu0
  %v1806 = vadd.f32 %v1733, %v1805
  %v1807 = vpop.f32.mrb[0].mxu0
  %v1808 = vadd.f32 %v1735, %v1807
  %1809 = vmatprep.mubr.bf16.mxu0 %v877
  %1810 = vmatmul.mubr.bf16.gmra.mrb[0].mxu0 %v876
  %v1811 = vpop.f32.mrb[0].mxu0
  %v1812 = vadd.f32 %v1739, %v1811
  %v1813 = vpop.f32.mrb[0].mxu0
  %v1814 = vadd.f32 %v1741, %v1813
  %v1815 = vpop.f32.mrb[0].mxu0
  %v1816 = vadd.f32 %v1743, %v1815
  %v1817 = vpop.f32.mrb[0].mxu0
  %v1818 = vadd.f32 %v1745, %v1817
  %1819 = vmatprep.mubr.bf16.mxu0 %v881
  %1820 = vmatmul.mubr.bf16.gmra.mrb[0].mxu0 %v880
  %v1821 = vpop.f32.mrb[0].mxu0
  %v1822 = vadd.f32 %v1749, %v1821
  %v1823 = vpop.f32.mrb[0].mxu0
  %v1824 = vadd.f32 %v1751, %v1823
  %v1825 = vpop.f32.mrb[0].mxu0
  %v1826 = vadd.f32 %v1753, %v1825
  %v1827 = vpop.f32.mrb[0].mxu0
  %v1828 = vadd.f32 %v1755, %v1827
  %1829 = vdwg.mxu0
  %1830 = vst [vmem:[#allocation2] sm:$0xff] %v1646
  %1831 = vst [vmem:[#allocation2 + $0x8] sm:$0xff] %v1648
  %1832 = vst [vmem:[#allocation2 + $0x10] sm:$0xff] %v1792
  %1833 = vst [vmem:[#allocation2 + $0x18] sm:$0xff] %v1794
  %1834 = vst [vmem:[#allocation2 + $0x20] sm:$0xff] %v1650
  %1835 = vst [vmem:[#allocation2 + $0x28] sm:$0xff] %v1652
  %1836 = vst [vmem:[#allocation2 + $0x30] sm:$0xff] %v1796
  %1837 = vst [vmem:[#allocation2 + $0x38] sm:$0xff] %v1798
  %1838 = vst [vmem:[#allocation2 + $0x40] sm:$0xff] %v1656
  %1839 = vst [vmem:[#allocation2 + $0x48] sm:$0xff] %v1658
  %1840 = vst [vmem:[#allocation2 + $0x50] sm:$0xff] %v1802
  %1841 = vst [vmem:[#allocation2 + $0x58] sm:$0xff] %v1804
  %1842 = vst [vmem:[#allocation2 + $0x60] sm:$0xff] %v1660
  %1843 = vst [vmem:[#allocation2 + $0x68] sm:$0xff] %v1662
  %1844 = vst [vmem:[#allocation2 + $0x70] sm:$0xff] %v1806
  %1845 = vst [vmem:[#allocation2 + $0x78] sm:$0xff] %v1808
  %1846 = vst [vmem:[#allocation2 + $0x80] sm:$0xff] %v1666
  %1847 = vst [vmem:[#allocation2 + $0x88] sm:$0xff] %v1668
  %1848 = vst [vmem:[#allocation2 + $0x90] sm:$0xff] %v1812
  %1849 = vst [vmem:[#allocation2 + $0x98] sm:$0xff] %v1814
  %1850 = vst [vmem:[#allocation2 + $0xa0] sm:$0xff] %v1670
  %1851 = vst [vmem:[#allocation2 + $0xa8] sm:$0xff] %v1672
  %1852 = vst [vmem:[#allocation2 + $0xb0] sm:$0xff] %v1816
  %1853 = vst [vmem:[#allocation2 + $0xb8] sm:$0xff] %v1818
  %1854 = vst [vmem:[#allocation2 + $0xc0] sm:$0xff] %v1676
  %1855 = vst [vmem:[#allocation2 + $0xc8] sm:$0xff] %v1678
  %1856 = vst [vmem:[#allocation2 + $0xd0] sm:$0xff] %v1822
  %1857 = vst [vmem:[#allocation2 + $0xd8] sm:$0xff] %v1824
  %1858 = vst [vmem:[#allocation2 + $0xe0] sm:$0xff] %v1680
  %1859 = vst [vmem:[#allocation2 + $0xe8] sm:$0xff] %v1682
  %1860 = vst [vmem:[#allocation2 + $0xf0] sm:$0xff] %v1826
  %1861 = vst [vmem:[#allocation2 + $0xf8] sm:$0xff] %v1828
  %v1862 = vld [vmem:[%s3] sm:$0xff]
  %v1863 = vld [vmem:[%s3 + $0x8] sm:$0xff]
  %v1864 = vld [vmem:[%s3 + $0x10] sm:$0xff]
  %v1865 = vld [vmem:[%s3 + $0x18] sm:$0xff]
  %v1866 = vld [vmem:[%s3 + $0x20] sm:$0xff]
  %v1867 = vld [vmem:[%s3 + $0x28] sm:$0xff]
  %v1868 = vld [vmem:[%s3 + $0x30] sm:$0xff]
  %v1869 = vld [vmem:[%s3 + $0x38] sm:$0xff]
  %v1870 = vld [vmem:[%s3 + $0x40] sm:$0xff]
  %v1871 = vld [vmem:[%s3 + $0x48] sm:$0xff]
  %v1872 = vld [vmem:[%s3 + $0x50] sm:$0xff]
  %v1873 = vld [vmem:[%s3 + $0x58] sm:$0xff]
  %v1874 = vld [vmem:[%s3 + $0x60] sm:$0xff]
  %v1875 = vld [vmem:[%s3 + $0x68] sm:$0xff]
  %v1876 = vld [vmem:[%s3 + $0x70] sm:$0xff]
  %v1877 = vld [vmem:[%s3 + $0x78] sm:$0xff]
  %v1878 = vld [vmem:[%s3 + $0x80] sm:$0xff]
  %v1879 = vld [vmem:[%s3 + $0x88] sm:$0xff]
  %v1880 = vld [vmem:[%s3 + $0x90] sm:$0xff]
  %v1881 = vld [vmem:[%s3 + $0x98] sm:$0xff]
  %v1882 = vld [vmem:[%s3 + $0xa0] sm:$0xff]
  %v1883 = vld [vmem:[%s3 + $0xa8] sm:$0xff]
  %v1884 = vld [vmem:[%s3 + $0xb0] sm:$0xff]
  %v1885 = vld [vmem:[%s3 + $0xb8] sm:$0xff]
  %v1886 = vld [vmem:[%s3 + $0xc0] sm:$0xff]
  %v1887 = vld [vmem:[%s3 + $0xc8] sm:$0xff]
  %v1888 = vld [vmem:[%s3 + $0xd0] sm:$0xff]
  %v1889 = vld [vmem:[%s3 + $0xd8] sm:$0xff]
  %v1890 = vld [vmem:[%s3 + $0xe0] sm:$0xff]
  %v1891 = vld [vmem:[%s3 + $0xe8] sm:$0xff]
  %v1892 = vld [vmem:[%s3 + $0xf0] sm:$0xff]
  %v1893 = vld [vmem:[%s3 + $0xf8] sm:$0xff]
  %v1894 = vld [vmem:[#allocation2] sm:$0xff]
  %v1895 = vld [vmem:[#allocation2 + $0x8] sm:$0xff]
  %v1896 = vld [vmem:[#allocation2 + $0x10] sm:$0xff]
  %v1897 = vld [vmem:[#allocation2 + $0x18] sm:$0xff]
  %v1898 = vld [vmem:[#allocation2 + $0xe0] sm:$0xff]
  %v1899 = vld [vmem:[#allocation2 + $0xe8] sm:$0xff]
  %v1900 = vld [vmem:[#allocation2 + $0xf0] sm:$0xff]
  %v1901 = vld [vmem:[#allocation2 + $0xf8] sm:$0xff]
  %v1902 = vsel %vm647, %v1894, %v1898
  %v1903 = vsel %vm648, %v1895, %v1899
  %v1904 = vsel %vm649, %v1896, %v1900
  %v1905 = vsel %vm650, %v1897, %v1901
  %v1938 = vunpack.c.l.b16 %v1862
  %v1939 = vunpack.c.h.b16 %v1862
  %v1940 = vunpack.c.l.b16 %v1863
  %v1941 = vunpack.c.h.b16 %v1863
  %v1942 = vunpack.c.l.b16 %v1864
  %v1943 = vunpack.c.h.b16 %v1864
  %v1944 = vunpack.c.l.b16 %v1865
  %v1945 = vunpack.c.h.b16 %v1865
  %v1946 = vunpack.c.l.b16 %v1866
  %v1947 = vunpack.c.h.b16 %v1866
  %v1948 = vunpack.c.l.b16 %v1867
  %v1949 = vunpack.c.h.b16 %v1867
  %v1950 = vunpack.c.l.b16 %v1868
  %v1951 = vunpack.c.h.b16 %v1868
  %v1952 = vunpack.c.l.b16 %v1869
  %v1953 = vunpack.c.h.b16 %v1869
  %v1954 = vunpack.c.l.b16 %v1870
  %v1955 = vunpack.c.h.b16 %v1870
  %v1956 = vunpack.c.l.b16 %v1871
  %v1957 = vunpack.c.h.b16 %v1871
  %v1958 = vunpack.c.l.b16 %v1872
  %v1959 = vunpack.c.h.b16 %v1872
  %v1960 = vunpack.c.l.b16 %v1873
  %v1961 = vunpack.c.h.b16 %v1873
  %v1962 = vunpack.c.l.b16 %v1874
  %v1963 = vunpack.c.h.b16 %v1874
  %v1964 = vunpack.c.l.b16 %v1875
  %v1965 = vunpack.c.h.b16 %v1875
  %v1966 = vunpack.c.l.b16 %v1876
  %v1967 = vunpack.c.h.b16 %v1876
  %v1968 = vunpack.c.l.b16 %v1877
  %v1969 = vunpack.c.h.b16 %v1877
  %v1970 = vunpack.c.l.b16 %v1878
  %v1971 = vunpack.c.h.b16 %v1878
  %v1972 = vunpack.c.l.b16 %v1879
  %v1973 = vunpack.c.h.b16 %v1879
  %v1974 = vunpack.c.l.b16 %v1880
  %v1975 = vunpack.c.h.b16 %v1880
  %v1976 = vunpack.c.l.b16 %v1881
  %v1977 = vunpack.c.h.b16 %v1881
  %v1978 = vunpack.c.l.b16 %v1882
  %v1979 = vunpack.c.h.b16 %v1882
  %v1980 = vunpack.c.l.b16 %v1883
  %v1981 = vunpack.c.h.b16 %v1883
  %v1982 = vunpack.c.l.b16 %v1884
  %v1983 = vunpack.c.h.b16 %v1884
  %v1984 = vunpack.c.l.b16 %v1885
  %v1985 = vunpack.c.h.b16 %v1885
  %v1986 = vunpack.c.l.b16 %v1886
  %v1987 = vunpack.c.h.b16 %v1886
  %v1988 = vunpack.c.l.b16 %v1887
  %v1989 = vunpack.c.h.b16 %v1887
  %v1990 = vunpack.c.l.b16 %v1888
  %v1991 = vunpack.c.h.b16 %v1888
  %v1992 = vunpack.c.l.b16 %v1889
  %v1993 = vunpack.c.h.b16 %v1889
  %v1994 = vunpack.c.l.b16 %v1890
  %v1995 = vunpack.c.h.b16 %v1890
  %v1996 = vunpack.c.l.b16 %v1891
  %v1997 = vunpack.c.h.b16 %v1891
  %v1998 = vunpack.c.l.b16 %v1892
  %v1999 = vunpack.c.h.b16 %v1892
  %v2000 = vunpack.c.l.b16 %v1893
  %v2001 = vunpack.c.h.b16 %v1893
  %v2002 = vpack.c.b16 %v1942, %v1938
  %v2003 = vpack.c.b16 %v1943, %v1939
  %v2004 = vpack.c.b16 %v1944, %v1940
  %v2005 = vpack.c.b16 %v1945, %v1941
  %v2006 = vpack.c.b16 %v1950, %v1946
  %v2007 = vpack.c.b16 %v1951, %v1947
  %v2008 = vpack.c.b16 %v1952, %v1948
  %v2009 = vpack.c.b16 %v1953, %v1949
  %v2010 = vpack.c.b16 %v1958, %v1954
  %v2011 = vpack.c.b16 %v1959, %v1955
  %v2012 = vpack.c.b16 %v1960, %v1956
  %v2013 = vpack.c.b16 %v1961, %v1957
  %v2014 = vpack.c.b16 %v1966, %v1962
  %v2015 = vpack.c.b16 %v1967, %v1963
  %v2016 = vpack.c.b16 %v1968, %v1964
  %v2017 = vpack.c.b16 %v1969, %v1965
  %v2018 = vpack.c.b16 %v1974, %v1970
  %v2019 = vpack.c.b16 %v1975, %v1971
  %v2020 = vpack.c.b16 %v1976, %v1972
  %v2021 = vpack.c.b16 %v1977, %v1973
  %v2022 = vpack.c.b16 %v1982, %v1978
  %v2023 = vpack.c.b16 %v1983, %v1979
  %v2024 = vpack.c.b16 %v1984, %v1980
  %v2025 = vpack.c.b16 %v1985, %v1981
  %v2026 = vpack.c.b16 %v1990, %v1986
  %v2027 = vpack.c.b16 %v1991, %v1987
  %v2028 = vpack.c.b16 %v1992, %v1988
  %v2029 = vpack.c.b16 %v1993, %v1989
  %v2030 = vpack.c.b16 %v1998, %v1994
  %v2031 = vpack.c.b16 %v1999, %v1995
  %v2032 = vpack.c.b16 %v2000, %v1996
  %v2033 = vpack.c.b16 %v2001, %v1997
  %2066 = vmatprep.subr.bf16.mxu0 %v2003
  %2067 = vmatpush1.bf16.msra.mxu0 %v2002
  %2068 = vmatprep.subr.bf16.mxu0 %v2007
  %2069 = vmatpush1.bf16.msra.mxu0 %v2006
  %2070 = vmatprep.subr.bf16.mxu0 %v2011
  %2071 = vmatpush1.bf16.msra.mxu0 %v2010
  %2072 = vmatprep.subr.bf16.mxu0 %v2015
  %2073 = vmatpush1.bf16.msra.mxu0 %v2014
  %2074 = vmatprep.subr.bf16.mxu0 %v2019
  %2075 = vmatpush1.bf16.msra.mxu0 %v2018
  %2076 = vmatprep.subr.bf16.mxu0 %v2023
  %2077 = vmatpush1.bf16.msra.mxu0 %v2022
  %2078 = vmatprep.subr.bf16.mxu0 %v2027
  %2079 = vmatpush1.bf16.msra.mxu0 %v2026
  %2080 = vmatprep.subr.bf16.mxu0 %v2031
  %2081 = vmatpush1.bf16.msra.mxu0 %v2030
  %2082 = vmatprep.subr.bf16.mxu0 0
  %2083 = vmatpush1.bf16.msra.mxu0 0
  %2084 = vmatprep.subr.bf16.mxu0 0
  %2085 = vmatpush1.bf16.msra.mxu0 0
  %2086 = vmatprep.subr.bf16.mxu0 0
  %2087 = vmatpush1.bf16.msra.mxu0 0
  %2088 = vmatprep.subr.bf16.mxu0 0
  %2089 = vmatpush1.bf16.msra.mxu0 0
  %2090 = vmatprep.subr.bf16.mxu0 0
  %2091 = vmatpush1.bf16.msra.mxu0 0
  %2092 = vmatprep.subr.bf16.mxu0 0
  %2093 = vmatpush1.bf16.msra.mxu0 0
  %2094 = vmatprep.subr.bf16.mxu0 0
  %2095 = vmatpush1.bf16.msra.mxu0 0
  %2096 = vmatprep.subr.bf16.mxu0 0
  %2097 = vmatpush1.bf16.msra.mxu0 0
  %2098 = vmatprep.mubr.bf16.mxu0 0
  %2099 = vmatmul.mubr.bf16.gmra.mrb[0].mxu0 0
  %v2100 = vpop.f32.mrb[0].mxu0
  %v2101 = vadd.f32 0.0, %v2100
  %v2102 = vpop.f32.mrb[0].mxu0
  %v2103 = vadd.f32 0.0, %v2102
  %v2104 = vpop.f32.mrb[0].mxu0
  %v2105 = vpop.f32.mrb[0].mxu0
  %2106 = vdwg.mxu0
  %2107 = vmatprep.subr.bf16.mxu0 %v2005
  %2108 = vmatpush1.bf16.msra.mxu0 %v2004
  %2109 = vmatprep.subr.bf16.mxu0 %v2009
  %2110 = vmatpush1.bf16.msra.mxu0 %v2008
  %2111 = vmatprep.subr.bf16.mxu0 %v2013
  %2112 = vmatpush1.bf16.msra.mxu0 %v2012
  %2113 = vmatprep.subr.bf16.mxu0 %v2017
  %2114 = vmatpush1.bf16.msra.mxu0 %v2016
  %2115 = vmatprep.subr.bf16.mxu0 %v2021
  %2116 = vmatpush1.bf16.msra.mxu0 %v2020
  %2117 = vmatprep.subr.bf16.mxu0 %v2025
  %2118 = vmatpush1.bf16.msra.mxu0 %v2024
  %2119 = vmatprep.subr.bf16.mxu0 %v2029
  %2120 = vmatpush1.bf16.msra.mxu0 %v2028
  %2121 = vmatprep.subr.bf16.mxu0 %v2033
  %2122 = vmatpush1.bf16.msra.mxu0 %v2032
  %2123 = vmatprep.subr.bf16.mxu0 0
  %2124 = vmatpush1.bf16.msra.mxu0 0
  %2125 = vmatprep.subr.bf16.mxu0 0
  %2126 = vmatpush1.bf16.msra.mxu0 0
  %2127 = vmatprep.subr.bf16.mxu0 0
  %2128 = vmatpush1.bf16.msra.mxu0 0
  %2129 = vmatprep.subr.bf16.mxu0 0
  %2130 = vmatpush1.bf16.msra.mxu0 0
  %2131 = vmatprep.subr.bf16.mxu0 0
  %2132 = vmatpush1.bf16.msra.mxu0 0
  %2133 = vmatprep.subr.bf16.mxu0 0
  %2134 = vmatpush1.bf16.msra.mxu0 0
  %2135 = vmatprep.subr.bf16.mxu0 0
  %2136 = vmatpush1.bf16.msra.mxu0 0
  %2137 = vmatprep.subr.bf16.mxu0 0
  %2138 = vmatpush1.bf16.msra.mxu0 0
  %2139 = vmatprep.mubr.bf16.mxu0 0
  %2140 = vmatmul.mubr.bf16.gmra.mrb[0].mxu0 0
  %v2141 = vpop.f32.mrb[0].mxu0
  %v2142 = vadd.f32 0.0, %v2141
  %v2143 = vpop.f32.mrb[0].mxu0
  %v2144 = vadd.f32 0.0, %v2143
  %v2145 = vpop.f32.mrb[0].mxu0
  %v2146 = vpop.f32.mrb[0].mxu0
  %2147 = vdwg.mxu0
  %v2148 = vadd.f32 %v1902, %v2101
  %v2149 = vadd.f32 %v1903, %v2103
  %v2150 = vadd.f32 %v1904, %v2142
  %v2151 = vadd.f32 %v1905, %v2144
  %v2152 = vxor.u32 %v2148, 2147483648
  %v2153 = vmul.f32 %v2152, 1.442695
  %v2154 = vpow.pop %v2153
  %v2155 = vadd.f32 %v2154, 1.0
  %v2156 = vrcp.pop %v2155
  %v2157 = vmul.f32 1.0, %v2156
  %v2158 = vxor.u32 %v2149, 2147483648
  %v2159 = vmul.f32 %v2158, 1.442695
  %v2160 = vpow.pop %v2159
  %v2161 = vadd.f32 %v2160, 1.0
  %v2162 = vrcp.pop %v2161
  %v2163 = vmul.f32 1.0, %v2162
  %v2164 = vtanh.pop %v2150
  %v2165 = vxor.u32 %v2151, 2147483648
  %v2166 = vmul.f32 %v2165, 1.442695
  %v2167 = vpow.pop %v2166
  %v2168 = vadd.f32 %v2167, 1.0
  %v2169 = vrcp.pop %v2168
  %v2170 = vmul.f32 1.0, %v2169
  %v2171 = vmul.f32 %v2163, 0.0
  %v2172 = vmul.f32 %v2157, %v2164
  %v2173 = vadd.f32 %v2171, %v2172
  %v2174 = vtanh.pop %v2173
  %v2175 = vmul.f32 %v2170, %v2174
  %v2176 = vld [vmem:[#allocation2 + $0x20] sm:$0xff]
  %v2177 = vld [vmem:[#allocation2 + $0x28] sm:$0xff]
  %v2178 = vld [vmem:[#allocation2 + $0x30] sm:$0xff]
  %v2179 = vld [vmem:[#allocation2 + $0x38] sm:$0xff]
  %v2180 = vld [vmem:[#allocation2 + $0xc0] sm:$0xff]
  %v2181 = vld [vmem:[#allocation2 + $0xc8] sm:$0xff]
  %v2182 = vld [vmem:[#allocation2 + $0xd0] sm:$0xff]
  %v2183 = vld [vmem:[#allocation2 + $0xd8] sm:$0xff]
  %v2184 = vsel %vm647, %v2176, %v2180
  %v2185 = vsel %vm648, %v2177, %v2181
  %v2186 = vsel %vm649, %v2178, %v2182
  %v2187 = vsel %vm650, %v2179, %v2183
  %v2188 = vpack.c.bf16 %v2175, %v2175
  %2189 = vmatprep.subr.bf16.mxu0 %v2003
  %2190 = vmatpush1.bf16.msra.mxu0 %v2002
  %2191 = vmatprep.subr.bf16.mxu0 %v2007
  %2192 = vmatpush1.bf16.msra.mxu0 %v2006
  %2193 = vmatprep.subr.bf16.mxu0 %v2011
  %2194 = vmatpush1.bf16.msra.mxu0 %v2010
  %2195 = vmatprep.subr.bf16.mxu0 %v2015
  %2196 = vmatpush1.bf16.msra.mxu0 %v2014
  %2197 = vmatprep.subr.bf16.mxu0 %v2019
  %2198 = vmatpush1.bf16.msra.mxu0 %v2018
  %2199 = vmatprep.subr.bf16.mxu0 %v2023
  %2200 = vmatpush1.bf16.msra.mxu0 %v2022
  %2201 = vmatprep.subr.bf16.mxu0 %v2027
  %2202 = vmatpush1.bf16.msra.mxu0 %v2026
  %2203 = vmatprep.subr.bf16.mxu0 %v2031
  %2204 = vmatpush1.bf16.msra.mxu0 %v2030
  %2205 = vmatprep.subr.bf16.mxu0 0
  %2206 = vmatpush1.bf16.msra.mxu0 0
  %2207 = vmatprep.subr.bf16.mxu0 0
  %2208 = vmatpush1.bf16.msra.mxu0 0
  %2209 = vmatprep.subr.bf16.mxu0 0
  %2210 = vmatpush1.bf16.msra.mxu0 0
  %2211 = vmatprep.subr.bf16.mxu0 0
  %2212 = vmatpush1.bf16.msra.mxu0 0
  %2213 = vmatprep.subr.bf16.mxu0 0
  %2214 = vmatpush1.bf16.msra.mxu0 0
  %2215 = vmatprep.subr.bf16.mxu0 0
  %2216 = vmatpush1.bf16.msra.mxu0 0
  %2217 = vmatprep.subr.bf16.mxu0 0
  %2218 = vmatpush1.bf16.msra.mxu0 0
  %2219 = vmatprep.subr.bf16.mxu0 0
  %2220 = vmatpush1.bf16.msra.mxu0 0
  %2221 = vmatprep.mubr.bf16.mxu0 0
  %2222 = vmatmul.mubr.bf16.gmra.mrb[0].mxu0 %v2188
  %v2223 = vpop.f32.mrb[0].mxu0
  %v2224 = vadd.f32 0.0, %v2223
  %v2225 = vpop.f32.mrb[0].mxu0
  %v2226 = vadd.f32 0.0, %v2225
  %v2227 = vpop.f32.mrb[0].mxu0
  %v2228 = vpop.f32.mrb[0].mxu0
  %2229 = vdwg.mxu0
  %2230 = vmatprep.subr.bf16.mxu0 %v2005
  %2231 = vmatpush1.bf16.msra.mxu0 %v2004
  %2232 = vmatprep.subr.bf16.mxu0 %v2009
  %2233 = vmatpush1.bf16.msra.mxu0 %v2008
  %2234 = vmatprep.subr.bf16.mxu0 %v2013
  %2235 = vmatpush1.bf16.msra.mxu0 %v2012
  %2236 = vmatprep.subr.bf16.mxu0 %v2017
  %2237 = vmatpush1.bf16.msra.mxu0 %v2016
  %2238 = vmatprep.subr.bf16.mxu0 %v2021
  %2239 = vmatpush1.bf16.msra.mxu0 %v2020
  %2240 = vmatprep.subr.bf16.mxu0 %v2025
  %2241 = vmatpush1.bf16.msra.mxu0 %v2024
  %2242 = vmatprep.subr.bf16.mxu0 %v2029
  %2243 = vmatpush1.bf16.msra.mxu0 %v2028
  %2244 = vmatprep.subr.bf16.mxu0 %v2033
  %2245 = vmatpush1.bf16.msra.mxu0 %v2032
  %2246 = vmatprep.subr.bf16.mxu0 0
  %2247 = vmatpush1.bf16.msra.mxu0 0
  %2248 = vmatprep.subr.bf16.mxu0 0
  %2249 = vmatpush1.bf16.msra.mxu0 0
  %2250 = vmatprep.subr.bf16.mxu0 0
  %2251 = vmatpush1.bf16.msra.mxu0 0
  %2252 = vmatprep.subr.bf16.mxu0 0
  %2253 = vmatpush1.bf16.msra.mxu0 0
  %2254 = vmatprep.subr.bf16.mxu0 0
  %2255 = vmatpush1.bf16.msra.mxu0 0
  %2256 = vmatprep.subr.bf16.mxu0 0
  %2257 = vmatpush1.bf16.msra.mxu0 0
  %2258 = vmatprep.subr.bf16.mxu0 0
  %2259 = vmatpush1.bf16.msra.mxu0 0
  %2260 = vmatprep.subr.bf16.mxu0 0
  %2261 = vmatpush1.bf16.msra.mxu0 0
  %2262 = vmatprep.mubr.bf16.mxu0 0
  %2263 = vmatmul.mubr.bf16.gmra.mrb[0].mxu0 %v2188
  %v2264 = vpop.f32.mrb[0].mxu0
  %v2265 = vadd.f32 0.0, %v2264
  %v2266 = vpop.f32.mrb[0].mxu0
  %v2267 = vadd.f32 0.0, %v2266
  %v2268 = vpop.f32.mrb[0].mxu0
  %v2269 = vpop.f32.mrb[0].mxu0
  %2270 = vdwg.mxu0
  %v2271 = vadd.f32 %v2184, %v2224
  %v2272 = vadd.f32 %v2185, %v2226
  %v2273 = vadd.f32 %v2186, %v2265
  %v2274 = vadd.f32 %v2187, %v2267
  %v2275 = vxor.u32 %v2271, 2147483648
  %v2276 = vmul.f32 %v2275, 1.442695
  %v2277 = vpow.pop %v2276
  %v2278 = vadd.f32 %v2277, 1.0
  %v2279 = vrcp.pop %v2278
  %v2280 = vmul.f32 1.0, %v2279
  %v2281 = vxor.u32 %v2272, 2147483648
  %v2282 = vmul.f32 %v2281, 1.442695
  %v2283 = vpow.pop %v2282
  %v2284 = vadd.f32 %v2283, 1.0
  %v2285 = vrcp.pop %v2284
  %v2286 = vmul.f32 1.0, %v2285
  %v2287 = vtanh.pop %v2273
  %v2288 = vxor.u32 %v2274, 2147483648
  %v2289 = vmul.f32 %v2288, 1.442695
  %v2290 = vpow.pop %v2289
  %v2291 = vadd.f32 %v2290, 1.0
  %v2292 = vrcp.pop %v2291
  %v2293 = vmul.f32 1.0, %v2292
  %v2294 = vmul.f32 %v2286, %v2173
  %v2295 = vmul.f32 %v2280, %v2287
  %v2296 = vadd.f32 %v2294, %v2295
  %v2297 = vtanh.pop %v2296
  %v2298 = vmul.f32 %v2293, %v2297
  %v2299 = vld [vmem:[#allocation2 + $0x40] sm:$0xff]
  %v2300 = vld [vmem:[#allocation2 + $0x48] sm:$0xff]
  %v2301 = vld [vmem:[#allocation2 + $0x50] sm:$0xff]
  %v2302 = vld [vmem:[#allocation2 + $0x58] sm:$0xff]
  %v2303 = vld [vmem:[#allocation2 + $0xa0] sm:$0xff]
  %v2304 = vld [vmem:[#allocation2 + $0xa8] sm:$0xff]
  %v2305 = vld [vmem:[#allocation2 + $0xb0] sm:$0xff]
  %v2306 = vld [vmem:[#allocation2 + $0xb8] sm:$0xff]
  %v2307 = vsel %vm647, %v2299, %v2303
  %v2308 = vsel %vm648, %v2300, %v2304
  %v2309 = vsel %vm649, %v2301, %v2305
  %v2310 = vsel %vm650, %v2302, %v2306
  %v2311 = vpack.c.bf16 %v2298, %v2298
  %2312 = vmatprep.subr.bf16.mxu0 %v2003
  %2313 = vmatpush1.bf16.msra.mxu0 %v2002
  %2314 = vmatprep.subr.bf16.mxu0 %v2007
  %2315 = vmatpush1.bf16.msra.mxu0 %v2006
  %2316 = vmatprep.subr.bf16.mxu0 %v2011
  %2317 = vmatpush1.bf16.msra.mxu0 %v2010
  %2318 = vmatprep.subr.bf16.mxu0 %v2015
  %2319 = vmatpush1.bf16.msra.mxu0 %v2014
  %2320 = vmatprep.subr.bf16.mxu0 %v2019
  %2321 = vmatpush1.bf16.msra.mxu0 %v2018
  %2322 = vmatprep.subr.bf16.mxu0 %v2023
  %2323 = vmatpush1.bf16.msra.mxu0 %v2022
  %2324 = vmatprep.subr.bf16.mxu0 %v2027
  %2325 = vmatpush1.bf16.msra.mxu0 %v2026
  %2326 = vmatprep.subr.bf16.mxu0 %v2031
  %2327 = vmatpush1.bf16.msra.mxu0 %v2030
  %2328 = vmatprep.subr.bf16.mxu0 0
  %2329 = vmatpush1.bf16.msra.mxu0 0
  %2330 = vmatprep.subr.bf16.mxu0 0
  %2331 = vmatpush1.bf16.msra.mxu0 0
  %2332 = vmatprep.subr.bf16.mxu0 0
  %2333 = vmatpush1.bf16.msra.mxu0 0
  %2334 = vmatprep.subr.bf16.mxu0 0
  %2335 = vmatpush1.bf16.msra.mxu0 0
  %2336 = vmatprep.subr.bf16.mxu0 0
  %2337 = vmatpush1.bf16.msra.mxu0 0
  %2338 = vmatprep.subr.bf16.mxu0 0
  %2339 = vmatpush1.bf16.msra.mxu0 0
  %2340 = vmatprep.subr.bf16.mxu0 0
  %2341 = vmatpush1.bf16.msra.mxu0 0
  %2342 = vmatprep.subr.bf16.mxu0 0
  %2343 = vmatpush1.bf16.msra.mxu0 0
  %2344 = vmatprep.mubr.bf16.mxu0 0
  %2345 = vmatmul.mubr.bf16.gmra.mrb[0].mxu0 %v2311
  %v2346 = vpop.f32.mrb[0].mxu0
  %v2347 = vadd.f32 0.0, %v2346
  %v2348 = vpop.f32.mrb[0].mxu0
  %v2349 = vadd.f32 0.0, %v2348
  %v2350 = vpop.f32.mrb[0].mxu0
  %v2351 = vpop.f32.mrb[0].mxu0
  %2352 = vdwg.mxu0
  %2353 = vmatprep.subr.bf16.mxu0 %v2005
  %2354 = vmatpush1.bf16.msra.mxu0 %v2004
  %2355 = vmatprep.subr.bf16.mxu0 %v2009
  %2356 = vmatpush1.bf16.msra.mxu0 %v2008
  %2357 = vmatprep.subr.bf16.mxu0 %v2013
  %2358 = vmatpush1.bf16.msra.mxu0 %v2012
  %2359 = vmatprep.subr.bf16.mxu0 %v2017
  %2360 = vmatpush1.bf16.msra.mxu0 %v2016
  %2361 = vmatprep.subr.bf16.mxu0 %v2021
  %2362 = vmatpush1.bf16.msra.mxu0 %v2020
  %2363 = vmatprep.subr.bf16.mxu0 %v2025
  %2364 = vmatpush1.bf16.msra.mxu0 %v2024
  %2365 = vmatprep.subr.bf16.mxu0 %v2029
  %2366 = vmatpush1.bf16.msra.mxu0 %v2028
  %2367 = vmatprep.subr.bf16.mxu0 %v2033
  %2368 = vmatpush1.bf16.msra.mxu0 %v2032
  %2369 = vmatprep.subr.bf16.mxu0 0
  %2370 = vmatpush1.bf16.msra.mxu0 0
  %2371 = vmatprep.subr.bf16.mxu0 0
  %2372 = vmatpush1.bf16.msra.mxu0 0
  %2373 = vmatprep.subr.bf16.mxu0 0
  %2374 = vmatpush1.bf16.msra.mxu0 0
  %2375 = vmatprep.subr.bf16.mxu0 0
  %2376 = vmatpush1.bf16.msra.mxu0 0
  %2377 = vmatprep.subr.bf16.mxu0 0
  %2378 = vmatpush1.bf16.msra.mxu0 0
  %2379 = vmatprep.subr.bf16.mxu0 0
  %2380 = vmatpush1.bf16.msra.mxu0 0
  %2381 = vmatprep.subr.bf16.mxu0 0
  %2382 = vmatpush1.bf16.msra.mxu0 0
  %2383 = vmatprep.subr.bf16.mxu0 0
  %2384 = vmatpush1.bf16.msra.mxu0 0
  %2385 = vmatprep.mubr.bf16.mxu0 0
  %2386 = vmatmul.mubr.bf16.gmra.mrb[0].mxu0 %v2311
  %v2387 = vpop.f32.mrb[0].mxu0
  %v2388 = vadd.f32 0.0, %v2387
  %v2389 = vpop.f32.mrb[0].mxu0
  %v2390 = vadd.f32 0.0, %v2389
  %v2391 = vpop.f32.mrb[0].mxu0
  %v2392 = vpop.f32.mrb[0].mxu0
  %2393 = vdwg.mxu0
  %v2394 = vadd.f32 %v2307, %v2347
  %v2395 = vadd.f32 %v2308, %v2349
  %v2396 = vadd.f32 %v2309, %v2388
  %v2397 = vadd.f32 %v2310, %v2390
  %v2398 = vxor.u32 %v2394, 2147483648
  %v2399 = vmul.f32 %v2398, 1.442695
  %v2400 = vpow.pop %v2399
  %v2401 = vadd.f32 %v2400, 1.0
  %v2402 = vrcp.pop %v2401
  %v2403 = vmul.f32 1.0, %v2402
  %v2404 = vxor.u32 %v2395, 2147483648
  %v2405 = vmul.f32 %v2404, 1.442695
  %v2406 = vpow.pop %v2405
  %v2407 = vadd.f32 %v2406, 1.0
  %v2408 = vrcp.pop %v2407
  %v2409 = vmul.f32 1.0, %v2408
  %v2410 = vtanh.pop %v2396
  %v2411 = vxor.u32 %v2397, 2147483648
  %v2412 = vmul.f32 %v2411, 1.442695
  %v2413 = vpow.pop %v2412
  %v2414 = vadd.f32 %v2413, 1.0
  %v2415 = vrcp.pop %v2414
  %v2416 = vmul.f32 1.0, %v2415
  %v2417 = vmul.f32 %v2409, %v2296
  %v2418 = vmul.f32 %v2403, %v2410
  %v2419 = vadd.f32 %v2417, %v2418
  %v2420 = vtanh.pop %v2419
  %v2421 = vmul.f32 %v2416, %v2420
  %v2422 = vld [vmem:[#allocation2 + $0x60] sm:$0xff]
  %v2423 = vld [vmem:[#allocation2 + $0x68] sm:$0xff]
  %v2424 = vld [vmem:[#allocation2 + $0x70] sm:$0xff]
  %v2425 = vld [vmem:[#allocation2 + $0x78] sm:$0xff]
  %v2426 = vld [vmem:[#allocation2 + $0x80] sm:$0xff]
  %v2427 = vld [vmem:[#allocation2 + $0x88] sm:$0xff]
  %v2428 = vld [vmem:[#allocation2 + $0x90] sm:$0xff]
  %v2429 = vld [vmem:[#allocation2 + $0x98] sm:$0xff]
  %v2430 = vsel %vm647, %v2422, %v2426
  %v2431 = vsel %vm648, %v2423, %v2427
  %v2432 = vsel %vm649, %v2424, %v2428
  %v2433 = vsel %vm650, %v2425, %v2429
  %v2434 = vpack.c.bf16 %v2421, %v2421
  %2435 = vmatprep.subr.bf16.mxu0 %v2003
  %2436 = vmatpush1.bf16.msra.mxu0 %v2002
  %2437 = vmatprep.subr.bf16.mxu0 %v2007
  %2438 = vmatpush1.bf16.msra.mxu0 %v2006
  %2439 = vmatprep.subr.bf16.mxu0 %v2011
  %2440 = vmatpush1.bf16.msra.mxu0 %v2010
  %2441 = vmatprep.subr.bf16.mxu0 %v2015
  %2442 = vmatpush1.bf16.msra.mxu0 %v2014
  %2443 = vmatprep.subr.bf16.mxu0 %v2019
  %2444 = vmatpush1.bf16.msra.mxu0 %v2018
  %2445 = vmatprep.subr.bf16.mxu0 %v2023
  %2446 = vmatpush1.bf16.msra.mxu0 %v2022
  %2447 = vmatprep.subr.bf16.mxu0 %v2027
  %2448 = vmatpush1.bf16.msra.mxu0 %v2026
  %2449 = vmatprep.subr.bf16.mxu0 %v2031
  %2450 = vmatpush1.bf16.msra.mxu0 %v2030
  %2451 = vmatprep.subr.bf16.mxu0 0
  %2452 = vmatpush1.bf16.msra.mxu0 0
  %2453 = vmatprep.subr.bf16.mxu0 0
  %2454 = vmatpush1.bf16.msra.mxu0 0
  %2455 = vmatprep.subr.bf16.mxu0 0
  %2456 = vmatpush1.bf16.msra.mxu0 0
  %2457 = vmatprep.subr.bf16.mxu0 0
  %2458 = vmatpush1.bf16.msra.mxu0 0
  %2459 = vmatprep.subr.bf16.mxu0 0
  %2460 = vmatpush1.bf16.msra.mxu0 0
  %2461 = vmatprep.subr.bf16.mxu0 0
  %2462 = vmatpush1.bf16.msra.mxu0 0
  %2463 = vmatprep.subr.bf16.mxu0 0
  %2464 = vmatpush1.bf16.msra.mxu0 0
  %2465 = vmatprep.subr.bf16.mxu0 0
  %2466 = vmatpush1.bf16.msra.mxu0 0
  %2467 = vmatprep.mubr.bf16.mxu0 0
  %2468 = vmatmul.mubr.bf16.gmra.mrb[0].mxu0 %v2434
  %v2469 = vpop.f32.mrb[0].mxu0
  %v2470 = vadd.f32 0.0, %v2469
  %v2471 = vpop.f32.mrb[0].mxu0
  %v2472 = vadd.f32 0.0, %v2471
  %v2473 = vpop.f32.mrb[0].mxu0
  %v2474 = vpop.f32.mrb[0].mxu0
  %2475 = vdwg.mxu0
  %2476 = vmatprep.subr.bf16.mxu0 %v2005
  %2477 = vmatpush1.bf16.msra.mxu0 %v2004
  %2478 = vmatprep.subr.bf16.mxu0 %v2009
  %2479 = vmatpush1.bf16.msra.mxu0 %v2008
  %2480 = vmatprep.subr.bf16.mxu0 %v2013
  %2481 = vmatpush1.bf16.msra.mxu0 %v2012
  %2482 = vmatprep.subr.bf16.mxu0 %v2017
  %2483 = vmatpush1.bf16.msra.mxu0 %v2016
  %2484 = vmatprep.subr.bf16.mxu0 %v2021
  %2485 = vmatpush1.bf16.msra.mxu0 %v2020
  %2486 = vmatprep.subr.bf16.mxu0 %v2025
  %2487 = vmatpush1.bf16.msra.mxu0 %v2024
  %2488 = vmatprep.subr.bf16.mxu0 %v2029
  %2489 = vmatpush1.bf16.msra.mxu0 %v2028
  %2490 = vmatprep.subr.bf16.mxu0 %v2033
  %2491 = vmatpush1.bf16.msra.mxu0 %v2032
  %2492 = vmatprep.subr.bf16.mxu0 0
  %2493 = vmatpush1.bf16.msra.mxu0 0
  %2494 = vmatprep.subr.bf16.mxu0 0
  %2495 = vmatpush1.bf16.msra.mxu0 0
  %2496 = vmatprep.subr.bf16.mxu0 0
  %2497 = vmatpush1.bf16.msra.mxu0 0
  %2498 = vmatprep.subr.bf16.mxu0 0
  %2499 = vmatpush1.bf16.msra.mxu0 0
  %2500 = vmatprep.subr.bf16.mxu0 0
  %2501 = vmatpush1.bf16.msra.mxu0 0
  %2502 = vmatprep.subr.bf16.mxu0 0
  %2503 = vmatpush1.bf16.msra.mxu0 0
  %2504 = vmatprep.subr.bf16.mxu0 0
  %2505 = vmatpush1.bf16.msra.mxu0 0
  %2506 = vmatprep.subr.bf16.mxu0 0
  %2507 = vmatpush1.bf16.msra.mxu0 0
  %2508 = vmatprep.mubr.bf16.mxu0 0
  %2509 = vmatmul.mubr.bf16.gmra.mrb[0].mxu0 %v2434
  %v2510 = vpop.f32.mrb[0].mxu0
  %v2511 = vadd.f32 0.0, %v2510
  %v2512 = vpop.f32.mrb[0].mxu0
  %v2513 = vadd.f32 0.0, %v2512
  %v2514 = vpop.f32.mrb[0].mxu0
  %v2515 = vpop.f32.mrb[0].mxu0
  %2516 = vdwg.mxu0
  %v2517 = vadd.f32 %v2430, %v2470
  %v2518 = vadd.f32 %v2431, %v2472
  %v2519 = vadd.f32 %v2432, %v2511
  %v2520 = vadd.f32 %v2433, %v2513
  %v2521 = vxor.u32 %v2517, 2147483648
  %v2522 = vmul.f32 %v2521, 1.442695
  %v2523 = vpow.pop %v2522
  %v2524 = vadd.f32 %v2523, 1.0
  %v2525 = vrcp.pop %v2524
  %v2526 = vmul.f32 1.0, %v2525
  %v2527 = vxor.u32 %v2518, 2147483648
  %v2528 = vmul.f32 %v2527, 1.442695
  %v2529 = vpow.pop %v2528
  %v2530 = vadd.f32 %v2529, 1.0
  %v2531 = vrcp.pop %v2530
  %v2532 = vmul.f32 1.0, %v2531
  %v2533 = vtanh.pop %v2519
  %v2534 = vxor.u32 %v2520, 2147483648
  %v2535 = vmul.f32 %v2534, 1.442695
  %v2536 = vpow.pop %v2535
  %v2537 = vadd.f32 %v2536, 1.0
  %v2538 = vrcp.pop %v2537
  %v2539 = vmul.f32 1.0, %v2538
  %v2540 = vmul.f32 %v2532, %v2419
  %v2541 = vmul.f32 %v2526, %v2533
  %v2542 = vadd.f32 %v2540, %v2541
  %v2543 = vtanh.pop %v2542
  %v2544 = vmul.f32 %v2539, %v2543
  %v2545 = vsel %vm647, %v2426, %v2422
  %v2546 = vsel %vm648, %v2427, %v2423
  %v2547 = vsel %vm649, %v2428, %v2424
  %v2548 = vsel %vm650, %v2429, %v2425
  %v2549 = vpack.c.bf16 %v2544, %v2544
  %2550 = vmatprep.subr.bf16.mxu0 %v2003
  %2551 = vmatpush1.bf16.msra.mxu0 %v2002
  %2552 = vmatprep.subr.bf16.mxu0 %v2007
  %2553 = vmatpush1.bf16.msra.mxu0 %v2006
  %2554 = vmatprep.subr.bf16.mxu0 %v2011
  %2555 = vmatpush1.bf16.msra.mxu0 %v2010
  %2556 = vmatprep.subr.bf16.mxu0 %v2015
  %2557 = vmatpush1.bf16.msra.mxu0 %v2014
  %2558 = vmatprep.subr.bf16.mxu0 %v2019
  %2559 = vmatpush1.bf16.msra.mxu0 %v2018
  %2560 = vmatprep.subr.bf16.mxu0 %v2023
  %2561 = vmatpush1.bf16.msra.mxu0 %v2022
  %2562 = vmatprep.subr.bf16.mxu0 %v2027
  %2563 = vmatpush1.bf16.msra.mxu0 %v2026
  %2564 = vmatprep.subr.bf16.mxu0 %v2031
  %2565 = vmatpush1.bf16.msra.mxu0 %v2030
  %2566 = vmatprep.subr.bf16.mxu0 0
  %2567 = vmatpush1.bf16.msra.mxu0 0
  %2568 = vmatprep.subr.bf16.mxu0 0
  %2569 = vmatpush1.bf16.msra.mxu0 0
  %2570 = vmatprep.subr.bf16.mxu0 0
  %2571 = vmatpush1.bf16.msra.mxu0 0
  %2572 = vmatprep.subr.bf16.mxu0 0
  %2573 = vmatpush1.bf16.msra.mxu0 0
  %2574 = vmatprep.subr.bf16.mxu0 0
  %2575 = vmatpush1.bf16.msra.mxu0 0
  %2576 = vmatprep.subr.bf16.mxu0 0
  %2577 = vmatpush1.bf16.msra.mxu0 0
  %2578 = vmatprep.subr.bf16.mxu0 0
  %2579 = vmatpush1.bf16.msra.mxu0 0
  %2580 = vmatprep.subr.bf16.mxu0 0
  %2581 = vmatpush1.bf16.msra.mxu0 0
  %2582 = vmatprep.mubr.bf16.mxu0 0
  %2583 = vmatmul.mubr.bf16.gmra.mrb[0].mxu0 %v2549
  %v2584 = vpop.f32.mrb[0].mxu0
  %v2585 = vadd.f32 0.0, %v2584
  %v2586 = vpop.f32.mrb[0].mxu0
  %v2587 = vadd.f32 0.0, %v2586
  %v2588 = vpop.f32.mrb[0].mxu0
  %v2589 = vpop.f32.mrb[0].mxu0
  %2590 = vdwg.mxu0
  %2591 = vmatprep.subr.bf16.mxu0 %v2005
  %2592 = vmatpush1.bf16.msra.mxu0 %v2004
  %2593 = vmatprep.subr.bf16.mxu0 %v2009
  %2594 = vmatpush1.bf16.msra.mxu0 %v2008
  %2595 = vmatprep.subr.bf16.mxu0 %v2013
  %2596 = vmatpush1.bf16.msra.mxu0 %v2012
  %2597 = vmatprep.subr.bf16.mxu0 %v2017
  %2598 = vmatpush1.bf16.msra.mxu0 %v2016
  %2599 = vmatprep.subr.bf16.mxu0 %v2021
  %2600 = vmatpush1.bf16.msra.mxu0 %v2020
  %2601 = vmatprep.subr.bf16.mxu0 %v2025
  %2602 = vmatpush1.bf16.msra.mxu0 %v2024
  %2603 = vmatprep.subr.bf16.mxu0 %v2029
  %2604 = vmatpush1.bf16.msra.mxu0 %v2028
  %2605 = vmatprep.subr.bf16.mxu0 %v2033
  %2606 = vmatpush1.bf16.msra.mxu0 %v2032
  %2607 = vmatprep.subr.bf16.mxu0 0
  %2608 = vmatpush1.bf16.msra.mxu0 0
  %2609 = vmatprep.subr.bf16.mxu0 0
  %2610 = vmatpush1.bf16.msra.mxu0 0
  %2611 = vmatprep.subr.bf16.mxu0 0
  %2612 = vmatpush1.bf16.msra.mxu0 0
  %2613 = vmatprep.subr.bf16.mxu0 0
  %2614 = vmatpush1.bf16.msra.mxu0 0
  %2615 = vmatprep.subr.bf16.mxu0 0
  %2616 = vmatpush1.bf16.msra.mxu0 0
  %2617 = vmatprep.subr.bf16.mxu0 0
  %2618 = vmatpush1.bf16.msra.mxu0 0
  %2619 = vmatprep.subr.bf16.mxu0 0
  %2620 = vmatpush1.bf16.msra.mxu0 0
  %2621 = vmatprep.subr.bf16.mxu0 0
  %2622 = vmatpush1.bf16.msra.mxu0 0
  %2623 = vmatprep.mubr.bf16.mxu0 0
  %2624 = vmatmul.mubr.bf16.gmra.mrb[0].mxu0 %v2549
  %v2625 = vpop.f32.mrb[0].mxu0
  %v2626 = vadd.f32 0.0, %v2625
  %v2627 = vpop.f32.mrb[0].mxu0
  %v2628 = vadd.f32 0.0, %v2627
  %v2629 = vpop.f32.mrb[0].mxu0
  %v2630 = vpop.f32.mrb[0].mxu0
  %2631 = vdwg.mxu0
  %v2632 = vadd.f32 %v2545, %v2585
  %v2633 = vadd.f32 %v2546, %v2587
  %v2634 = vadd.f32 %v2547, %v2626
  %v2635 = vadd.f32 %v2548, %v2628
  %v2636 = vxor.u32 %v2632, 2147483648
  %v2637 = vmul.f32 %v2636, 1.442695
  %v2638 = vpow.pop %v2637
  %v2639 = vadd.f32 %v2638, 1.0
  %v2640 = vrcp.pop %v2639
  %v2641 = vmul.f32 1.0, %v2640
  %v2642 = vxor.u32 %v2633, 2147483648
  %v2643 = vmul.f32 %v2642, 1.442695
  %v2644 = vpow.pop %v2643
  %v2645 = vadd.f32 %v2644, 1.0
  %v2646 = vrcp.pop %v2645
  %v2647 = vmul.f32 1.0, %v2646
  %v2648 = vtanh.pop %v2634
  %v2649 = vxor.u32 %v2635, 2147483648
  %v2650 = vmul.f32 %v2649, 1.442695
  %v2651 = vpow.pop %v2650
  %v2652 = vadd.f32 %v2651, 1.0
  %v2653 = vrcp.pop %v2652
  %v2654 = vmul.f32 1.0, %v2653
  %v2655 = vmul.f32 %v2647, %v2542
  %v2656 = vmul.f32 %v2641, %v2648
  %v2657 = vadd.f32 %v2655, %v2656
  %v2658 = vtanh.pop %v2657
  %v2659 = vmul.f32 %v2654, %v2658
  %v2660 = vsel %vm647, %v2303, %v2299
  %v2661 = vsel %vm648, %v2304, %v2300
  %v2662 = vsel %vm649, %v2305, %v2301
  %v2663 = vsel %vm650, %v2306, %v2302
  %v2664 = vpack.c.bf16 %v2659, %v2659
  %2665 = vmatprep.subr.bf16.mxu0 %v2003
  %2666 = vmatpush1.bf16.msra.mxu0 %v2002
  %2667 = vmatprep.subr.bf16.mxu0 %v2007
  %2668 = vmatpush1.bf16.msra.mxu0 %v2006
  %2669 = vmatprep.subr.bf16.mxu0 %v2011
  %2670 = vmatpush1.bf16.msra.mxu0 %v2010
  %2671 = vmatprep.subr.bf16.mxu0 %v2015
  %2672 = vmatpush1.bf16.msra.mxu0 %v2014
  %2673 = vmatprep.subr.bf16.mxu0 %v2019
  %2674 = vmatpush1.bf16.msra.mxu0 %v2018
  %2675 = vmatprep.subr.bf16.mxu0 %v2023
  %2676 = vmatpush1.bf16.msra.mxu0 %v2022
  %2677 = vmatprep.subr.bf16.mxu0 %v2027
  %2678 = vmatpush1.bf16.msra.mxu0 %v2026
  %2679 = vmatprep.subr.bf16.mxu0 %v2031
  %2680 = vmatpush1.bf16.msra.mxu0 %v2030
  %2681 = vmatprep.subr.bf16.mxu0 0
  %2682 = vmatpush1.bf16.msra.mxu0 0
  %2683 = vmatprep.subr.bf16.mxu0 0
  %2684 = vmatpush1.bf16.msra.mxu0 0
  %2685 = vmatprep.subr.bf16.mxu0 0
  %2686 = vmatpush1.bf16.msra.mxu0 0
  %2687 = vmatprep.subr.bf16.mxu0 0
  %2688 = vmatpush1.bf16.msra.mxu0 0
  %2689 = vmatprep.subr.bf16.mxu0 0
  %2690 = vmatpush1.bf16.msra.mxu0 0
  %2691 = vmatprep.subr.bf16.mxu0 0
  %2692 = vmatpush1.bf16.msra.mxu0 0
  %2693 = vmatprep.subr.bf16.mxu0 0
  %2694 = vmatpush1.bf16.msra.mxu0 0
  %2695 = vmatprep.subr.bf16.mxu0 0
  %2696 = vmatpush1.bf16.msra.mxu0 0
  %2697 = vmatprep.mubr.bf16.mxu0 0
  %2698 = vmatmul.mubr.bf16.gmra.mrb[0].mxu0 %v2664
  %v2699 = vpop.f32.mrb[0].mxu0
  %v2700 = vadd.f32 0.0, %v2699
  %v2701 = vpop.f32.mrb[0].mxu0
  %v2702 = vadd.f32 0.0, %v2701
  %v2703 = vpop.f32.mrb[0].mxu0
  %v2704 = vpop.f32.mrb[0].mxu0
  %2705 = vdwg.mxu0
  %2706 = vmatprep.subr.bf16.mxu0 %v2005
  %2707 = vmatpush1.bf16.msra.mxu0 %v2004
  %2708 = vmatprep.subr.bf16.mxu0 %v2009
  %2709 = vmatpush1.bf16.msra.mxu0 %v2008
  %2710 = vmatprep.subr.bf16.mxu0 %v2013
  %2711 = vmatpush1.bf16.msra.mxu0 %v2012
  %2712 = vmatprep.subr.bf16.mxu0 %v2017
  %2713 = vmatpush1.bf16.msra.mxu0 %v2016
  %2714 = vmatprep.subr.bf16.mxu0 %v2021
  %2715 = vmatpush1.bf16.msra.mxu0 %v2020
  %2716 = vmatprep.subr.bf16.mxu0 %v2025
  %2717 = vmatpush1.bf16.msra.mxu0 %v2024
  %2718 = vmatprep.subr.bf16.mxu0 %v2029
  %2719 = vmatpush1.bf16.msra.mxu0 %v2028
  %2720 = vmatprep.subr.bf16.mxu0 %v2033
  %2721 = vmatpush1.bf16.msra.mxu0 %v2032
  %2722 = vmatprep.subr.bf16.mxu0 0
  %2723 = vmatpush1.bf16.msra.mxu0 0
  %2724 = vmatprep.subr.bf16.mxu0 0
  %2725 = vmatpush1.bf16.msra.mxu0 0
  %2726 = vmatprep.subr.bf16.mxu0 0
  %2727 = vmatpush1.bf16.msra.mxu0 0
  %2728 = vmatprep.subr.bf16.mxu0 0
  %2729 = vmatpush1.bf16.msra.mxu0 0
  %2730 = vmatprep.subr.bf16.mxu0 0
  %2731 = vmatpush1.bf16.msra.mxu0 0
  %2732 = vmatprep.subr.bf16.mxu0 0
  %2733 = vmatpush1.bf16.msra.mxu0 0
  %2734 = vmatprep.subr.bf16.mxu0 0
  %2735 = vmatpush1.bf16.msra.mxu0 0
  %2736 = vmatprep.subr.bf16.mxu0 0
  %2737 = vmatpush1.bf16.msra.mxu0 0
  %2738 = vmatprep.mubr.bf16.mxu0 0
  %2739 = vmatmul.mubr.bf16.gmra.mrb[0].mxu0 %v2664
  %v2740 = vpop.f32.mrb[0].mxu0
  %v2741 = vadd.f32 0.0, %v2740
  %v2742 = vpop.f32.mrb[0].mxu0
  %v2743 = vadd.f32 0.0, %v2742
  %v2744 = vpop.f32.mrb[0].mxu0
  %v2745 = vpop.f32.mrb[0].mxu0
  %2746 = vdwg.mxu0
  %v2747 = vadd.f32 %v2660, %v2700
  %v2748 = vadd.f32 %v2661, %v2702
  %v2749 = vadd.f32 %v2662, %v2741
  %v2750 = vadd.f32 %v2663, %v2743
  %v2751 = vxor.u32 %v2747, 2147483648
  %v2752 = vmul.f32 %v2751, 1.442695
  %v2753 = vpow.pop %v2752
  %v2754 = vadd.f32 %v2753, 1.0
  %v2755 = vrcp.pop %v2754
  %v2756 = vmul.f32 1.0, %v2755
  %v2757 = vxor.u32 %v2748, 2147483648
  %v2758 = vmul.f32 %v2757, 1.442695
  %v2759 = vpow.pop %v2758
  %v2760 = vadd.f32 %v2759, 1.0
  %v2761 = vrcp.pop %v2760
  %v2762 = vmul.f32 1.0, %v2761
  %v2763 = vtanh.pop %v2749
  %v2764 = vxor.u32 %v2750, 2147483648
  %v2765 = vmul.f32 %v2764, 1.442695
  %v2766 = vpow.pop %v2765
  %v2767 = vadd.f32 %v2766, 1.0
  %v2768 = vrcp.pop %v2767
  %v2769 = vmul.f32 1.0, %v2768
  %v2770 = vmul.f32 %v2762, %v2657
  %v2771 = vmul.f32 %v2756, %v2763
  %v2772 = vadd.f32 %v2770, %v2771
  %v2773 = vtanh.pop %v2772
  %v2774 = vmul.f32 %v2769, %v2773
  %v2775 = vsel %vm647, %v2180, %v2176
  %v2776 = vsel %vm648, %v2181, %v2177
  %v2777 = vsel %vm649, %v2182, %v2178
  %v2778 = vsel %vm650, %v2183, %v2179
  %v2779 = vpack.c.bf16 %v2774, %v2774
  %2780 = vmatprep.subr.bf16.mxu0 %v2003
  %2781 = vmatpush1.bf16.msra.mxu0 %v2002
  %2782 = vmatprep.subr.bf16.mxu0 %v2007
  %2783 = vmatpush1.bf16.msra.mxu0 %v2006
  %2784 = vmatprep.subr.bf16.mxu0 %v2011
  %2785 = vmatpush1.bf16.msra.mxu0 %v2010
  %2786 = vmatprep.subr.bf16.mxu0 %v2015
  %2787 = vmatpush1.bf16.msra.mxu0 %v2014
  %2788 = vmatprep.subr.bf16.mxu0 %v2019
  %2789 = vmatpush1.bf16.msra.mxu0 %v2018
  %2790 = vmatprep.subr.bf16.mxu0 %v2023
  %2791 = vmatpush1.bf16.msra.mxu0 %v2022
  %2792 = vmatprep.subr.bf16.mxu0 %v2027
  %2793 = vmatpush1.bf16.msra.mxu0 %v2026
  %2794 = vmatprep.subr.bf16.mxu0 %v2031
  %2795 = vmatpush1.bf16.msra.mxu0 %v2030
  %2796 = vmatprep.subr.bf16.mxu0 0
  %2797 = vmatpush1.bf16.msra.mxu0 0
  %2798 = vmatprep.subr.bf16.mxu0 0
  %2799 = vmatpush1.bf16.msra.mxu0 0
  %2800 = vmatprep.subr.bf16.mxu0 0
  %2801 = vmatpush1.bf16.msra.mxu0 0
  %2802 = vmatprep.subr.bf16.mxu0 0
  %2803 = vmatpush1.bf16.msra.mxu0 0
  %2804 = vmatprep.subr.bf16.mxu0 0
  %2805 = vmatpush1.bf16.msra.mxu0 0
  %2806 = vmatprep.subr.bf16.mxu0 0
  %2807 = vmatpush1.bf16.msra.mxu0 0
  %2808 = vmatprep.subr.bf16.mxu0 0
  %2809 = vmatpush1.bf16.msra.mxu0 0
  %2810 = vmatprep.subr.bf16.mxu0 0
  %2811 = vmatpush1.bf16.msra.mxu0 0
  %2812 = vmatprep.mubr.bf16.mxu0 0
  %2813 = vmatmul.mubr.bf16.gmra.mrb[0].mxu0 %v2779
  %v2814 = vpop.f32.mrb[0].mxu0
  %v2815 = vadd.f32 0.0, %v2814
  %v2816 = vpop.f32.mrb[0].mxu0
  %v2817 = vadd.f32 0.0, %v2816
  %v2818 = vpop.f32.mrb[0].mxu0
  %v2819 = vpop.f32.mrb[0].mxu0
  %2820 = vdwg.mxu0
  %2821 = vmatprep.subr.bf16.mxu0 %v2005
  %2822 = vmatpush1.bf16.msra.mxu0 %v2004
  %2823 = vmatprep.subr.bf16.mxu0 %v2009
  %2824 = vmatpush1.bf16.msra.mxu0 %v2008
  %2825 = vmatprep.subr.bf16.mxu0 %v2013
  %2826 = vmatpush1.bf16.msra.mxu0 %v2012
  %2827 = vmatprep.subr.bf16.mxu0 %v2017
  %2828 = vmatpush1.bf16.msra.mxu0 %v2016
  %2829 = vmatprep.subr.bf16.mxu0 %v2021
  %2830 = vmatpush1.bf16.msra.mxu0 %v2020
  %2831 = vmatprep.subr.bf16.mxu0 %v2025
  %2832 = vmatpush1.bf16.msra.mxu0 %v2024
  %2833 = vmatprep.subr.bf16.mxu0 %v2029
  %2834 = vmatpush1.bf16.msra.mxu0 %v2028
  %2835 = vmatprep.subr.bf16.mxu0 %v2033
  %2836 = vmatpush1.bf16.msra.mxu0 %v2032
  %2837 = vmatprep.subr.bf16.mxu0 0
  %2838 = vmatpush1.bf16.msra.mxu0 0
  %2839 = vmatprep.subr.bf16.mxu0 0
  %2840 = vmatpush1.bf16.msra.mxu0 0
  %2841 = vmatprep.subr.bf16.mxu0 0
  %2842 = vmatpush1.bf16.msra.mxu0 0
  %2843 = vmatprep.subr.bf16.mxu0 0
  %2844 = vmatpush1.bf16.msra.mxu0 0
  %2845 = vmatprep.subr.bf16.mxu0 0
  %2846 = vmatpush1.bf16.msra.mxu0 0
  %2847 = vmatprep.subr.bf16.mxu0 0
  %2848 = vmatpush1.bf16.msra.mxu0 0
  %2849 = vmatprep.subr.bf16.mxu0 0
  %2850 = vmatpush1.bf16.msra.mxu0 0
  %2851 = vmatprep.subr.bf16.mxu0 0
  %2852 = vmatpush1.bf16.msra.mxu0 0
  %2853 = vmatprep.mubr.bf16.mxu0 0
  %2854 = vmatmul.mubr.bf16.gmra.mrb[0].mxu0 %v2779
  %v2855 = vpop.f32.mrb[0].mxu0
  %v2856 = vadd.f32 0.0, %v2855
  %v2857 = vpop.f32.mrb[0].mxu0
  %v2858 = vadd.f32 0.0, %v2857
  %v2859 = vpop.f32.mrb[0].mxu0
  %v2860 = vpop.f32.mrb[0].mxu0
  %2861 = vdwg.mxu0
  %v2862 = vadd.f32 %v2775, %v2815
  %v2863 = vadd.f32 %v2776, %v2817
  %v2864 = vadd.f32 %v2777, %v2856
  %v2865 = vadd.f32 %v2778, %v2858
  %v2866 = vxor.u32 %v2862, 2147483648
  %v2867 = vmul.f32 %v2866, 1.442695
  %v2868 = vpow.pop %v2867
  %v2869 = vadd.f32 %v2868, 1.0
  %v2870 = vrcp.pop %v2869
  %v2871 = vmul.f32 1.0, %v2870
  %v2872 = vxor.u32 %v2863, 2147483648
  %v2873 = vmul.f32 %v2872, 1.442695
  %v2874 = vpow.pop %v2873
  %v2875 = vadd.f32 %v2874, 1.0
  %v2876 = vrcp.pop %v2875
  %v2877 = vmul.f32 1.0, %v2876
  %v2878 = vtanh.pop %v2864
  %v2879 = vxor.u32 %v2865, 2147483648
  %v2880 = vmul.f32 %v2879, 1.442695
  %v2881 = vpow.pop %v2880
  %v2882 = vadd.f32 %v2881, 1.0
  %v2883 = vrcp.pop %v2882
  %v2884 = vmul.f32 1.0, %v2883
  %v2885 = vmul.f32 %v2877, %v2772
  %v2886 = vmul.f32 %v2871, %v2878
  %v2887 = vadd.f32 %v2885, %v2886
  %v2888 = vtanh.pop %v2887
  %v2889 = vmul.f32 %v2884, %v2888
  %v2890 = vsel %vm647, %v1898, %v1894
  %v2891 = vsel %vm648, %v1899, %v1895
  %v2892 = vsel %vm649, %v1900, %v1896
  %v2893 = vsel %vm650, %v1901, %v1897
  %v2894 = vpack.c.bf16 %v2889, %v2889
  %2895 = vmatprep.subr.bf16.mxu0 %v2003
  %2896 = vmatpush1.bf16.msra.mxu0 %v2002
  %2897 = vmatprep.subr.bf16.mxu0 %v2007
  %2898 = vmatpush1.bf16.msra.mxu0 %v2006
  %2899 = vmatprep.subr.bf16.mxu0 %v2011
  %2900 = vmatpush1.bf16.msra.mxu0 %v2010
  %2901 = vmatprep.subr.bf16.mxu0 %v2015
  %2902 = vmatpush1.bf16.msra.mxu0 %v2014
  %2903 = vmatprep.subr.bf16.mxu0 %v2019
  %2904 = vmatpush1.bf16.msra.mxu0 %v2018
  %2905 = vmatprep.subr.bf16.mxu0 %v2023
  %2906 = vmatpush1.bf16.msra.mxu0 %v2022
  %2907 = vmatprep.subr.bf16.mxu0 %v2027
  %2908 = vmatpush1.bf16.msra.mxu0 %v2026
  %2909 = vmatprep.subr.bf16.mxu0 %v2031
  %2910 = vmatpush1.bf16.msra.mxu0 %v2030
  %2911 = vmatprep.subr.bf16.mxu0 0
  %2912 = vmatpush1.bf16.msra.mxu0 0
  %2913 = vmatprep.subr.bf16.mxu0 0
  %2914 = vmatpush1.bf16.msra.mxu0 0
  %2915 = vmatprep.subr.bf16.mxu0 0
  %2916 = vmatpush1.bf16.msra.mxu0 0
  %2917 = vmatprep.subr.bf16.mxu0 0
  %2918 = vmatpush1.bf16.msra.mxu0 0
  %2919 = vmatprep.subr.bf16.mxu0 0
  %2920 = vmatpush1.bf16.msra.mxu0 0
  %2921 = vmatprep.subr.bf16.mxu0 0
  %2922 = vmatpush1.bf16.msra.mxu0 0
  %2923 = vmatprep.subr.bf16.mxu0 0
  %2924 = vmatpush1.bf16.msra.mxu0 0
  %2925 = vmatprep.subr.bf16.mxu0 0
  %2926 = vmatpush1.bf16.msra.mxu0 0
  %2927 = vmatprep.mubr.bf16.mxu0 0
  %2928 = vmatmul.mubr.bf16.gmra.mrb[0].mxu0 %v2894
  %v2929 = vpop.f32.mrb[0].mxu0
  %v2930 = vadd.f32 0.0, %v2929
  %v2931 = vpop.f32.mrb[0].mxu0
  %v2932 = vadd.f32 0.0, %v2931
  %v2933 = vpop.f32.mrb[0].mxu0
  %v2934 = vpop.f32.mrb[0].mxu0
  %2935 = vdwg.mxu0
  %2936 = vmatprep.subr.bf16.mxu0 %v2005
  %2937 = vmatpush1.bf16.msra.mxu0 %v2004
  %2938 = vmatprep.subr.bf16.mxu0 %v2009
  %2939 = vmatpush1.bf16.msra.mxu0 %v2008
  %2940 = vmatprep.subr.bf16.mxu0 %v2013
  %2941 = vmatpush1.bf16.msra.mxu0 %v2012
  %2942 = vmatprep.subr.bf16.mxu0 %v2017
  %2943 = vmatpush1.bf16.msra.mxu0 %v2016
  %2944 = vmatprep.subr.bf16.mxu0 %v2021
  %2945 = vmatpush1.bf16.msra.mxu0 %v2020
  %2946 = vmatprep.subr.bf16.mxu0 %v2025
  %2947 = vmatpush1.bf16.msra.mxu0 %v2024
  %2948 = vmatprep.subr.bf16.mxu0 %v2029
  %2949 = vmatpush1.bf16.msra.mxu0 %v2028
  %2950 = vmatprep.subr.bf16.mxu0 %v2033
  %2951 = vmatpush1.bf16.msra.mxu0 %v2032
  %2952 = vmatprep.subr.bf16.mxu0 0
  %2953 = vmatpush1.bf16.msra.mxu0 0
  %2954 = vmatprep.subr.bf16.mxu0 0
  %2955 = vmatpush1.bf16.msra.mxu0 0
  %2956 = vmatprep.subr.bf16.mxu0 0
  %2957 = vmatpush1.bf16.msra.mxu0 0
  %2958 = vmatprep.subr.bf16.mxu0 0
  %2959 = vmatpush1.bf16.msra.mxu0 0
  %2960 = vmatprep.subr.bf16.mxu0 0
  %2961 = vmatpush1.bf16.msra.mxu0 0
  %2962 = vmatprep.subr.bf16.mxu0 0
  %2963 = vmatpush1.bf16.msra.mxu0 0
  %2964 = vmatprep.subr.bf16.mxu0 0
  %2965 = vmatpush1.bf16.msra.mxu0 0
  %2966 = vmatprep.subr.bf16.mxu0 0
  %2967 = vmatpush1.bf16.msra.mxu0 0
  %2968 = vmatprep.mubr.bf16.mxu0 0
  %2969 = vmatmul.mubr.bf16.gmra.mrb[0].mxu0 %v2894
  %v2970 = vpop.f32.mrb[0].mxu0
  %v2971 = vadd.f32 0.0, %v2970
  %v2972 = vpop.f32.mrb[0].mxu0
  %v2973 = vadd.f32 0.0, %v2972
  %v2974 = vpop.f32.mrb[0].mxu0
  %v2975 = vpop.f32.mrb[0].mxu0
  %2976 = vdwg.mxu0
  %v2977 = vadd.f32 %v2890, %v2930
  %v2978 = vadd.f32 %v2891, %v2932
  %v2979 = vadd.f32 %v2892, %v2971
  %v2980 = vadd.f32 %v2893, %v2973
  %v2981 = vxor.u32 %v2977, 2147483648
  %v2982 = vmul.f32 %v2981, 1.442695
  %v2983 = vpow.pop %v2982
  %v2984 = vadd.f32 %v2983, 1.0
  %v2985 = vrcp.pop %v2984
  %v2986 = vmul.f32 1.0, %v2985
  %v2987 = vxor.u32 %v2978, 2147483648
  %v2988 = vmul.f32 %v2987, 1.442695
  %v2989 = vpow.pop %v2988
  %v2990 = vadd.f32 %v2989, 1.0
  %v2991 = vrcp.pop %v2990
  %v2992 = vmul.f32 1.0, %v2991
  %v2993 = vtanh.pop %v2979
  %v2994 = vxor.u32 %v2980, 2147483648
  %v2995 = vmul.f32 %v2994, 1.442695
  %v2996 = vpow.pop %v2995
  %v2997 = vadd.f32 %v2996, 1.0
  %v2998 = vrcp.pop %v2997
  %v2999 = vmul.f32 1.0, %v2998
  %v3000 = vmul.f32 %v2992, %v2887
  %v3001 = vmul.f32 %v2986, %v2993
  %v3002 = vadd.f32 %v3000, %v3001
  %v3003 = vtanh.pop %v3002
  %v3004 = vmul.f32 %v2999, %v3003
  %v3005 = vsel %vm651, %v2175, %v3004
  %v3006 = vsel %vm651, %v2298, %v2889
  %v3007 = vsel %vm651, %v2421, %v2774
  %v3008 = vsel %vm651, %v2544, %v2659
  %v3009 = vsel %vm651, %v2659, %v2544
  %v3010 = vsel %vm651, %v2774, %v2421
  %v3011 = vsel %vm651, %v2889, %v2298
  %v3012 = vsel %vm651, %v3004, %v2175
  %s3013 = smul.u32 4, 16
  %s3014 = smul.u32 %s3013, 4
  %s3015 = sshll.u32 %s3014, 4
  %3016 = dma.done [#allocation6], %s3015
  %s3017 = sshll.u32 %s3014, 4
  %3018 = dma.done %s333, %s3017
  %v3019 = vpack.c.bf16 %v3006, %v3005
  %v3020 = vpack.c.bf16 %v3008, %v3007
  %v3021 = vpack.c.bf16 %v3010, %v3009
  %v3022 = vpack.c.bf16 %v3012, %v3011
  %v3023 = vld [vmem:[#allocation4] sm:$0xff]
  %v3024 = vld [vmem:[#allocation4 + $0x8] sm:$0xff]
  %v3025 = vld [vmem:[#allocation4 + $0x10] sm:$0xff]
  %v3026 = vld [vmem:[#allocation4 + $0x18] sm:$0xff]
  %v3027 = vld [vmem:[#allocation4 + $0x20] sm:$0xff]
  %v3028 = vld [vmem:[#allocation4 + $0x28] sm:$0xff]
  %v3029 = vld [vmem:[#allocation4 + $0x30] sm:$0xff]
  %v3030 = vld [vmem:[#allocation4 + $0x38] sm:$0xff]
  %v3031 = vld [vmem:[#allocation4 + $0x40] sm:$0xff]
  %v3032 = vld [vmem:[#allocation4 + $0x48] sm:$0xff]
  %v3033 = vld [vmem:[#allocation4 + $0x50] sm:$0xff]
  %v3034 = vld [vmem:[#allocation4 + $0x58] sm:$0xff]
  %v3035 = vld [vmem:[#allocation4 + $0x60] sm:$0xff]
  %v3036 = vld [vmem:[#allocation4 + $0x68] sm:$0xff]
  %v3037 = vld [vmem:[#allocation4 + $0x70] sm:$0xff]
  %v3038 = vld [vmem:[#allocation4 + $0x78] sm:$0xff]
  %v3039 = vld [vmem:[#allocation4 + $0x80] sm:$0xff]
  %v3040 = vld [vmem:[#allocation4 + $0x88] sm:$0xff]
  %v3041 = vld [vmem:[#allocation4 + $0x90] sm:$0xff]
  %v3042 = vld [vmem:[#allocation4 + $0x98] sm:$0xff]
  %v3043 = vld [vmem:[#allocation4 + $0xa0] sm:$0xff]
  %v3044 = vld [vmem:[#allocation4 + $0xa8] sm:$0xff]
  %v3045 = vld [vmem:[#allocation4 + $0xb0] sm:$0xff]
  %v3046 = vld [vmem:[#allocation4 + $0xb8] sm:$0xff]
  %v3047 = vld [vmem:[#allocation4 + $0xc0] sm:$0xff]
  %v3048 = vld [vmem:[#allocation4 + $0xc8] sm:$0xff]
  %v3049 = vld [vmem:[#allocation4 + $0xd0] sm:$0xff]
  %v3050 = vld [vmem:[#allocation4 + $0xd8] sm:$0xff]
  %v3051 = vld [vmem:[#allocation4 + $0xe0] sm:$0xff]
  %v3052 = vld [vmem:[#allocation4 + $0xe8] sm:$0xff]
  %v3053 = vld [vmem:[#allocation4 + $0xf0] sm:$0xff]
  %v3054 = vld [vmem:[#allocation4 + $0xf8] sm:$0xff]
  %v3055 = vld [vmem:[%s5] sm:$0xf]
  %v3057 = vlaneseq
  %v3058 = vshrl.u32 %v3057, 7
  %v3059 = vsub.s32 0, %v3058
  %v3060 = vrot.slane %v3055, %v3059
  %v3061 = vlaneseq
  %v3062 = vshrl.u32 %v3061, 7
  %v3063 = vsub.s32 1, %v3062
  %v3064 = vrot.slane %v3055, %v3063
  %v3065 = vlaneseq
  %v3066 = vshrl.u32 %v3065, 7
  %v3067 = vsub.s32 2, %v3066
  %v3068 = vrot.slane %v3055, %v3067
  %v3069 = vlaneseq
  %v3070 = vshrl.u32 %v3069, 7
  %v3071 = vsub.s32 3, %v3070
  %v3072 = vrot.slane %v3055, %v3071
  %3077 = vmatprep.subr.bf16.mxu0 %v3024
  %3078 = vmatpush1.bf16.msra.mxu0 %v3023
  %3079 = vmatprep.subr.bf16.mxu0 %v3028
  %3080 = vmatpush1.bf16.msra.mxu0 %v3027
  %3081 = vmatprep.subr.bf16.mxu0 %v3032
  %3082 = vmatpush1.bf16.msra.mxu0 %v3031
  %3083 = vmatprep.subr.bf16.mxu0 %v3036
  %3084 = vmatpush1.bf16.msra.mxu0 %v3035
  %3085 = vmatprep.subr.bf16.mxu0 %v3040
  %3086 = vmatpush1.bf16.msra.mxu0 %v3039
  %3087 = vmatprep.subr.bf16.mxu0 %v3044
  %3088 = vmatpush1.bf16.msra.mxu0 %v3043
  %3089 = vmatprep.subr.bf16.mxu0 %v3048
  %3090 = vmatpush1.bf16.msra.mxu0 %v3047
  %3091 = vmatprep.subr.bf16.mxu0 %v3052
  %3092 = vmatpush1.bf16.msra.mxu0 %v3051
  %3093 = vmatprep.subr.bf16.mxu0 0
  %3094 = vmatpush1.bf16.msra.mxu0 0
  %3095 = vmatprep.subr.bf16.mxu0 0
  %3096 = vmatpush1.bf16.msra.mxu0 0
  %3097 = vmatprep.subr.bf16.mxu0 0
  %3098 = vmatpush1.bf16.msra.mxu0 0
  %3099 = vmatprep.subr.bf16.mxu0 0
  %3100 = vmatpush1.bf16.msra.mxu0 0
  %3101 = vmatprep.subr.bf16.mxu0 0
  %3102 = vmatpush1.bf16.msra.mxu0 0
  %3103 = vmatprep.subr.bf16.mxu0 0
  %3104 = vmatpush1.bf16.msra.mxu0 0
  %3105 = vmatprep.subr.bf16.mxu0 0
  %3106 = vmatpush1.bf16.msra.mxu0 0
  %3107 = vmatprep.subr.bf16.mxu0 0
  %3108 = vmatpush1.bf16.msra.mxu0 0
  %3109 = vmatprep.mubr.bf16.mxu0 0
  %3110 = vmatmul.mubr.bf16.gmra.mrb[0].mxu0 %v3019
  %v3111 = vpop.f32.mrb[0].mxu0
  %v3112 = vadd.f32 %v3060, %v3111
  %v3113 = vpop.f32.mrb[0].mxu0
  %v3114 = vadd.f32 %v3064, %v3113
  %v3115 = vpop.f32.mrb[0].mxu0
  %v3116 = vadd.f32 %v3060, %v3115
  %v3117 = vpop.f32.mrb[0].mxu0
  %v3118 = vadd.f32 %v3064, %v3117
  %3119 = vmatprep.mubr.bf16.mxu0 0
  %3120 = vmatmul.mubr.bf16.gmra.mrb[0].mxu0 %v3020
  %v3121 = vpop.f32.mrb[0].mxu0
  %v3122 = vadd.f32 %v3060, %v3121
  %v3123 = vpop.f32.mrb[0].mxu0
  %v3124 = vadd.f32 %v3064, %v3123
  %v3125 = vpop.f32.mrb[0].mxu0
  %v3126 = vadd.f32 %v3060, %v3125
  %v3127 = vpop.f32.mrb[0].mxu0
  %v3128 = vadd.f32 %v3064, %v3127
  %3129 = vmatprep.mubr.bf16.mxu0 0
  %3130 = vmatmul.mubr.bf16.gmra.mrb[0].mxu0 %v3021
  %v3131 = vpop.f32.mrb[0].mxu0
  %v3132 = vadd.f32 %v3060, %v3131
  %v3133 = vpop.f32.mrb[0].mxu0
  %v3134 = vadd.f32 %v3064, %v3133
  %v3135 = vpop.f32.mrb[0].mxu0
  %v3136 = vadd.f32 %v3060, %v3135
  %v3137 = vpop.f32.mrb[0].mxu0
  %v3138 = vadd.f32 %v3064, %v3137
  %3139 = vmatprep.mubr.bf16.mxu0 0
  %3140 = vmatmul.mubr.bf16.gmra.mrb[0].mxu0 %v3022
  %v3141 = vpop.f32.mrb[0].mxu0
  %v3142 = vadd.f32 %v3060, %v3141
  %v3143 = vpop.f32.mrb[0].mxu0
  %v3144 = vadd.f32 %v3064, %v3143
  %v3145 = vpop.f32.mrb[0].mxu0
  %v3146 = vadd.f32 %v3060, %v3145
  %v3147 = vpop.f32.mrb[0].mxu0
  %v3148 = vadd.f32 %v3064, %v3147
  %3149 = vdwg.mxu0
  %3150 = vmatprep.subr.bf16.mxu0 %v3026
  %3151 = vmatpush1.bf16.msra.mxu0 %v3025
  %3152 = vmatprep.subr.bf16.mxu0 %v3030
  %3153 = vmatpush1.bf16.msra.mxu0 %v3029
  %3154 = vmatprep.subr.bf16.mxu0 %v3034
  %3155 = vmatpush1.bf16.msra.mxu0 %v3033
  %3156 = vmatprep.subr.bf16.mxu0 %v3038
  %3157 = vmatpush1.bf16.msra.mxu0 %v3037
  %3158 = vmatprep.subr.bf16.mxu0 %v3042
  %3159 = vmatpush1.bf16.msra.mxu0 %v3041
  %3160 = vmatprep.subr.bf16.mxu0 %v3046
  %3161 = vmatpush1.bf16.msra.mxu0 %v3045
  %3162 = vmatprep.subr.bf16.mxu0 %v3050
  %3163 = vmatpush1.bf16.msra.mxu0 %v3049
  %3164 = vmatprep.subr.bf16.mxu0 %v3054
  %3165 = vmatpush1.bf16.msra.mxu0 %v3053
  %3166 = vmatprep.subr.bf16.mxu0 0
  %3167 = vmatpush1.bf16.msra.mxu0 0
  %3168 = vmatprep.subr.bf16.mxu0 0
  %3169 = vmatpush1.bf16.msra.mxu0 0
  %3170 = vmatprep.subr.bf16.mxu0 0
  %3171 = vmatpush1.bf16.msra.mxu0 0
  %3172 = vmatprep.subr.bf16.mxu0 0
  %3173 = vmatpush1.bf16.msra.mxu0 0
  %3174 = vmatprep.subr.bf16.mxu0 0
  %3175 = vmatpush1.bf16.msra.mxu0 0
  %3176 = vmatprep.subr.bf16.mxu0 0
  %3177 = vmatpush1.bf16.msra.mxu0 0
  %3178 = vmatprep.subr.bf16.mxu0 0
  %3179 = vmatpush1.bf16.msra.mxu0 0
  %3180 = vmatprep.subr.bf16.mxu0 0
  %3181 = vmatpush1.bf16.msra.mxu0 0
  %3182 = vmatprep.mubr.bf16.mxu0 0
  %3183 = vmatmul.mubr.bf16.gmra.mrb[0].mxu0 %v3019
  %v3184 = vpop.f32.mrb[0].mxu0
  %v3185 = vadd.f32 %v3068, %v3184
  %v3186 = vpop.f32.mrb[0].mxu0
  %v3187 = vadd.f32 %v3072, %v3186
  %v3188 = vpop.f32.mrb[0].mxu0
  %v3189 = vadd.f32 %v3068, %v3188
  %v3190 = vpop.f32.mrb[0].mxu0
  %v3191 = vadd.f32 %v3072, %v3190
  %3192 = vmatprep.mubr.bf16.mxu0 0
  %3193 = vmatmul.mubr.bf16.gmra.mrb[0].mxu0 %v3020
  %v3194 = vpop.f32.mrb[0].mxu0
  %v3195 = vadd.f32 %v3068, %v3194
  %v3196 = vpop.f32.mrb[0].mxu0
  %v3197 = vadd.f32 %v3072, %v3196
  %v3198 = vpop.f32.mrb[0].mxu0
  %v3199 = vadd.f32 %v3068, %v3198
  %v3200 = vpop.f32.mrb[0].mxu0
  %v3201 = vadd.f32 %v3072, %v3200
  %3202 = vmatprep.mubr.bf16.mxu0 0
  %3203 = vmatmul.mubr.bf16.gmra.mrb[0].mxu0 %v3021
  %v3204 = vpop.f32.mrb[0].mxu0
  %v3205 = vadd.f32 %v3068, %v3204
  %v3206 = vpop.f32.mrb[0].mxu0
  %v3207 = vadd.f32 %v3072, %v3206
  %v3208 = vpop.f32.mrb[0].mxu0
  %v3209 = vadd.f32 %v3068, %v3208
  %v3210 = vpop.f32.mrb[0].mxu0
  %v3211 = vadd.f32 %v3072, %v3210
  %3212 = vmatprep.mubr.bf16.mxu0 0
  %3213 = vmatmul.mubr.bf16.gmra.mrb[0].mxu0 %v3022
  %v3214 = vpop.f32.mrb[0].mxu0
  %v3215 = vadd.f32 %v3068, %v3214
  %v3216 = vpop.f32.mrb[0].mxu0
  %v3217 = vadd.f32 %v3072, %v3216
  %v3218 = vpop.f32.mrb[0].mxu0
  %v3219 = vadd.f32 %v3068, %v3218
  %v3220 = vpop.f32.mrb[0].mxu0
  %v3221 = vadd.f32 %v3072, %v3220
  %3222 = vdwg.mxu0
  %3223 = vst [vmem:[#allocation3] sm:$0xff] %v3112
  %3224 = vst [vmem:[#allocation3 + $0x8] sm:$0xff] %v3114
  %3225 = vst [vmem:[#allocation3 + $0x10] sm:$0xff] %v3185
  %3226 = vst [vmem:[#allocation3 + $0x18] sm:$0xff] %v3187
  %3227 = vst [vmem:[#allocation3 + $0x20] sm:$0xff] %v3116
  %3228 = vst [vmem:[#allocation3 + $0x28] sm:$0xff] %v3118
  %3229 = vst [vmem:[#allocation3 + $0x30] sm:$0xff] %v3189
  %3230 = vst [vmem:[#allocation3 + $0x38] sm:$0xff] %v3191
  %3231 = vst [vmem:[#allocation3 + $0x40] sm:$0xff] %v3122
  %3232 = vst [vmem:[#allocation3 + $0x48] sm:$0xff] %v3124
  %3233 = vst [vmem:[#allocation3 + $0x50] sm:$0xff] %v3195
  %3234 = vst [vmem:[#allocation3 + $0x58] sm:$0xff] %v3197
  %3235 = vst [vmem:[#allocation3 + $0x60] sm:$0xff] %v3126
  %3236 = vst [vmem:[#allocation3 + $0x68] sm:$0xff] %v3128
  %3237 = vst [vmem:[#allocation3 + $0x70] sm:$0xff] %v3199
  %3238 = vst [vmem:[#allocation3 + $0x78] sm:$0xff] %v3201
  %3239 = vst [vmem:[#allocation3 + $0x80] sm:$0xff] %v3132
  %3240 = vst [vmem:[#allocation3 + $0x88] sm:$0xff] %v3134
  %3241 = vst [vmem:[#allocation3 + $0x90] sm:$0xff] %v3205
  %3242 = vst [vmem:[#allocation3 + $0x98] sm:$0xff] %v3207
  %3243 = vst [vmem:[#allocation3 + $0xa0] sm:$0xff] %v3136
  %3244 = vst [vmem:[#allocation3 + $0xa8] sm:$0xff] %v3138
  %3245 = vst [vmem:[#allocation3 + $0xb0] sm:$0xff] %v3209
  %3246 = vst [vmem:[#allocation3 + $0xb8] sm:$0xff] %v3211
  %3247 = vst [vmem:[#allocation3 + $0xc0] sm:$0xff] %v3142
  %3248 = vst [vmem:[#allocation3 + $0xc8] sm:$0xff] %v3144
  %3249 = vst [vmem:[#allocation3 + $0xd0] sm:$0xff] %v3215
  %3250 = vst [vmem:[#allocation3 + $0xd8] sm:$0xff] %v3217
  %3251 = vst [vmem:[#allocation3 + $0xe0] sm:$0xff] %v3146
  %3252 = vst [vmem:[#allocation3 + $0xe8] sm:$0xff] %v3148
  %3253 = vst [vmem:[#allocation3 + $0xf0] sm:$0xff] %v3219
  %3254 = vst [vmem:[#allocation3 + $0xf8] sm:$0xff] %v3221
  %v3255 = vld [vmem:[#allocation5] sm:$0xff]
  %v3256 = vld [vmem:[#allocation5 + $0x8] sm:$0xff]
  %v3257 = vld [vmem:[#allocation5 + $0x10] sm:$0xff]
  %v3258 = vld [vmem:[#allocation5 + $0x18] sm:$0xff]
  %v3259 = vld [vmem:[#allocation5 + $0x20] sm:$0xff]
  %v3260 = vld [vmem:[#allocation5 + $0x28] sm:$0xff]
  %v3261 = vld [vmem:[#allocation5 + $0x30] sm:$0xff]
  %v3262 = vld [vmem:[#allocation5 + $0x38] sm:$0xff]
  %v3263 = vld [vmem:[#allocation5 + $0x40] sm:$0xff]
  %v3264 = vld [vmem:[#allocation5 + $0x48] sm:$0xff]
  %v3265 = vld [vmem:[#allocation5 + $0x50] sm:$0xff]
  %v3266 = vld [vmem:[#allocation5 + $0x58] sm:$0xff]
  %v3267 = vld [vmem:[#allocation5 + $0x60] sm:$0xff]
  %v3268 = vld [vmem:[#allocation5 + $0x68] sm:$0xff]
  %v3269 = vld [vmem:[#allocation5 + $0x70] sm:$0xff]
  %v3270 = vld [vmem:[#allocation5 + $0x78] sm:$0xff]
  %v3271 = vld [vmem:[#allocation5 + $0x80] sm:$0xff]
  %v3272 = vld [vmem:[#allocation5 + $0x88] sm:$0xff]
  %v3273 = vld [vmem:[#allocation5 + $0x90] sm:$0xff]
  %v3274 = vld [vmem:[#allocation5 + $0x98] sm:$0xff]
  %v3275 = vld [vmem:[#allocation5 + $0xa0] sm:$0xff]
  %v3276 = vld [vmem:[#allocation5 + $0xa8] sm:$0xff]
  %v3277 = vld [vmem:[#allocation5 + $0xb0] sm:$0xff]
  %v3278 = vld [vmem:[#allocation5 + $0xb8] sm:$0xff]
  %v3279 = vld [vmem:[#allocation5 + $0xc0] sm:$0xff]
  %v3280 = vld [vmem:[#allocation5 + $0xc8] sm:$0xff]
  %v3281 = vld [vmem:[#allocation5 + $0xd0] sm:$0xff]
  %v3282 = vld [vmem:[#allocation5 + $0xd8] sm:$0xff]
  %v3283 = vld [vmem:[#allocation5 + $0xe0] sm:$0xff]
  %v3284 = vld [vmem:[#allocation5 + $0xe8] sm:$0xff]
  %v3285 = vld [vmem:[#allocation5 + $0xf0] sm:$0xff]
  %v3286 = vld [vmem:[#allocation5 + $0xf8] sm:$0xff]
  %v3287 = vld [vmem:[#allocation3] sm:$0xff]
  %v3288 = vld [vmem:[#allocation3 + $0x8] sm:$0xff]
  %v3289 = vld [vmem:[#allocation3 + $0x10] sm:$0xff]
  %v3290 = vld [vmem:[#allocation3 + $0x18] sm:$0xff]
  %v3291 = vld [vmem:[#allocation3 + $0xe0] sm:$0xff]
  %v3292 = vld [vmem:[#allocation3 + $0xe8] sm:$0xff]
  %v3293 = vld [vmem:[#allocation3 + $0xf0] sm:$0xff]
  %v3294 = vld [vmem:[#allocation3 + $0xf8] sm:$0xff]
  %v3295 = vsel %vm647, %v3287, %v3291
  %v3296 = vsel %vm648, %v3288, %v3292
  %v3297 = vsel %vm649, %v3289, %v3293
  %v3298 = vsel %vm650, %v3290, %v3294
  %3299 = vmatprep.subr.bf16.mxu0 %v3256
  %3300 = vmatpush1.bf16.msra.mxu0 %v3255
  %3301 = vmatprep.subr.bf16.mxu0 %v3260
  %3302 = vmatpush1.bf16.msra.mxu0 %v3259
  %3303 = vmatprep.subr.bf16.mxu0 %v3264
  %3304 = vmatpush1.bf16.msra.mxu0 %v3263
  %3305 = vmatprep.subr.bf16.mxu0 %v3268
  %3306 = vmatpush1.bf16.msra.mxu0 %v3267
  %3307 = vmatprep.subr.bf16.mxu0 %v3272
  %3308 = vmatpush1.bf16.msra.mxu0 %v3271
  %3309 = vmatprep.subr.bf16.mxu0 %v3276
  %3310 = vmatpush1.bf16.msra.mxu0 %v3275
  %3311 = vmatprep.subr.bf16.mxu0 %v3280
  %3312 = vmatpush1.bf16.msra.mxu0 %v3279
  %3313 = vmatprep.subr.bf16.mxu0 %v3284
  %3314 = vmatpush1.bf16.msra.mxu0 %v3283
  %3315 = vmatprep.subr.bf16.mxu0 0
  %3316 = vmatpush1.bf16.msra.mxu0 0
  %3317 = vmatprep.subr.bf16.mxu0 0
  %3318 = vmatpush1.bf16.msra.mxu0 0
  %3319 = vmatprep.subr.bf16.mxu0 0
  %3320 = vmatpush1.bf16.msra.mxu0 0
  %3321 = vmatprep.subr.bf16.mxu0 0
  %3322 = vmatpush1.bf16.msra.mxu0 0
  %3323 = vmatprep.subr.bf16.mxu0 0
  %3324 = vmatpush1.bf16.msra.mxu0 0
  %3325 = vmatprep.subr.bf16.mxu0 0
  %3326 = vmatpush1.bf16.msra.mxu0 0
  %3327 = vmatprep.subr.bf16.mxu0 0
  %3328 = vmatpush1.bf16.msra.mxu0 0
  %3329 = vmatprep.subr.bf16.mxu0 0
  %3330 = vmatpush1.bf16.msra.mxu0 0
  %3331 = vmatprep.mubr.bf16.mxu0 0
  %3332 = vmatmul.mubr.bf16.gmra.mrb[0].mxu0 0
  %v3333 = vpop.f32.mrb[0].mxu0
  %v3334 = vadd.f32 0.0, %v3333
  %v3335 = vpop.f32.mrb[0].mxu0
  %v3336 = vadd.f32 0.0, %v3335
  %v3337 = vpop.f32.mrb[0].mxu0
  %v3338 = vpop.f32.mrb[0].mxu0
  %3339 = vdwg.mxu0
  %3340 = vmatprep.subr.bf16.mxu0 %v3258
  %3341 = vmatpush1.bf16.msra.mxu0 %v3257
  %3342 = vmatprep.subr.bf16.mxu0 %v3262
  %3343 = vmatpush1.bf16.msra.mxu0 %v3261
  %3344 = vmatprep.subr.bf16.mxu0 %v3266
  %3345 = vmatpush1.bf16.msra.mxu0 %v3265
  %3346 = vmatprep.subr.bf16.mxu0 %v3270
  %3347 = vmatpush1.bf16.msra.mxu0 %v3269
  %3348 = vmatprep.subr.bf16.mxu0 %v3274
  %3349 = vmatpush1.bf16.msra.mxu0 %v3273
  %3350 = vmatprep.subr.bf16.mxu0 %v3278
  %3351 = vmatpush1.bf16.msra.mxu0 %v3277
  %3352 = vmatprep.subr.bf16.mxu0 %v3282
  %3353 = vmatpush1.bf16.msra.mxu0 %v3281
  %3354 = vmatprep.subr.bf16.mxu0 %v3286
  %3355 = vmatpush1.bf16.msra.mxu0 %v3285
  %3356 = vmatprep.subr.bf16.mxu0 0
  %3357 = vmatpush1.bf16.msra.mxu0 0
  %3358 = vmatprep.subr.bf16.mxu0 0
  %3359 = vmatpush1.bf16.msra.mxu0 0
  %3360 = vmatprep.subr.bf16.mxu0 0
  %3361 = vmatpush1.bf16.msra.mxu0 0
  %3362 = vmatprep.subr.bf16.mxu0 0
  %3363 = vmatpush1.bf16.msra.mxu0 0
  %3364 = vmatprep.subr.bf16.mxu0 0
  %3365 = vmatpush1.bf16.msra.mxu0 0
  %3366 = vmatprep.subr.bf16.mxu0 0
  %3367 = vmatpush1.bf16.msra.mxu0 0
  %3368 = vmatprep.subr.bf16.mxu0 0
  %3369 = vmatpush1.bf16.msra.mxu0 0
  %3370 = vmatprep.subr.bf16.mxu0 0
  %3371 = vmatpush1.bf16.msra.mxu0 0
  %3372 = vmatprep.mubr.bf16.mxu0 0
  %3373 = vmatmul.mubr.bf16.gmra.mrb[0].mxu0 0
  %v3374 = vpop.f32.mrb[0].mxu0
  %v3375 = vadd.f32 0.0, %v3374
  %v3376 = vpop.f32.mrb[0].mxu0
  %v3377 = vadd.f32 0.0, %v3376
  %v3378 = vpop.f32.mrb[0].mxu0
  %v3379 = vpop.f32.mrb[0].mxu0
  %3380 = vdwg.mxu0
  %v3381 = vadd.f32 %v3295, %v3334
  %v3382 = vadd.f32 %v3296, %v3336
  %v3383 = vadd.f32 %v3297, %v3375
  %v3384 = vadd.f32 %v3298, %v3377
  %v3385 = vxor.u32 %v3381, 2147483648
  %v3386 = vmul.f32 %v3385, 1.442695
  %v3387 = vpow.pop %v3386
  %v3388 = vadd.f32 %v3387, 1.0
  %v3389 = vrcp.pop %v3388
  %v3390 = vmul.f32 1.0, %v3389
  %v3391 = vxor.u32 %v3382, 2147483648
  %v3392 = vmul.f32 %v3391, 1.442695
  %v3393 = vpow.pop %v3392
  %v3394 = vadd.f32 %v3393, 1.0
  %v3395 = vrcp.pop %v3394
  %v3396 = vmul.f32 1.0, %v3395
  %v3397 = vtanh.pop %v3383
  %v3398 = vxor.u32 %v3384, 2147483648
  %v3399 = vmul.f32 %v3398, 1.442695
  %v3400 = vpow.pop %v3399
  %v3401 = vadd.f32 %v3400, 1.0
  %v3402 = vrcp.pop %v3401
  %v3403 = vmul.f32 1.0, %v3402
  %v3404 = vmul.f32 %v3396, 0.0
  %v3405 = vmul.f32 %v3390, %v3397
  %v3406 = vadd.f32 %v3404, %v3405
  %v3407 = vtanh.pop %v3406
  %v3408 = vmul.f32 %v3403, %v3407
  %v3409 = vld [vmem:[#allocation3 + $0x20] sm:$0xff]
  %v3410 = vld [vmem:[#allocation3 + $0x28] sm:$0xff]
  %v3411 = vld [vmem:[#allocation3 + $0x30] sm:$0xff]
  %v3412 = vld [vmem:[#allocation3 + $0x38] sm:$0xff]
  %v3413 = vld [vmem:[#allocation3 + $0xc0] sm:$0xff]
  %v3414 = vld [vmem:[#allocation3 + $0xc8] sm:$0xff]
  %v3415 = vld [vmem:[#allocation3 + $0xd0] sm:$0xff]
  %v3416 = vld [vmem:[#allocation3 + $0xd8] sm:$0xff]
  %v3417 = vsel %vm647, %v3409, %v3413
  %v3418 = vsel %vm648, %v3410, %v3414
  %v3419 = vsel %vm649, %v3411, %v3415
  %v3420 = vsel %vm650, %v3412, %v3416
  %v3421 = vpack.c.bf16 %v3408, %v3408
  %3422 = vmatprep.subr.bf16.mxu0 %v3256
  %3423 = vmatpush1.bf16.msra.mxu0 %v3255
  %3424 = vmatprep.subr.bf16.mxu0 %v3260
  %3425 = vmatpush1.bf16.msra.mxu0 %v3259
  %3426 = vmatprep.subr.bf16.mxu0 %v3264
  %3427 = vmatpush1.bf16.msra.mxu0 %v3263
  %3428 = vmatprep.subr.bf16.mxu0 %v3268
  %3429 = vmatpush1.bf16.msra.mxu0 %v3267
  %3430 = vmatprep.subr.bf16.mxu0 %v3272
  %3431 = vmatpush1.bf16.msra.mxu0 %v3271
  %3432 = vmatprep.subr.bf16.mxu0 %v3276
  %3433 = vmatpush1.bf16.msra.mxu0 %v3275
  %3434 = vmatprep.subr.bf16.mxu0 %v3280
  %3435 = vmatpush1.bf16.msra.mxu0 %v3279
  %3436 = vmatprep.subr.bf16.mxu0 %v3284
  %3437 = vmatpush1.bf16.msra.mxu0 %v3283
  %3438 = vmatprep.subr.bf16.mxu0 0
  %3439 = vmatpush1.bf16.msra.mxu0 0
  %3440 = vmatprep.subr.bf16.mxu0 0
  %3441 = vmatpush1.bf16.msra.mxu0 0
  %3442 = vmatprep.subr.bf16.mxu0 0
  %3443 = vmatpush1.bf16.msra.mxu0 0
  %3444 = vmatprep.subr.bf16.mxu0 0
  %3445 = vmatpush1.bf16.msra.mxu0 0
  %3446 = vmatprep.subr.bf16.mxu0 0
  %3447 = vmatpush1.bf16.msra.mxu0 0
  %3448 = vmatprep.subr.bf16.mxu0 0
  %3449 = vmatpush1.bf16.msra.mxu0 0
  %3450 = vmatprep.subr.bf16.mxu0 0
  %3451 = vmatpush1.bf16.msra.mxu0 0
  %3452 = vmatprep.subr.bf16.mxu0 0
  %3453 = vmatpush1.bf16.msra.mxu0 0
  %3454 = vmatprep.mubr.bf16.mxu0 0
  %3455 = vmatmul.mubr.bf16.gmra.mrb[0].mxu0 %v3421
  %v3456 = vpop.f32.mrb[0].mxu0
  %v3457 = vadd.f32 0.0, %v3456
  %v3458 = vpop.f32.mrb[0].mxu0
  %v3459 = vadd.f32 0.0, %v3458
  %v3460 = vpop.f32.mrb[0].mxu0
  %v3461 = vpop.f32.mrb[0].mxu0
  %3462 = vdwg.mxu0
  %3463 = vmatprep.subr.bf16.mxu0 %v3258
  %3464 = vmatpush1.bf16.msra.mxu0 %v3257
  %3465 = vmatprep.subr.bf16.mxu0 %v3262
  %3466 = vmatpush1.bf16.msra.mxu0 %v3261
  %3467 = vmatprep.subr.bf16.mxu0 %v3266
  %3468 = vmatpush1.bf16.msra.mxu0 %v3265
  %3469 = vmatprep.subr.bf16.mxu0 %v3270
  %3470 = vmatpush1.bf16.msra.mxu0 %v3269
  %3471 = vmatprep.subr.bf16.mxu0 %v3274
  %3472 = vmatpush1.bf16.msra.mxu0 %v3273
  %3473 = vmatprep.subr.bf16.mxu0 %v3278
  %3474 = vmatpush1.bf16.msra.mxu0 %v3277
  %3475 = vmatprep.subr.bf16.mxu0 %v3282
  %3476 = vmatpush1.bf16.msra.mxu0 %v3281
  %3477 = vmatprep.subr.bf16.mxu0 %v3286
  %3478 = vmatpush1.bf16.msra.mxu0 %v3285
  %3479 = vmatprep.subr.bf16.mxu0 0
  %3480 = vmatpush1.bf16.msra.mxu0 0
  %3481 = vmatprep.subr.bf16.mxu0 0
  %3482 = vmatpush1.bf16.msra.mxu0 0
  %3483 = vmatprep.subr.bf16.mxu0 0
  %3484 = vmatpush1.bf16.msra.mxu0 0
  %3485 = vmatprep.subr.bf16.mxu0 0
  %3486 = vmatpush1.bf16.msra.mxu0 0
  %3487 = vmatprep.subr.bf16.mxu0 0
  %3488 = vmatpush1.bf16.msra.mxu0 0
  %3489 = vmatprep.subr.bf16.mxu0 0
  %3490 = vmatpush1.bf16.msra.mxu0 0
  %3491 = vmatprep.subr.bf16.mxu0 0
  %3492 = vmatpush1.bf16.msra.mxu0 0
  %3493 = vmatprep.subr.bf16.mxu0 0
  %3494 = vmatpush1.bf16.msra.mxu0 0
  %3495 = vmatprep.mubr.bf16.mxu0 0
  %3496 = vmatmul.mubr.bf16.gmra.mrb[0].mxu0 %v3421
  %v3497 = vpop.f32.mrb[0].mxu0
  %v3498 = vadd.f32 0.0, %v3497
  %v3499 = vpop.f32.mrb[0].mxu0
  %v3500 = vadd.f32 0.0, %v3499
  %v3501 = vpop.f32.mrb[0].mxu0
  %v3502 = vpop.f32.mrb[0].mxu0
  %3503 = vdwg.mxu0
  %v3504 = vadd.f32 %v3417, %v3457
  %v3505 = vadd.f32 %v3418, %v3459
  %v3506 = vadd.f32 %v3419, %v3498
  %v3507 = vadd.f32 %v3420, %v3500
  %v3508 = vxor.u32 %v3504, 2147483648
  %v3509 = vmul.f32 %v3508, 1.442695
  %v3510 = vpow.pop %v3509
  %v3511 = vadd.f32 %v3510, 1.0
  %v3512 = vrcp.pop %v3511
  %v3513 = vmul.f32 1.0, %v3512
  %v3514 = vxor.u32 %v3505, 2147483648
  %v3515 = vmul.f32 %v3514, 1.442695
  %v3516 = vpow.pop %v3515
  %v3517 = vadd.f32 %v3516, 1.0
  %v3518 = vrcp.pop %v3517
  %v3519 = vmul.f32 1.0, %v3518
  %v3520 = vtanh.pop %v3506
  %v3521 = vxor.u32 %v3507, 2147483648
  %v3522 = vmul.f32 %v3521, 1.442695
  %v3523 = vpow.pop %v3522
  %v3524 = vadd.f32 %v3523, 1.0
  %v3525 = vrcp.pop %v3524
  %v3526 = vmul.f32 1.0, %v3525
  %v3527 = vmul.f32 %v3519, %v3406
  %v3528 = vmul.f32 %v3513, %v3520
  %v3529 = vadd.f32 %v3527, %v3528
  %v3530 = vtanh.pop %v3529
  %v3531 = vmul.f32 %v3526, %v3530
  %v3532 = vld [vmem:[#allocation3 + $0x40] sm:$0xff]
  %v3533 = vld [vmem:[#allocation3 + $0x48] sm:$0xff]
  %v3534 = vld [vmem:[#allocation3 + $0x50] sm:$0xff]
  %v3535 = vld [vmem:[#allocation3 + $0x58] sm:$0xff]
  %v3536 = vld [vmem:[#allocation3 + $0xa0] sm:$0xff]
  %v3537 = vld [vmem:[#allocation3 + $0xa8] sm:$0xff]
  %v3538 = vld [vmem:[#allocation3 + $0xb0] sm:$0xff]
  %v3539 = vld [vmem:[#allocation3 + $0xb8] sm:$0xff]
  %v3540 = vsel %vm647, %v3532, %v3536
  %v3541 = vsel %vm648, %v3533, %v3537
  %v3542 = vsel %vm649, %v3534, %v3538
  %v3543 = vsel %vm650, %v3535, %v3539
  %v3544 = vpack.c.bf16 %v3531, %v3531
  %3545 = vmatprep.subr.bf16.mxu0 %v3256
  %3546 = vmatpush1.bf16.msra.mxu0 %v3255
  %3547 = vmatprep.subr.bf16.mxu0 %v3260
  %3548 = vmatpush1.bf16.msra.mxu0 %v3259
  %3549 = vmatprep.subr.bf16.mxu0 %v3264
  %3550 = vmatpush1.bf16.msra.mxu0 %v3263
  %3551 = vmatprep.subr.bf16.mxu0 %v3268
  %3552 = vmatpush1.bf16.msra.mxu0 %v3267
  %3553 = vmatprep.subr.bf16.mxu0 %v3272
  %3554 = vmatpush1.bf16.msra.mxu0 %v3271
  %3555 = vmatprep.subr.bf16.mxu0 %v3276
  %3556 = vmatpush1.bf16.msra.mxu0 %v3275
  %3557 = vmatprep.subr.bf16.mxu0 %v3280
  %3558 = vmatpush1.bf16.msra.mxu0 %v3279
  %3559 = vmatprep.subr.bf16.mxu0 %v3284
  %3560 = vmatpush1.bf16.msra.mxu0 %v3283
  %3561 = vmatprep.subr.bf16.mxu0 0
  %3562 = vmatpush1.bf16.msra.mxu0 0
  %3563 = vmatprep.subr.bf16.mxu0 0
  %3564 = vmatpush1.bf16.msra.mxu0 0
  %3565 = vmatprep.subr.bf16.mxu0 0
  %3566 = vmatpush1.bf16.msra.mxu0 0
  %3567 = vmatprep.subr.bf16.mxu0 0
  %3568 = vmatpush1.bf16.msra.mxu0 0
  %3569 = vmatprep.subr.bf16.mxu0 0
  %3570 = vmatpush1.bf16.msra.mxu0 0
  %3571 = vmatprep.subr.bf16.mxu0 0
  %3572 = vmatpush1.bf16.msra.mxu0 0
  %3573 = vmatprep.subr.bf16.mxu0 0
  %3574 = vmatpush1.bf16.msra.mxu0 0
  %3575 = vmatprep.subr.bf16.mxu0 0
  %3576 = vmatpush1.bf16.msra.mxu0 0
  %3577 = vmatprep.mubr.bf16.mxu0 0
  %3578 = vmatmul.mubr.bf16.gmra.mrb[0].mxu0 %v3544
  %v3579 = vpop.f32.mrb[0].mxu0
  %v3580 = vadd.f32 0.0, %v3579
  %v3581 = vpop.f32.mrb[0].mxu0
  %v3582 = vadd.f32 0.0, %v3581
  %v3583 = vpop.f32.mrb[0].mxu0
  %v3584 = vpop.f32.mrb[0].mxu0
  %3585 = vdwg.mxu0
  %3586 = vmatprep.subr.bf16.mxu0 %v3258
  %3587 = vmatpush1.bf16.msra.mxu0 %v3257
  %3588 = vmatprep.subr.bf16.mxu0 %v3262
  %3589 = vmatpush1.bf16.msra.mxu0 %v3261
  %3590 = vmatprep.subr.bf16.mxu0 %v3266
  %3591 = vmatpush1.bf16.msra.mxu0 %v3265
  %3592 = vmatprep.subr.bf16.mxu0 %v3270
  %3593 = vmatpush1.bf16.msra.mxu0 %v3269
  %3594 = vmatprep.subr.bf16.mxu0 %v3274
  %3595 = vmatpush1.bf16.msra.mxu0 %v3273
  %3596 = vmatprep.subr.bf16.mxu0 %v3278
  %3597 = vmatpush1.bf16.msra.mxu0 %v3277
  %3598 = vmatprep.subr.bf16.mxu0 %v3282
  %3599 = vmatpush1.bf16.msra.mxu0 %v3281
  %3600 = vmatprep.subr.bf16.mxu0 %v3286
  %3601 = vmatpush1.bf16.msra.mxu0 %v3285
  %3602 = vmatprep.subr.bf16.mxu0 0
  %3603 = vmatpush1.bf16.msra.mxu0 0
  %3604 = vmatprep.subr.bf16.mxu0 0
  %3605 = vmatpush1.bf16.msra.mxu0 0
  %3606 = vmatprep.subr.bf16.mxu0 0
  %3607 = vmatpush1.bf16.msra.mxu0 0
  %3608 = vmatprep.subr.bf16.mxu0 0
  %3609 = vmatpush1.bf16.msra.mxu0 0
  %3610 = vmatprep.subr.bf16.mxu0 0
  %3611 = vmatpush1.bf16.msra.mxu0 0
  %3612 = vmatprep.subr.bf16.mxu0 0
  %3613 = vmatpush1.bf16.msra.mxu0 0
  %3614 = vmatprep.subr.bf16.mxu0 0
  %3615 = vmatpush1.bf16.msra.mxu0 0
  %3616 = vmatprep.subr.bf16.mxu0 0
  %3617 = vmatpush1.bf16.msra.mxu0 0
  %3618 = vmatprep.mubr.bf16.mxu0 0
  %3619 = vmatmul.mubr.bf16.gmra.mrb[0].mxu0 %v3544
  %v3620 = vpop.f32.mrb[0].mxu0
  %v3621 = vadd.f32 0.0, %v3620
  %v3622 = vpop.f32.mrb[0].mxu0
  %v3623 = vadd.f32 0.0, %v3622
  %v3624 = vpop.f32.mrb[0].mxu0
  %v3625 = vpop.f32.mrb[0].mxu0
  %3626 = vdwg.mxu0
  %v3627 = vadd.f32 %v3540, %v3580
  %v3628 = vadd.f32 %v3541, %v3582
  %v3629 = vadd.f32 %v3542, %v3621
  %v3630 = vadd.f32 %v3543, %v3623
  %v3631 = vxor.u32 %v3627, 2147483648
  %v3632 = vmul.f32 %v3631, 1.442695
  %v3633 = vpow.pop %v3632
  %v3634 = vadd.f32 %v3633, 1.0
  %v3635 = vrcp.pop %v3634
  %v3636 = vmul.f32 1.0, %v3635
  %v3637 = vxor.u32 %v3628, 2147483648
  %v3638 = vmul.f32 %v3637, 1.442695
  %v3639 = vpow.pop %v3638
  %v3640 = vadd.f32 %v3639, 1.0
  %v3641 = vrcp.pop %v3640
  %v3642 = vmul.f32 1.0, %v3641
  %v3643 = vtanh.pop %v3629
  %v3644 = vxor.u32 %v3630, 2147483648
  %v3645 = vmul.f32 %v3644, 1.442695
  %v3646 = vpow.pop %v3645
  %v3647 = vadd.f32 %v3646, 1.0
  %v3648 = vrcp.pop %v3647
  %v3649 = vmul.f32 1.0, %v3648
  %v3650 = vmul.f32 %v3642, %v3529
  %v3651 = vmul.f32 %v3636, %v3643
  %v3652 = vadd.f32 %v3650, %v3651
  %v3653 = vtanh.pop %v3652
  %v3654 = vmul.f32 %v3649, %v3653
  %v3655 = vld [vmem:[#allocation3 + $0x60] sm:$0xff]
  %v3656 = vld [vmem:[#allocation3 + $0x68] sm:$0xff]
  %v3657 = vld [vmem:[#allocation3 + $0x70] sm:$0xff]
  %v3658 = vld [vmem:[#allocation3 + $0x78] sm:$0xff]
  %v3659 = vld [vmem:[#allocation3 + $0x80] sm:$0xff]
  %v3660 = vld [vmem:[#allocation3 + $0x88] sm:$0xff]
  %v3661 = vld [vmem:[#allocation3 + $0x90] sm:$0xff]
  %v3662 = vld [vmem:[#allocation3 + $0x98] sm:$0xff]
  %v3663 = vsel %vm647, %v3655, %v3659
  %v3664 = vsel %vm648, %v3656, %v3660
  %v3665 = vsel %vm649, %v3657, %v3661
  %v3666 = vsel %vm650, %v3658, %v3662
  %v3667 = vpack.c.bf16 %v3654, %v3654
  %3668 = vmatprep.subr.bf16.mxu0 %v3256
  %3669 = vmatpush1.bf16.msra.mxu0 %v3255
  %3670 = vmatprep.subr.bf16.mxu0 %v3260
  %3671 = vmatpush1.bf16.msra.mxu0 %v3259
  %3672 = vmatprep.subr.bf16.mxu0 %v3264
  %3673 = vmatpush1.bf16.msra.mxu0 %v3263
  %3674 = vmatprep.subr.bf16.mxu0 %v3268
  %3675 = vmatpush1.bf16.msra.mxu0 %v3267
  %3676 = vmatprep.subr.bf16.mxu0 %v3272
  %3677 = vmatpush1.bf16.msra.mxu0 %v3271
  %3678 = vmatprep.subr.bf16.mxu0 %v3276
  %3679 = vmatpush1.bf16.msra.mxu0 %v3275
  %3680 = vmatprep.subr.bf16.mxu0 %v3280
  %3681 = vmatpush1.bf16.msra.mxu0 %v3279
  %3682 = vmatprep.subr.bf16.mxu0 %v3284
  %3683 = vmatpush1.bf16.msra.mxu0 %v3283
  %3684 = vmatprep.subr.bf16.mxu0 0
  %3685 = vmatpush1.bf16.msra.mxu0 0
  %3686 = vmatprep.subr.bf16.mxu0 0
  %3687 = vmatpush1.bf16.msra.mxu0 0
  %3688 = vmatprep.subr.bf16.mxu0 0
  %3689 = vmatpush1.bf16.msra.mxu0 0
  %3690 = vmatprep.subr.bf16.mxu0 0
  %3691 = vmatpush1.bf16.msra.mxu0 0
  %3692 = vmatprep.subr.bf16.mxu0 0
  %3693 = vmatpush1.bf16.msra.mxu0 0
  %3694 = vmatprep.subr.bf16.mxu0 0
  %3695 = vmatpush1.bf16.msra.mxu0 0
  %3696 = vmatprep.subr.bf16.mxu0 0
  %3697 = vmatpush1.bf16.msra.mxu0 0
  %3698 = vmatprep.subr.bf16.mxu0 0
  %3699 = vmatpush1.bf16.msra.mxu0 0
  %3700 = vmatprep.mubr.bf16.mxu0 0
  %3701 = vmatmul.mubr.bf16.gmra.mrb[0].mxu0 %v3667
  %v3702 = vpop.f32.mrb[0].mxu0
  %v3703 = vadd.f32 0.0, %v3702
  %v3704 = vpop.f32.mrb[0].mxu0
  %v3705 = vadd.f32 0.0, %v3704
  %v3706 = vpop.f32.mrb[0].mxu0
  %v3707 = vpop.f32.mrb[0].mxu0
  %3708 = vdwg.mxu0
  %3709 = vmatprep.subr.bf16.mxu0 %v3258
  %3710 = vmatpush1.bf16.msra.mxu0 %v3257
  %3711 = vmatprep.subr.bf16.mxu0 %v3262
  %3712 = vmatpush1.bf16.msra.mxu0 %v3261
  %3713 = vmatprep.subr.bf16.mxu0 %v3266
  %3714 = vmatpush1.bf16.msra.mxu0 %v3265
  %3715 = vmatprep.subr.bf16.mxu0 %v3270
  %3716 = vmatpush1.bf16.msra.mxu0 %v3269
  %3717 = vmatprep.subr.bf16.mxu0 %v3274
  %3718 = vmatpush1.bf16.msra.mxu0 %v3273
  %3719 = vmatprep.subr.bf16.mxu0 %v3278
  %3720 = vmatpush1.bf16.msra.mxu0 %v3277
  %3721 = vmatprep.subr.bf16.mxu0 %v3282
  %3722 = vmatpush1.bf16.msra.mxu0 %v3281
  %3723 = vmatprep.subr.bf16.mxu0 %v3286
  %3724 = vmatpush1.bf16.msra.mxu0 %v3285
  %3725 = vmatprep.subr.bf16.mxu0 0
  %3726 = vmatpush1.bf16.msra.mxu0 0
  %3727 = vmatprep.subr.bf16.mxu0 0
  %3728 = vmatpush1.bf16.msra.mxu0 0
  %3729 = vmatprep.subr.bf16.mxu0 0
  %3730 = vmatpush1.bf16.msra.mxu0 0
  %3731 = vmatprep.subr.bf16.mxu0 0
  %3732 = vmatpush1.bf16.msra.mxu0 0
  %3733 = vmatprep.subr.bf16.mxu0 0
  %3734 = vmatpush1.bf16.msra.mxu0 0
  %3735 = vmatprep.subr.bf16.mxu0 0
  %3736 = vmatpush1.bf16.msra.mxu0 0
  %3737 = vmatprep.subr.bf16.mxu0 0
  %3738 = vmatpush1.bf16.msra.mxu0 0
  %3739 = vmatprep.subr.bf16.mxu0 0
  %3740 = vmatpush1.bf16.msra.mxu0 0
  %3741 = vmatprep.mubr.bf16.mxu0 0
  %3742 = vmatmul.mubr.bf16.gmra.mrb[0].mxu0 %v3667
  %v3743 = vpop.f32.mrb[0].mxu0
  %v3744 = vadd.f32 0.0, %v3743
  %v3745 = vpop.f32.mrb[0].mxu0
  %v3746 = vadd.f32 0.0, %v3745
  %v3747 = vpop.f32.mrb[0].mxu0
  %v3748 = vpop.f32.mrb[0].mxu0
  %3749 = vdwg.mxu0
  %v3750 = vadd.f32 %v3663, %v3703
  %v3751 = vadd.f32 %v3664, %v3705
  %v3752 = vadd.f32 %v3665, %v3744
  %v3753 = vadd.f32 %v3666, %v3746
  %v3754 = vxor.u32 %v3750, 2147483648
  %v3755 = vmul.f32 %v3754, 1.442695
  %v3756 = vpow.pop %v3755
  %v3757 = vadd.f32 %v3756, 1.0
  %v3758 = vrcp.pop %v3757
  %v3759 = vmul.f32 1.0, %v3758
  %v3760 = vxor.u32 %v3751, 2147483648
  %v3761 = vmul.f32 %v3760, 1.442695
  %v3762 = vpow.pop %v3761
  %v3763 = vadd.f32 %v3762, 1.0
  %v3764 = vrcp.pop %v3763
  %v3765 = vmul.f32 1.0, %v3764
  %v3766 = vtanh.pop %v3752
  %v3767 = vxor.u32 %v3753, 2147483648
  %v3768 = vmul.f32 %v3767, 1.442695
  %v3769 = vpow.pop %v3768
  %v3770 = vadd.f32 %v3769, 1.0
  %v3771 = vrcp.pop %v3770
  %v3772 = vmul.f32 1.0, %v3771
  %v3773 = vmul.f32 %v3765, %v3652
  %v3774 = vmul.f32 %v3759, %v3766
  %v3775 = vadd.f32 %v3773, %v3774
  %v3776 = vtanh.pop %v3775
  %v3777 = vmul.f32 %v3772, %v3776
  %v3778 = vsel %vm647, %v3659, %v3655
  %v3779 = vsel %vm648, %v3660, %v3656
  %v3780 = vsel %vm649, %v3661, %v3657
  %v3781 = vsel %vm650, %v3662, %v3658
  %v3782 = vpack.c.bf16 %v3777, %v3777
  %3783 = vmatprep.subr.bf16.mxu0 %v3256
  %3784 = vmatpush1.bf16.msra.mxu0 %v3255
  %3785 = vmatprep.subr.bf16.mxu0 %v3260
  %3786 = vmatpush1.bf16.msra.mxu0 %v3259
  %3787 = vmatprep.subr.bf16.mxu0 %v3264
  %3788 = vmatpush1.bf16.msra.mxu0 %v3263
  %3789 = vmatprep.subr.bf16.mxu0 %v3268
  %3790 = vmatpush1.bf16.msra.mxu0 %v3267
  %3791 = vmatprep.subr.bf16.mxu0 %v3272
  %3792 = vmatpush1.bf16.msra.mxu0 %v3271
  %3793 = vmatprep.subr.bf16.mxu0 %v3276
  %3794 = vmatpush1.bf16.msra.mxu0 %v3275
  %3795 = vmatprep.subr.bf16.mxu0 %v3280
  %3796 = vmatpush1.bf16.msra.mxu0 %v3279
  %3797 = vmatprep.subr.bf16.mxu0 %v3284
  %3798 = vmatpush1.bf16.msra.mxu0 %v3283
  %3799 = vmatprep.subr.bf16.mxu0 0
  %3800 = vmatpush1.bf16.msra.mxu0 0
  %3801 = vmatprep.subr.bf16.mxu0 0
  %3802 = vmatpush1.bf16.msra.mxu0 0
  %3803 = vmatprep.subr.bf16.mxu0 0
  %3804 = vmatpush1.bf16.msra.mxu0 0
  %3805 = vmatprep.subr.bf16.mxu0 0
  %3806 = vmatpush1.bf16.msra.mxu0 0
  %3807 = vmatprep.subr.bf16.mxu0 0
  %3808 = vmatpush1.bf16.msra.mxu0 0
  %3809 = vmatprep.subr.bf16.mxu0 0
  %3810 = vmatpush1.bf16.msra.mxu0 0
  %3811 = vmatprep.subr.bf16.mxu0 0
  %3812 = vmatpush1.bf16.msra.mxu0 0
  %3813 = vmatprep.subr.bf16.mxu0 0
  %3814 = vmatpush1.bf16.msra.mxu0 0
  %3815 = vmatprep.mubr.bf16.mxu0 0
  %3816 = vmatmul.mubr.bf16.gmra.mrb[0].mxu0 %v3782
  %v3817 = vpop.f32.mrb[0].mxu0
  %v3818 = vadd.f32 0.0, %v3817
  %v3819 = vpop.f32.mrb[0].mxu0
  %v3820 = vadd.f32 0.0, %v3819
  %v3821 = vpop.f32.mrb[0].mxu0
  %v3822 = vpop.f32.mrb[0].mxu0
  %3823 = vdwg.mxu0
  %3824 = vmatprep.subr.bf16.mxu0 %v3258
  %3825 = vmatpush1.bf16.msra.mxu0 %v3257
  %3826 = vmatprep.subr.bf16.mxu0 %v3262
  %3827 = vmatpush1.bf16.msra.mxu0 %v3261
  %3828 = vmatprep.subr.bf16.mxu0 %v3266
  %3829 = vmatpush1.bf16.msra.mxu0 %v3265
  %3830 = vmatprep.subr.bf16.mxu0 %v3270
  %3831 = vmatpush1.bf16.msra.mxu0 %v3269
  %3832 = vmatprep.subr.bf16.mxu0 %v3274
  %3833 = vmatpush1.bf16.msra.mxu0 %v3273
  %3834 = vmatprep.subr.bf16.mxu0 %v3278
  %3835 = vmatpush1.bf16.msra.mxu0 %v3277
  %3836 = vmatprep.subr.bf16.mxu0 %v3282
  %3837 = vmatpush1.bf16.msra.mxu0 %v3281
  %3838 = vmatprep.subr.bf16.mxu0 %v3286
  %3839 = vmatpush1.bf16.msra.mxu0 %v3285
  %3840 = vmatprep.subr.bf16.mxu0 0
  %3841 = vmatpush1.bf16.msra.mxu0 0
  %3842 = vmatprep.subr.bf16.mxu0 0
  %3843 = vmatpush1.bf16.msra.mxu0 0
  %3844 = vmatprep.subr.bf16.mxu0 0
  %3845 = vmatpush1.bf16.msra.mxu0 0
  %3846 = vmatprep.subr.bf16.mxu0 0
  %3847 = vmatpush1.bf16.msra.mxu0 0
  %3848 = vmatprep.subr.bf16.mxu0 0
  %3849 = vmatpush1.bf16.msra.mxu0 0
  %3850 = vmatprep.subr.bf16.mxu0 0
  %3851 = vmatpush1.bf16.msra.mxu0 0
  %3852 = vmatprep.subr.bf16.mxu0 0
  %3853 = vmatpush1.bf16.msra.mxu0 0
  %3854 = vmatprep.subr.bf16.mxu0 0
  %3855 = vmatpush1.bf16.msra.mxu0 0
  %3856 = vmatprep.mubr.bf16.mxu0 0
  %3857 = vmatmul.mubr.bf16.gmra.mrb[0].mxu0 %v3782
  %v3858 = vpop.f32.mrb[0].mxu0
  %v3859 = vadd.f32 0.0, %v3858
  %v3860 = vpop.f32.mrb[0].mxu0
  %v3861 = vadd.f32 0.0, %v3860
  %v3862 = vpop.f32.mrb[0].mxu0
  %v3863 = vpop.f32.mrb[0].mxu0
  %3864 = vdwg.mxu0
  %v3865 = vadd.f32 %v3778, %v3818
  %v3866 = vadd.f32 %v3779, %v3820
  %v3867 = vadd.f32 %v3780, %v3859
  %v3868 = vadd.f32 %v3781, %v3861
  %v3869 = vxor.u32 %v3865, 2147483648
  %v3870 = vmul.f32 %v3869, 1.442695
  %v3871 = vpow.pop %v3870
  %v3872 = vadd.f32 %v3871, 1.0
  %v3873 = vrcp.pop %v3872
  %v3874 = vmul.f32 1.0, %v3873
  %v3875 = vxor.u32 %v3866, 2147483648
  %v3876 = vmul.f32 %v3875, 1.442695
  %v3877 = vpow.pop %v3876
  %v3878 = vadd.f32 %v3877, 1.0
  %v3879 = vrcp.pop %v3878
  %v3880 = vmul.f32 1.0, %v3879
  %v3881 = vtanh.pop %v3867
  %v3882 = vxor.u32 %v3868, 2147483648
  %v3883 = vmul.f32 %v3882, 1.442695
  %v3884 = vpow.pop %v3883
  %v3885 = vadd.f32 %v3884, 1.0
  %v3886 = vrcp.pop %v3885
  %v3887 = vmul.f32 1.0, %v3886
  %v3888 = vmul.f32 %v3880, %v3775
  %v3889 = vmul.f32 %v3874, %v3881
  %v3890 = vadd.f32 %v3888, %v3889
  %v3891 = vtanh.pop %v3890
  %v3892 = vmul.f32 %v3887, %v3891
  %v3893 = vsel %vm647, %v3536, %v3532
  %v3894 = vsel %vm648, %v3537, %v3533
  %v3895 = vsel %vm649, %v3538, %v3534
  %v3896 = vsel %vm650, %v3539, %v3535
  %v3897 = vpack.c.bf16 %v3892, %v3892
  %3898 = vmatprep.subr.bf16.mxu0 %v3256
  %3899 = vmatpush1.bf16.msra.mxu0 %v3255
  %3900 = vmatprep.subr.bf16.mxu0 %v3260
  %3901 = vmatpush1.bf16.msra.mxu0 %v3259
  %3902 = vmatprep.subr.bf16.mxu0 %v3264
  %3903 = vmatpush1.bf16.msra.mxu0 %v3263
  %3904 = vmatprep.subr.bf16.mxu0 %v3268
  %3905 = vmatpush1.bf16.msra.mxu0 %v3267
  %3906 = vmatprep.subr.bf16.mxu0 %v3272
  %3907 = vmatpush1.bf16.msra.mxu0 %v3271
  %3908 = vmatprep.subr.bf16.mxu0 %v3276
  %3909 = vmatpush1.bf16.msra.mxu0 %v3275
  %3910 = vmatprep.subr.bf16.mxu0 %v3280
  %3911 = vmatpush1.bf16.msra.mxu0 %v3279
  %3912 = vmatprep.subr.bf16.mxu0 %v3284
  %3913 = vmatpush1.bf16.msra.mxu0 %v3283
  %3914 = vmatprep.subr.bf16.mxu0 0
  %3915 = vmatpush1.bf16.msra.mxu0 0
  %3916 = vmatprep.subr.bf16.mxu0 0
  %3917 = vmatpush1.bf16.msra.mxu0 0
  %3918 = vmatprep.subr.bf16.mxu0 0
  %3919 = vmatpush1.bf16.msra.mxu0 0
  %3920 = vmatprep.subr.bf16.mxu0 0
  %3921 = vmatpush1.bf16.msra.mxu0 0
  %3922 = vmatprep.subr.bf16.mxu0 0
  %3923 = vmatpush1.bf16.msra.mxu0 0
  %3924 = vmatprep.subr.bf16.mxu0 0
  %3925 = vmatpush1.bf16.msra.mxu0 0
  %3926 = vmatprep.subr.bf16.mxu0 0
  %3927 = vmatpush1.bf16.msra.mxu0 0
  %3928 = vmatprep.subr.bf16.mxu0 0
  %3929 = vmatpush1.bf16.msra.mxu0 0
  %3930 = vmatprep.mubr.bf16.mxu0 0
  %3931 = vmatmul.mubr.bf16.gmra.mrb[0].mxu0 %v3897
  %v3932 = vpop.f32.mrb[0].mxu0
  %v3933 = vadd.f32 0.0, %v3932
  %v3934 = vpop.f32.mrb[0].mxu0
  %v3935 = vadd.f32 0.0, %v3934
  %v3936 = vpop.f32.mrb[0].mxu0
  %v3937 = vpop.f32.mrb[0].mxu0
  %3938 = vdwg.mxu0
  %3939 = vmatprep.subr.bf16.mxu0 %v3258
  %3940 = vmatpush1.bf16.msra.mxu0 %v3257
  %3941 = vmatprep.subr.bf16.mxu0 %v3262
  %3942 = vmatpush1.bf16.msra.mxu0 %v3261
  %3943 = vmatprep.subr.bf16.mxu0 %v3266
  %3944 = vmatpush1.bf16.msra.mxu0 %v3265
  %3945 = vmatprep.subr.bf16.mxu0 %v3270
  %3946 = vmatpush1.bf16.msra.mxu0 %v3269
  %3947 = vmatprep.subr.bf16.mxu0 %v3274
  %3948 = vmatpush1.bf16.msra.mxu0 %v3273
  %3949 = vmatprep.subr.bf16.mxu0 %v3278
  %3950 = vmatpush1.bf16.msra.mxu0 %v3277
  %3951 = vmatprep.subr.bf16.mxu0 %v3282
  %3952 = vmatpush1.bf16.msra.mxu0 %v3281
  %3953 = vmatprep.subr.bf16.mxu0 %v3286
  %3954 = vmatpush1.bf16.msra.mxu0 %v3285
  %3955 = vmatprep.subr.bf16.mxu0 0
  %3956 = vmatpush1.bf16.msra.mxu0 0
  %3957 = vmatprep.subr.bf16.mxu0 0
  %3958 = vmatpush1.bf16.msra.mxu0 0
  %3959 = vmatprep.subr.bf16.mxu0 0
  %3960 = vmatpush1.bf16.msra.mxu0 0
  %3961 = vmatprep.subr.bf16.mxu0 0
  %3962 = vmatpush1.bf16.msra.mxu0 0
  %3963 = vmatprep.subr.bf16.mxu0 0
  %3964 = vmatpush1.bf16.msra.mxu0 0
  %3965 = vmatprep.subr.bf16.mxu0 0
  %3966 = vmatpush1.bf16.msra.mxu0 0
  %3967 = vmatprep.subr.bf16.mxu0 0
  %3968 = vmatpush1.bf16.msra.mxu0 0
  %3969 = vmatprep.subr.bf16.mxu0 0
  %3970 = vmatpush1.bf16.msra.mxu0 0
  %3971 = vmatprep.mubr.bf16.mxu0 0
  %3972 = vmatmul.mubr.bf16.gmra.mrb[0].mxu0 %v3897
  %v3973 = vpop.f32.mrb[0].mxu0
  %v3974 = vadd.f32 0.0, %v3973
  %v3975 = vpop.f32.mrb[0].mxu0
  %v3976 = vadd.f32 0.0, %v3975
  %v3977 = vpop.f32.mrb[0].mxu0
  %v3978 = vpop.f32.mrb[0].mxu0
  %3979 = vdwg.mxu0
  %v3980 = vadd.f32 %v3893, %v3933
  %v3981 = vadd.f32 %v3894, %v3935
  %v3982 = vadd.f32 %v3895, %v3974
  %v3983 = vadd.f32 %v3896, %v3976
  %v3984 = vxor.u32 %v3980, 2147483648
  %v3985 = vmul.f32 %v3984, 1.442695
  %v3986 = vpow.pop %v3985
  %v3987 = vadd.f32 %v3986, 1.0
  %v3988 = vrcp.pop %v3987
  %v3989 = vmul.f32 1.0, %v3988
  %v3990 = vxor.u32 %v3981, 2147483648
  %v3991 = vmul.f32 %v3990, 1.442695
  %v3992 = vpow.pop %v3991
  %v3993 = vadd.f32 %v3992, 1.0
  %v3994 = vrcp.pop %v3993
  %v3995 = vmul.f32 1.0, %v3994
  %v3996 = vtanh.pop %v3982
  %v3997 = vxor.u32 %v3983, 2147483648
  %v3998 = vmul.f32 %v3997, 1.442695
  %v3999 = vpow.pop %v3998
  %v4000 = vadd.f32 %v3999, 1.0
  %v4001 = vrcp.pop %v4000
  %v4002 = vmul.f32 1.0, %v4001
  %v4003 = vmul.f32 %v3995, %v3890
  %v4004 = vmul.f32 %v3989, %v3996
  %v4005 = vadd.f32 %v4003, %v4004
  %v4006 = vtanh.pop %v4005
  %v4007 = vmul.f32 %v4002, %v4006
  %v4008 = vsel %vm647, %v3413, %v3409
  %v4009 = vsel %vm648, %v3414, %v3410
  %v4010 = vsel %vm649, %v3415, %v3411
  %v4011 = vsel %vm650, %v3416, %v3412
  %v4012 = vpack.c.bf16 %v4007, %v4007
  %4013 = vmatprep.subr.bf16.mxu0 %v3256
  %4014 = vmatpush1.bf16.msra.mxu0 %v3255
  %4015 = vmatprep.subr.bf16.mxu0 %v3260
  %4016 = vmatpush1.bf16.msra.mxu0 %v3259
  %4017 = vmatprep.subr.bf16.mxu0 %v3264
  %4018 = vmatpush1.bf16.msra.mxu0 %v3263
  %4019 = vmatprep.subr.bf16.mxu0 %v3268
  %4020 = vmatpush1.bf16.msra.mxu0 %v3267
  %4021 = vmatprep.subr.bf16.mxu0 %v3272
  %4022 = vmatpush1.bf16.msra.mxu0 %v3271
  %4023 = vmatprep.subr.bf16.mxu0 %v3276
  %4024 = vmatpush1.bf16.msra.mxu0 %v3275
  %4025 = vmatprep.subr.bf16.mxu0 %v3280
  %4026 = vmatpush1.bf16.msra.mxu0 %v3279
  %4027 = vmatprep.subr.bf16.mxu0 %v3284
  %4028 = vmatpush1.bf16.msra.mxu0 %v3283
  %4029 = vmatprep.subr.bf16.mxu0 0
  %4030 = vmatpush1.bf16.msra.mxu0 0
  %4031 = vmatprep.subr.bf16.mxu0 0
  %4032 = vmatpush1.bf16.msra.mxu0 0
  %4033 = vmatprep.subr.bf16.mxu0 0
  %4034 = vmatpush1.bf16.msra.mxu0 0
  %4035 = vmatprep.subr.bf16.mxu0 0
  %4036 = vmatpush1.bf16.msra.mxu0 0
  %4037 = vmatprep.subr.bf16.mxu0 0
  %4038 = vmatpush1.bf16.msra.mxu0 0
  %4039 = vmatprep.subr.bf16.mxu0 0
  %4040 = vmatpush1.bf16.msra.mxu0 0
  %4041 = vmatprep.subr.bf16.mxu0 0
  %4042 = vmatpush1.bf16.msra.mxu0 0
  %4043 = vmatprep.subr.bf16.mxu0 0
  %4044 = vmatpush1.bf16.msra.mxu0 0
  %4045 = vmatprep.mubr.bf16.mxu0 0
  %4046 = vmatmul.mubr.bf16.gmra.mrb[0].mxu0 %v4012
  %v4047 = vpop.f32.mrb[0].mxu0
  %v4048 = vadd.f32 0.0, %v4047
  %v4049 = vpop.f32.mrb[0].mxu0
  %v4050 = vadd.f32 0.0, %v4049
  %v4051 = vpop.f32.mrb[0].mxu0
  %v4052 = vpop.f32.mrb[0].mxu0
  %4053 = vdwg.mxu0
  %4054 = vmatprep.subr.bf16.mxu0 %v3258
  %4055 = vmatpush1.bf16.msra.mxu0 %v3257
  %4056 = vmatprep.subr.bf16.mxu0 %v3262
  %4057 = vmatpush1.bf16.msra.mxu0 %v3261
  %4058 = vmatprep.subr.bf16.mxu0 %v3266
  %4059 = vmatpush1.bf16.msra.mxu0 %v3265
  %4060 = vmatprep.subr.bf16.mxu0 %v3270
  %4061 = vmatpush1.bf16.msra.mxu0 %v3269
  %4062 = vmatprep.subr.bf16.mxu0 %v3274
  %4063 = vmatpush1.bf16.msra.mxu0 %v3273
  %4064 = vmatprep.subr.bf16.mxu0 %v3278
  %4065 = vmatpush1.bf16.msra.mxu0 %v3277
  %4066 = vmatprep.subr.bf16.mxu0 %v3282
  %4067 = vmatpush1.bf16.msra.mxu0 %v3281
  %4068 = vmatprep.subr.bf16.mxu0 %v3286
  %4069 = vmatpush1.bf16.msra.mxu0 %v3285
  %4070 = vmatprep.subr.bf16.mxu0 0
  %4071 = vmatpush1.bf16.msra.mxu0 0
  %4072 = vmatprep.subr.bf16.mxu0 0
  %4073 = vmatpush1.bf16.msra.mxu0 0
  %4074 = vmatprep.subr.bf16.mxu0 0
  %4075 = vmatpush1.bf16.msra.mxu0 0
  %4076 = vmatprep.subr.bf16.mxu0 0
  %4077 = vmatpush1.bf16.msra.mxu0 0
  %4078 = vmatprep.subr.bf16.mxu0 0
  %4079 = vmatpush1.bf16.msra.mxu0 0
  %4080 = vmatprep.subr.bf16.mxu0 0
  %4081 = vmatpush1.bf16.msra.mxu0 0
  %4082 = vmatprep.subr.bf16.mxu0 0
  %4083 = vmatpush1.bf16.msra.mxu0 0
  %4084 = vmatprep.subr.bf16.mxu0 0
  %4085 = vmatpush1.bf16.msra.mxu0 0
  %4086 = vmatprep.mubr.bf16.mxu0 0
  %4087 = vmatmul.mubr.bf16.gmra.mrb[0].mxu0 %v4012
  %v4088 = vpop.f32.mrb[0].mxu0
  %v4089 = vadd.f32 0.0, %v4088
  %v4090 = vpop.f32.mrb[0].mxu0
  %v4091 = vadd.f32 0.0, %v4090
  %v4092 = vpop.f32.mrb[0].mxu0
  %v4093 = vpop.f32.mrb[0].mxu0
  %4094 = vdwg.mxu0
  %v4095 = vadd.f32 %v4008, %v4048
  %v4096 = vadd.f32 %v4009, %v4050
  %v4097 = vadd.f32 %v4010, %v4089
  %v4098 = vadd.f32 %v4011, %v4091
  %v4099 = vxor.u32 %v4095, 2147483648
  %v4100 = vmul.f32 %v4099, 1.442695
  %v4101 = vpow.pop %v4100
  %v4102 = vadd.f32 %v4101, 1.0
  %v4103 = vrcp.pop %v4102
  %v4104 = vmul.f32 1.0, %v4103
  %v4105 = vxor.u32 %v4096, 2147483648
  %v4106 = vmul.f32 %v4105, 1.442695
  %v4107 = vpow.pop %v4106
  %v4108 = vadd.f32 %v4107, 1.0
  %v4109 = vrcp.pop %v4108
  %v4110 = vmul.f32 1.0, %v4109
  %v4111 = vtanh.pop %v4097
  %v4112 = vxor.u32 %v4098, 2147483648
  %v4113 = vmul.f32 %v4112, 1.442695
  %v4114 = vpow.pop %v4113
  %v4115 = vadd.f32 %v4114, 1.0
  %v4116 = vrcp.pop %v4115
  %v4117 = vmul.f32 1.0, %v4116
  %v4118 = vmul.f32 %v4110, %v4005
  %v4119 = vmul.f32 %v4104, %v4111
  %v4120 = vadd.f32 %v4118, %v4119
  %v4121 = vtanh.pop %v4120
  %v4122 = vmul.f32 %v4117, %v4121
  %v4123 = vsel %vm647, %v3291, %v3287
  %v4124 = vsel %vm648, %v3292, %v3288
  %v4125 = vsel %vm649, %v3293, %v3289
  %v4126 = vsel %vm650, %v3294, %v3290
  %v4127 = vpack.c.bf16 %v4122, %v4122
  %4128 = vmatprep.subr.bf16.mxu0 %v3256
  %4129 = vmatpush1.bf16.msra.mxu0 %v3255
  %4130 = vmatprep.subr.bf16.mxu0 %v3260
  %4131 = vmatpush1.bf16.msra.mxu0 %v3259
  %4132 = vmatprep.subr.bf16.mxu0 %v3264
  %4133 = vmatpush1.bf16.msra.mxu0 %v3263
  %4134 = vmatprep.subr.bf16.mxu0 %v3268
  %4135 = vmatpush1.bf16.msra.mxu0 %v3267
  %4136 = vmatprep.subr.bf16.mxu0 %v3272
  %4137 = vmatpush1.bf16.msra.mxu0 %v3271
  %4138 = vmatprep.subr.bf16.mxu0 %v3276
  %4139 = vmatpush1.bf16.msra.mxu0 %v3275
  %4140 = vmatprep.subr.bf16.mxu0 %v3280
  %4141 = vmatpush1.bf16.msra.mxu0 %v3279
  %4142 = vmatprep.subr.bf16.mxu0 %v3284
  %4143 = vmatpush1.bf16.msra.mxu0 %v3283
  %4144 = vmatprep.subr.bf16.mxu0 0
  %4145 = vmatpush1.bf16.msra.mxu0 0
  %4146 = vmatprep.subr.bf16.mxu0 0
  %4147 = vmatpush1.bf16.msra.mxu0 0
  %4148 = vmatprep.subr.bf16.mxu0 0
  %4149 = vmatpush1.bf16.msra.mxu0 0
  %4150 = vmatprep.subr.bf16.mxu0 0
  %4151 = vmatpush1.bf16.msra.mxu0 0
  %4152 = vmatprep.subr.bf16.mxu0 0
  %4153 = vmatpush1.bf16.msra.mxu0 0
  %4154 = vmatprep.subr.bf16.mxu0 0
  %4155 = vmatpush1.bf16.msra.mxu0 0
  %4156 = vmatprep.subr.bf16.mxu0 0
  %4157 = vmatpush1.bf16.msra.mxu0 0
  %4158 = vmatprep.subr.bf16.mxu0 0
  %4159 = vmatpush1.bf16.msra.mxu0 0
  %4160 = vmatprep.mubr.bf16.mxu0 0
  %4161 = vmatmul.mubr.bf16.gmra.mrb[0].mxu0 %v4127
  %v4162 = vpop.f32.mrb[0].mxu0
  %v4163 = vadd.f32 0.0, %v4162
  %v4164 = vpop.f32.mrb[0].mxu0
  %v4165 = vadd.f32 0.0, %v4164
  %v4166 = vpop.f32.mrb[0].mxu0
  %v4167 = vpop.f32.mrb[0].mxu0
  %4168 = vdwg.mxu0
  %4169 = vmatprep.subr.bf16.mxu0 %v3258
  %4170 = vmatpush1.bf16.msra.mxu0 %v3257
  %4171 = vmatprep.subr.bf16.mxu0 %v3262
  %4172 = vmatpush1.bf16.msra.mxu0 %v3261
  %4173 = vmatprep.subr.bf16.mxu0 %v3266
  %4174 = vmatpush1.bf16.msra.mxu0 %v3265
  %4175 = vmatprep.subr.bf16.mxu0 %v3270
  %4176 = vmatpush1.bf16.msra.mxu0 %v3269
  %4177 = vmatprep.subr.bf16.mxu0 %v3274
  %4178 = vmatpush1.bf16.msra.mxu0 %v3273
  %4179 = vmatprep.subr.bf16.mxu0 %v3278
  %4180 = vmatpush1.bf16.msra.mxu0 %v3277
  %4181 = vmatprep.subr.bf16.mxu0 %v3282
  %4182 = vmatpush1.bf16.msra.mxu0 %v3281
  %4183 = vmatprep.subr.bf16.mxu0 %v3286
  %4184 = vmatpush1.bf16.msra.mxu0 %v3285
  %4185 = vmatprep.subr.bf16.mxu0 0
  %4186 = vmatpush1.bf16.msra.mxu0 0
  %4187 = vmatprep.subr.bf16.mxu0 0
  %4188 = vmatpush1.bf16.msra.mxu0 0
  %4189 = vmatprep.subr.bf16.mxu0 0
  %4190 = vmatpush1.bf16.msra.mxu0 0
  %4191 = vmatprep.subr.bf16.mxu0 0
  %4192 = vmatpush1.bf16.msra.mxu0 0
  %4193 = vmatprep.subr.bf16.mxu0 0
  %4194 = vmatpush1.bf16.msra.mxu0 0
  %4195 = vmatprep.subr.bf16.mxu0 0
  %4196 = vmatpush1.bf16.msra.mxu0 0
  %4197 = vmatprep.subr.bf16.mxu0 0
  %4198 = vmatpush1.bf16.msra.mxu0 0
  %4199 = vmatprep.subr.bf16.mxu0 0
  %4200 = vmatpush1.bf16.msra.mxu0 0
  %4201 = vmatprep.mubr.bf16.mxu0 0
  %4202 = vmatmul.mubr.bf16.gmra.mrb[0].mxu0 %v4127
  %v4203 = vpop.f32.mrb[0].mxu0
  %v4204 = vadd.f32 0.0, %v4203
  %v4205 = vpop.f32.mrb[0].mxu0
  %v4206 = vadd.f32 0.0, %v4205
  %v4207 = vpop.f32.mrb[0].mxu0
  %v4208 = vpop.f32.mrb[0].mxu0
  %4209 = vdwg.mxu0
  %v4210 = vadd.f32 %v4123, %v4163
  %v4211 = vadd.f32 %v4124, %v4165
  %v4212 = vadd.f32 %v4125, %v4204
  %v4213 = vadd.f32 %v4126, %v4206
  %v4214 = vxor.u32 %v4210, 2147483648
  %v4215 = vmul.f32 %v4214, 1.442695
  %v4216 = vpow.pop %v4215
  %v4217 = vadd.f32 %v4216, 1.0
  %v4218 = vrcp.pop %v4217
  %v4219 = vmul.f32 1.0, %v4218
  %v4220 = vxor.u32 %v4211, 2147483648
  %v4221 = vmul.f32 %v4220, 1.442695
  %v4222 = vpow.pop %v4221
  %v4223 = vadd.f32 %v4222, 1.0
  %v4224 = vrcp.pop %v4223
  %v4225 = vmul.f32 1.0, %v4224
  %v4226 = vtanh.pop %v4212
  %v4227 = vxor.u32 %v4213, 2147483648
  %v4228 = vmul.f32 %v4227, 1.442695
  %v4229 = vpow.pop %v4228
  %v4230 = vadd.f32 %v4229, 1.0
  %v4231 = vrcp.pop %v4230
  %v4232 = vmul.f32 1.0, %v4231
  %v4233 = vmul.f32 %v4225, %v4120
  %v4234 = vmul.f32 %v4219, %v4226
  %v4235 = vadd.f32 %v4233, %v4234
  %v4236 = vtanh.pop %v4235
  %v4237 = vmul.f32 %v4232, %v4236
  %v4238 = vadd.f32 %v3004, %v4237
  %v4239 = vld [vmem:[%s7] sm:$0xff]
  %v4240 = vld [vmem:[%s7 + $0x8] sm:$0xff]
  %v4241 = vld [vmem:[%s7 + $0x10] sm:$0xff]
  %v4242 = vld [vmem:[%s7 + $0x18] sm:$0xff]
  %v4243 = vld [vmem:[%s7 + $0x20] sm:$0xff]
  %v4244 = vld [vmem:[%s7 + $0x28] sm:$0xff]
  %v4245 = vld [vmem:[%s7 + $0x30] sm:$0xff]
  %v4246 = vld [vmem:[%s7 + $0x38] sm:$0xff]
  %v4247 = vld [vmem:[%s7 + $0x40] sm:$0xff]
  %v4248 = vld [vmem:[%s7 + $0x48] sm:$0xff]
  %v4249 = vld [vmem:[%s7 + $0x50] sm:$0xff]
  %v4250 = vld [vmem:[%s7 + $0x58] sm:$0xff]
  %v4251 = vld [vmem:[%s7 + $0x60] sm:$0xff]
  %v4252 = vld [vmem:[%s7 + $0x68] sm:$0xff]
  %v4253 = vld [vmem:[%s7 + $0x70] sm:$0xff]
  %v4254 = vld [vmem:[%s7 + $0x78] sm:$0xff]
  %v4255 = vld [vmem:[%s8] sm:$0x1]
  %v4257 = vlaneseq
  %v4258 = vshrl.u32 %v4257, 7
  %v4259 = vsub.s32 0, %v4258
  %v4260 = vrot.slane %v4255, %v4259
  %4262 = vmatprep.subr.mxu0 0.0
  %4263 = vmatpush1.msra.mxu0 %v4239
  %4264 = vmatprep.subr.mxu0 0.0
  %4265 = vmatpush1.msra.mxu0 %v4240
  %4266 = vmatprep.subr.mxu0 0.0
  %4267 = vmatpush1.msra.mxu0 %v4241
  %4268 = vmatprep.subr.mxu0 0.0
  %4269 = vmatpush1.msra.mxu0 %v4242
  %4270 = vmatprep.subr.mxu0 0.0
  %4271 = vmatpush1.msra.mxu0 %v4243
  %4272 = vmatprep.subr.mxu0 0.0
  %4273 = vmatpush1.msra.mxu0 %v4244
  %4274 = vmatprep.subr.mxu0 0.0
  %4275 = vmatpush1.msra.mxu0 %v4245
  %4276 = vmatprep.subr.mxu0 0.0
  %4277 = vmatpush1.msra.mxu0 %v4246
  %4278 = vmatprep.subr.mxu0 0.0
  %4279 = vmatpush1.msra.mxu0 %v4247
  %4280 = vmatprep.subr.mxu0 0.0
  %4281 = vmatpush1.msra.mxu0 %v4248
  %4282 = vmatprep.subr.mxu0 0.0
  %4283 = vmatpush1.msra.mxu0 %v4249
  %4284 = vmatprep.subr.mxu0 0.0
  %4285 = vmatpush1.msra.mxu0 %v4250
  %4286 = vmatprep.subr.mxu0 0.0
  %4287 = vmatpush1.msra.mxu0 %v4251
  %4288 = vmatprep.subr.mxu0 0.0
  %4289 = vmatpush1.msra.mxu0 %v4252
  %4290 = vmatprep.subr.mxu0 0.0
  %4291 = vmatpush1.msra.mxu0 %v4253
  %4292 = vmatprep.subr.mxu0 0.0
  %4293 = vmatpush1.msra.mxu0 %v4254
  %4294 = vmatprep.subr.mxu0 0.0
  %4295 = vmatpush1.msra.mxu0 0.0
  %4296 = vmatprep.subr.mxu0 0.0
  %4297 = vmatpush1.msra.mxu0 0.0
  %4298 = vmatprep.subr.mxu0 0.0
  %4299 = vmatpush1.msra.mxu0 0.0
  %4300 = vmatprep.subr.mxu0 0.0
  %4301 = vmatpush1.msra.mxu0 0.0
  %4302 = vmatprep.subr.mxu0 0.0
  %4303 = vmatpush1.msra.mxu0 0.0
  %4304 = vmatprep.subr.mxu0 0.0
  %4305 = vmatpush1.msra.mxu0 0.0
  %4306 = vmatprep.subr.mxu0 0.0
  %4307 = vmatpush1.msra.mxu0 0.0
  %4308 = vmatprep.subr.mxu0 0.0
  %4309 = vmatpush1.msra.mxu0 0.0
  %4310 = vmatprep.subr.mxu0 0.0
  %4311 = vmatpush1.msra.mxu0 0.0
  %4312 = vmatprep.subr.mxu0 0.0
  %4313 = vmatpush1.msra.mxu0 0.0
  %4314 = vmatprep.subr.mxu0 0.0
  %4315 = vmatpush1.msra.mxu0 0.0
  %4316 = vmatprep.subr.mxu0 0.0
  %4317 = vmatpush1.msra.mxu0 0.0
  %4318 = vmatprep.subr.mxu0 0.0
  %4319 = vmatpush1.msra.mxu0 0.0
  %4320 = vmatprep.subr.mxu0 0.0
  %4321 = vmatpush1.msra.mxu0 0.0
  %4322 = vmatprep.subr.mxu0 0.0
  %4323 = vmatpush1.msra.mxu0 0.0
  %4324 = vmatprep.subr.mxu0 0.0
  %4325 = vmatpush1.msra.mxu0 0.0
  %4326 = vmatprep.mubr.f32.mxu0 0.0
  %4327 = vmatmul.mubr.f32.gmra.mrb[0].mxu0 %v4238
  %v4328 = vpop.f32.mrb[0].mxu0
  %v4329 = vadd.f32 %v4260, %v4328
  %v4330 = vpop.f32.mrb[0].mxu0
  %4331 = vdwg.mxu0
  %vm4332 = vcmask 15360
  %v4333 = vsel %vm4332, %v4329, -inf
  %4334 = vmax.xlane.f32.xlu0 %v4333
  %v4335 = vpop.xlane.xlu0 %4334
  %v4336 = vsub.f32 %v4329, %v4335
  %v4337 = vmul.f32 %v4336, 1.442695
  %v4338 = vpow.pop %v4337
  %v4339 = vsel %vm4332, %v4338, 0.0
  %4340 = vadd.xlane.f32.xlu0 %v4339
  %v4341 = vpop.xlane.xlu0 %4340
  %v4342 = vrcp.pop %v4341
  %v4343 = vmul.f32 %v4338, %v4342
  %4344 = vst.msk [vmem:[%s9] sm:$0xff] %vm4332, %v4343
  // Predicated region
  $region104: #{_lambda_.1} parent=0 // pred_check
    _
  $region105: #{_lambda_.1} parent=0 // pred_check_branch
    %4346 = sbr.rel (0) target = $region107
  $region106: #{_lambda_.1} parent=0 // pred_region
    _
  $region107: #{_lambda_.1} parent=0 // pred_fallthru
    _
  // Predicated region
  $region108: #{_lambda_.1} parent=0 // pred_check
    _
  $region109: #{_lambda_.1} parent=0 // pred_check_branch
    %4348 = sbr.rel (0) target = $region111
  $region110: #{_lambda_.1} parent=0 // pred_region
    _
  $region111: #{_lambda_.1} parent=0 // pred_fallthru
    _
  %4349 = vsyncmov [#allocation6]
  %s4350 = vpop.sfrf %4349
  %p4351 = scmp.eq.s32.totalorder %s4350, 0
  %p4352 = pneg %p4351
  %4354 = shalt.err (%p4352)
  %s4355 = scalar_lea.sflag [#allocation6], 1
  %4356 = vsyncmov %s4355
  %s4357 = vpop.sfrf %4356
  %p4358 = scmp.eq.s32.totalorder %s4357, 0
  %p4359 = pneg %p4358
  %4361 = shalt.err (%p4359)

</llo_original>
